<compile_context>
chip_gen: v7x
topology: tpu7x:2x2x1
jax: 0.10.0
libtpu: 0.0.40
codegen_flags: <defaults>
</compile_context>

<pallas_src>
import functools

import jax
import jax.numpy as jnp
from jax import lax
from jax.experimental import pallas as pl
from jax.experimental.pallas import tpu as pltpu


_LANE = 128
_MAX_PT = 512
_VMEM_LIMIT = 48 * 1024 * 1024
_FUSED_BYTES_BUDGET = 16 * 1024 * 1024   # conservative double-buffered budget


def _round_up(x, m):
    return (x + m - 1) // m * m


# ----------------------------------------------------------------------------
# Pallas kernels
# ----------------------------------------------------------------------------
def _fused_full_kernel(p_ref, w_ref, b_ref, *rest, p_true, apply_in, act,
                       has_skip, need_mask):
    """Fully fused conv(matmul) + bias + InstanceNorm + activation (+ skip).

    Used when the whole per-sample block fits VMEM.  Grid = (N,).
    p_ref: (1, Ppad, Kpad) bf16, w_ref: (Kpad, Cpad) bf16, b_ref: (1, Cpad) f32
    optional skip_ref / o_ref: (1, Ppad, Cpad) f32.
    """
    if has_skip:
        skip_ref, o_ref = rest
    else:
        (o_ref,) = rest

    y = jnp.dot(p_ref[0], w_ref[...], preferred_element_type=jnp.float32)
    y = y + b_ref[...]                                      # (Ppad, Cpad) f32

    if apply_in:
        if need_mask:
            row = lax.broadcasted_iota(jnp.int32, (y.shape[0], 1), 0)
            ym = jnp.where(row < p_true, y, 0.0)
        else:
            ym = y
        inv_p = 1.0 / float(p_true)
        mean = jnp.sum(ym, axis=0, keepdims=True) * inv_p   # (1, Cpad)
        ex2 = jnp.sum(ym * ym, axis=0, keepdims=True) * inv_p
        var = jnp.maximum(ex2 - mean * mean, 0.0)           # biased variance
        y = (y - mean) * lax.rsqrt(var + 1e-5)

    if act == "relu":
        y = jnp.maximum(y, 0.0)
    elif act == "tanh":
        y = jnp.tanh(y)

    if has_skip:
        y = y + skip_ref[0]

    o_ref[0] = y.astype(o_ref.dtype)


def _matmul_stats_kernel(p_ref, w_ref, b_ref, y_ref, stats_ref, *,
                         p_true, pt_size, need_mask):
    """Pass A of the large-P path: tiled matmul + bias; accumulate per-channel
    sum / sum-of-squares into a VMEM-resident (1, 2, Cpad) accumulator."""
    pt = pl.program_id(1)
    y = jnp.dot(p_ref[0], w_ref[...], preferred_element_type=jnp.float32)
    y = y + b_ref[...]                                      # (Pt, Cpad) f32
    y_ref[0] = y

    if need_mask:
        row = pt * pt_size + lax.broadcasted_iota(jnp.int32, (pt_size, 1), 0)
        ym = jnp.where(row < p_true, y, 0.0)
    else:
        ym = y
    s = jnp.sum(ym, axis=0, keepdims=True)                  # (1, Cpad)
    sq = jnp.sum(ym * ym, axis=0, keepdims=True)            # (1, Cpad)
    upd = jnp.concatenate([s, sq], axis=0)[None]            # (1, 2, Cpad)

    @pl.when(pt == 0)
    def _():
        stats_ref[...] = upd

    @pl.when(pt > 0)
    def _():
        stats_ref[...] += upd


def _norm_act_kernel(y_ref, stats_ref, *rest, p_true, apply_in, act, has_skip):
    """Pass B of the large-P path: InstanceNorm from accumulated stats +
    activation (+ fused residual skip add)."""
    if has_skip:
        skip_ref, o_ref = rest
    else:
        (o_ref,) = rest

    y = y_ref[0]                                            # (Pt, Cpad) f32
    if apply_in:
        inv_p = 1.0 / float(p_true)
        mean = stats_ref[0, 0:1, :] * inv_p                 # (1, Cpad)
        ex2 = stats_ref[0, 1:2, :] * inv_p
        var = jnp.maximum(ex2 - mean * mean, 0.0)
        y = (y - mean) * lax.rsqrt(var + 1e-5)

    if act == "relu":
        y = jnp.maximum(y, 0.0)
    elif act == "tanh":
        y = jnp.tanh(y)

    if has_skip:
        y = y + skip_ref[0]

    o_ref[0] = y.astype(o_ref.dtype)


def _matmul_act_kernel(p_ref, w_ref, b_ref, o_ref, *, act):
    """Single-pass fused matmul + bias + activation (no InstanceNorm)."""
    y = jnp.dot(p_ref[0], w_ref[...], preferred_element_type=jnp.float32)
    y = y + b_ref[...]
    if act == "relu":
        y = jnp.maximum(y, 0.0)
    elif act == "tanh":
        y = jnp.tanh(y)
    o_ref[0] = y.astype(o_ref.dtype)


# ----------------------------------------------------------------------------
# pallas_call wrappers
# ----------------------------------------------------------------------------
def _fused_conv_in_act(patches, weight, bias, *, pt_size, p_true, apply_in,
                       act, skip=None):
    """patches: (N, Ppad, Kpad) bf16; weight: (Kpad, Cpad) bf16;
    bias: (1, Cpad) f32; skip: optional (N, Ppad, Cpad) f32.
    Returns (N, Ppad, Cpad) f32."""
    N, Ppad, Kpad = patches.shape
    Cpad = weight.shape[1]
    n_pt = Ppad // pt_size
    has_skip = skip is not None
    need_mask = (Ppad != p_true)

    if n_pt == 1:
        # Fast path: whole sample in one fused kernel, grid over batch only.
        p_spec = pl.BlockSpec((1, Ppad, Kpad), lambda n: (n, 0, 0))
        w_spec = pl.BlockSpec((Kpad, Cpad), lambda n: (0, 0))
        b_spec = pl.BlockSpec((1, Cpad), lambda n: (0, 0))
        o_spec = pl.BlockSpec((1, Ppad, Cpad), lambda n: (n, 0, 0))
        kern = functools.partial(_fused_full_kernel, p_true=p_true,
                                 apply_in=apply_in, act=act,
                                 has_skip=has_skip, need_mask=need_mask)
        in_arrays = [patches, weight, bias] + ([skip] if has_skip else [])
        in_specs = [p_spec, w_spec, b_spec] + ([o_spec] if has_skip else [])
        return pl.pallas_call(
            kern,
            out_shape=jax.ShapeDtypeStruct((N, Ppad, Cpad), jnp.float32),
            grid=(N,),
            in_specs=in_specs,
            out_specs=o_spec,
            compiler_params=pltpu.CompilerParams(
                dimension_semantics=("parallel",),
                vmem_limit_bytes=_VMEM_LIMIT),
        )(*in_arrays)

    grid = (N, n_pt)
    p_spec = pl.BlockSpec((1, pt_size, Kpad), lambda n, p: (n, p, 0))
    w_spec = pl.BlockSpec((Kpad, Cpad), lambda n, p: (0, 0))
    b_spec = pl.BlockSpec((1, Cpad), lambda n, p: (0, 0))
    yo_spec = pl.BlockSpec((1, pt_size, Cpad), lambda n, p: (n, p, 0))
    st_spec = pl.BlockSpec((1, 2, Cpad), lambda n, p: (n, 0, 0))

    if not apply_in and not has_skip:
        # No InstanceNorm -> single tiled pass (used by the last tanh layer).
        kern = functools.partial(_matmul_act_kernel, act=act)
        return pl.pallas_call(
            kern,
            out_shape=jax.ShapeDtypeStruct((N, Ppad, Cpad), jnp.float32),
            grid=grid,
            in_specs=[p_spec, w_spec, b_spec],
            out_specs=yo_spec,
            compiler_params=pltpu.CompilerParams(
                dimension_semantics=("parallel", "parallel"),
                vmem_limit_bytes=_VMEM_LIMIT),
        )(patches, weight, bias)

    # Pass A: matmul + bias + per-(sample, channel) sum / sum-of-squares.
    kern_a = functools.partial(_matmul_stats_kernel, p_true=p_true,
                               pt_size=pt_size, need_mask=need_mask)
    y, stats = pl.pallas_call(
        kern_a,
        out_shape=(jax.ShapeDtypeStruct((N, Ppad, Cpad), jnp.float32),
                   jax.ShapeDtypeStruct((N, 2, Cpad), jnp.float32)),
        grid=grid,
        in_specs=[p_spec, w_spec, b_spec],
        out_specs=(yo_spec, st_spec),
        compiler_params=pltpu.CompilerParams(
            dimension_semantics=("parallel", "arbitrary"),
            vmem_limit_bytes=_VMEM_LIMIT),
    )(patches, weight, bias)

    # Pass B: normalize + activation (+ fused residual add).
    kern_b = functools.partial(_norm_act_kernel, p_true=p_true,
                               apply_in=apply_in, act=act, has_skip=has_skip)
    in_arrays = [y, stats] + ([skip] if has_skip else [])
    in_specs = [yo_spec, st_spec] + ([yo_spec] if has_skip else [])
    return pl.pallas_call(
        kern_b,
        out_shape=jax.ShapeDtypeStruct((N, Ppad, Cpad), jnp.float32),
        grid=grid,
        in_specs=in_specs,
        out_specs=yo_spec,
        compiler_params=pltpu.CompilerParams(
            dimension_semantics=("parallel", "parallel"),
            vmem_limit_bytes=_VMEM_LIMIT),
    )(*in_arrays)


# ----------------------------------------------------------------------------
# JAX glue: padding / dilation / im2col (NHWC, channels-last throughout)
# ----------------------------------------------------------------------------
def _im2col_nhwc(xp, k, stride):
    """xp: padded input (N, Hp, Wp, C) -> patches (N, Ho*Wo, k*k*C)."""
    N, Hp, Wp, C = xp.shape
    Ho = (Hp - k) // stride + 1
    Wo = (Wp - k) // stride + 1
    cols = []
    for i in range(k):
        for j in range(k):
            cols.append(xp[:, i:i + stride * Ho:stride,
                              j:j + stride * Wo:stride, :])  # (N, Ho, Wo, C)
    patches = jnp.concatenate(cols, axis=-1)                 # K-order (ki,kj,C)
    return patches.reshape(N, Ho * Wo, k * k * C), Ho, Wo


def _fits_fused(Ppad, Kpad, Cpad, has_skip):
    bytes_in = Ppad * Kpad * 2 + Kpad * Cpad * 2 + Cpad * 4
    bytes_out = Ppad * Cpad * 4
    bytes_skip = Ppad * Cpad * 4 if has_skip else 0
    return 2 * (bytes_in + bytes_out + bytes_skip) <= _FUSED_BYTES_BUDGET


def _conv_core(xp, w, b, *, stride, apply_in, act, skip=None):
    """xp: pre-padded NHWC input; w: (Cout, Cin, k, k) forward-conv weight."""
    N = xp.shape[0]
    Cout, Cin, k, _ = w.shape
    patches, Ho, Wo = _im2col_nhwc(xp, k, stride)            # (N, P, K)
    P, K = patches.shape[1], patches.shape[2]

    # MXU-aligned, lane-dense layout: pad K and Cout to multiples of 128,
    # pad P to a multiple of the P tile, cast matmul operands to bf16.
    Kpad = _round_up(K, _LANE)
    Cpad = _round_up(Cout, _LANE)
    Ppad8 = _round_up(P, 8)
    if _fits_fused(Ppad8, Kpad, Cpad, skip is not None):
        pt_size = Ppad8                                      # one fused tile
    else:
        pt_size = min(_MAX_PT, Ppad8)
    Ppad = _round_up(P, pt_size)

    p_pad = jnp.pad(patches, ((0, 0), (0, Ppad - P), (0, Kpad - K))
                    ).astype(jnp.bfloat16)
    w_mat = w.transpose(2, 3, 1, 0).reshape(k * k * Cin, Cout)  # (K, Cout)
    w_pad = jnp.pad(w_mat, ((0, Kpad - K), (0, Cpad - Cout))
                    ).astype(jnp.bfloat16)
    b_pad = jnp.pad(b, (0, Cpad - Cout)).reshape(1, Cpad).astype(jnp.float32)

    skip_pad = None
    if skip is not None:
        skip_flat = skip.reshape(N, Ho * Wo, Cout).astype(jnp.float32)
        skip_pad = jnp.pad(skip_flat, ((0, 0), (0, Ppad - P), (0, Cpad - Cout)))

    out = _fused_conv_in_act(p_pad, w_pad, b_pad, pt_size=pt_size, p_true=P,
                             apply_in=apply_in, act=act, skip=skip_pad)
    return out[:, :P, :Cout].reshape(N, Ho, Wo, Cout)


def conv2d_block(x, w, b, *, stride, padding, pad_mode, apply_in, act,
                 skip=None):
    """Conv2d (weight (Cout, Cin, k, k)) + optional IN + activation.  NHWC."""
    xp = jnp.pad(x, ((0, 0), (padding, padding), (padding, padding), (0, 0)),
                 mode=pad_mode)
    return _conv_core(xp, w, b, stride=stride, apply_in=apply_in, act=act,
                      skip=skip)


def conv_transpose2d_block(x, w, b, *, stride, padding, output_padding,
                           apply_in, act):
    """ConvTranspose2d (weight (Cin, Cout, k, k)) + optional IN + act.  NHWC."""
    N, H, W, Cin = x.shape
    _, Cout, k, _ = w.shape
    # Insert (stride-1) zeros between elements (input dilation).
    xd = jnp.zeros((N, (H - 1) * stride + 1, (W - 1) * stride + 1, Cin),
                   x.dtype)
    xd = xd.at[:, ::stride, ::stride, :].set(x)
    plo = k - 1 - padding
    phi = k - 1 - padding + output_padding
    xp = jnp.pad(xd, ((0, 0), (plo, phi), (plo, phi), (0, 0)))
    # Equivalent forward conv: swap in/out channel axes and flip spatially.
    w_conv = jnp.flip(w, axis=(2, 3)).transpose(1, 0, 2, 3)  # (Cout, Cin, k, k)
    return _conv_core(xp, w_conv, b, stride=1, apply_in=apply_in, act=act)


# ----------------------------------------------------------------------------
# Parameter construction (deterministic, synthetic weights)
# ----------------------------------------------------------------------------
def init_params(key, img_channels, num_features, num_residuals):
    nf = num_features
    params = {}

    def nrm(key, shape, scale=0.05):
        return scale * jax.random.normal(key, shape, dtype=jnp.float32)

    keys = iter(jax.random.split(key, 64))
    params["initial_w"] = nrm(next(keys), (nf, img_channels, 7, 7))
    params["initial_b"] = nrm(next(keys), (nf,))
    params["down1_w"] = nrm(next(keys), (2 * nf, nf, 3, 3))
    params["down1_b"] = nrm(next(keys), (2 * nf,))
    params["down2_w"] = nrm(next(keys), (4 * nf, 2 * nf, 3, 3))
    params["down2_b"] = nrm(next(keys), (4 * nf,))
    for r in range(num_residuals):
        params[f"res{r}_w1"] = nrm(next(keys), (4 * nf, 4 * nf, 3, 3))
        params[f"res{r}_b1"] = nrm(next(keys), (4 * nf,))
        params[f"res{r}_w2"] = nrm(next(keys), (4 * nf, 4 * nf, 3, 3))
        params[f"res{r}_b2"] = nrm(next(keys), (4 * nf,))
    # ConvTranspose2d weight layout: (Cin, Cout, k, k)
    params["up1_w"] = nrm(next(keys), (4 * nf, 2 * nf, 3, 3))
    params["up1_b"] = nrm(next(keys), (2 * nf,))
    params["up2_w"] = nrm(next(keys), (2 * nf, nf, 3, 3))
    params["up2_b"] = nrm(next(keys), (nf,))
    params["last_w"] = nrm(next(keys), (img_channels, nf, 7, 7))
    params["last_b"] = nrm(next(keys), (img_channels,))
    return params


# ----------------------------------------------------------------------------
# Generator forward (module boundary: NCHW, internals: NHWC channels-last)
# ----------------------------------------------------------------------------
def generator_forward(params, x_nchw, num_residuals):
    x = x_nchw.transpose(0, 2, 3, 1)                          # NCHW -> NHWC
    # initial: Conv(k7,s1,p3,reflect) + IN + ReLU
    x = conv2d_block(x, params["initial_w"], params["initial_b"],
                     stride=1, padding=3, pad_mode="reflect",
                     apply_in=True, act="relu")
    # down blocks: Conv(k3,s2,p1,reflect) + IN + ReLU
    x = conv2d_block(x, params["down1_w"], params["down1_b"],
                     stride=2, padding=1, pad_mode="reflect",
                     apply_in=True, act="relu")
    x = conv2d_block(x, params["down2_w"], params["down2_b"],
                     stride=2, padding=1, pad_mode="reflect",
                     apply_in=True, act="relu")
    # residual blocks (skip add fused into the second conv's Pallas kernel)
    for r in range(num_residuals):
        y = conv2d_block(x, params[f"res{r}_w1"], params[f"res{r}_b1"],
                         stride=1, padding=1, pad_mode="reflect",
                         apply_in=True, act="relu")
        x = conv2d_block(y, params[f"res{r}_w2"], params[f"res{r}_b2"],
                         stride=1, padding=1, pad_mode="reflect",
                         apply_in=True, act="none", skip=x)
    # up blocks: ConvTranspose(k3,s2,p1,op1) + IN + ReLU
    x = conv_transpose2d_block(x, params["up1_w"], params["up1_b"],
                               stride=2, padding=1, output_padding=1,
                               apply_in=True, act="relu")
    x = conv_transpose2d_block(x, params["up2_w"], params["up2_b"],
                               stride=2, padding=1, output_padding=1,
                               apply_in=True, act="relu")
    # last: Conv(k7,s1,p3,reflect), no IN, tanh (single-pass fused kernel)
    x = conv2d_block(x, params["last_w"], params["last_b"],
                     stride=1, padding=3, pad_mode="reflect",
                     apply_in=False, act="tanh")
    return x.transpose(0, 3, 1, 2)                            # NHWC -> NCHW


# ----------------------------------------------------------------------------
# Main
# ----------------------------------------------------------------------------
if __name__ == "__main__":
    batch = 2
    img_channels = 3
    spatial = 16
    num_features = 8
    num_residuals = 2

    key = jax.random.PRNGKey(0)
    k_x, k_p = jax.random.split(key)
    x = jax.random.normal(k_x, (batch, img_channels, spatial, spatial),
                          dtype=jnp.float32)
    params = init_params(k_p, img_channels, num_features, num_residuals)

    fwd = jax.jit(functools.partial(generator_forward,
                                    num_residuals=num_residuals))
    out = fwd(params, x)
    out = jax.block_until_ready(out)

    assert out.shape == (batch, img_channels, spatial, spatial), out.shape
    assert bool(jnp.all(jnp.isfinite(out)))
    assert bool(jnp.all(jnp.abs(out) <= 1.0 + 1e-6))  # tanh range
    print("KERNEL_OK")
</pallas_src>

<mosaic_0001>
module attributes {stable_mosaic.version = 11 : i64} {
  func.func @_fused_full_kernel(%arg0: i32, %arg1: memref<1x256x256xbf16, #tpu.memory_space<vmem>>, %arg2: memref<256x128xbf16, #tpu.memory_space<vmem>>, %arg3: memref<1x128xf32, #tpu.memory_space<vmem>>, %arg4: memref<1x256x128xf32, #tpu.memory_space<vmem>>) attributes {dimension_semantics = [#tpu.dimension_semantics<parallel>], iteration_bounds = array<i64: 2>, scalar_prefetch = 0 : i64, scratch_operands = 0 : i64, tpu.core_type = #tpu.core_type<tc>, window_params = [{transform_indices = @transform_0, window_bounds = array<i64: 1, 256, 256>}, {pipeline_mode = #tpu.pipeline_mode<synchronous>, transform_indices = @transform_1, window_bounds = array<i64: 256, 128>}, {pipeline_mode = #tpu.pipeline_mode<synchronous>, transform_indices = @transform_2, window_bounds = array<i64: 1, 128>}, {transform_indices = @transform_3, window_bounds = array<i64: 1, 256, 128>}]} {
    %c0 = arith.constant 0 : index
    %c0_0 = arith.constant 0 : index
    %c0_1 = arith.constant 0 : index
    %0 = vector.load %arg1[%c0, %c0_0, %c0_1] : memref<1x256x256xbf16, #tpu.memory_space<vmem>>, vector<1x256x256xbf16>
    %1 = vector.shape_cast %0 : vector<1x256x256xbf16> to vector<256x256xbf16>
    %c0_2 = arith.constant 0 : index
    %c0_3 = arith.constant 0 : index
    %2 = vector.load %arg2[%c0_2, %c0_3] : memref<256x128xbf16, #tpu.memory_space<vmem>>, vector<256x128xbf16>
    %cst = arith.constant dense<0.000000e+00> : vector<256x128xf32>
    %3 = tpu.matmul %1, %2, %cst {dimension_numbers = #tpu.dot_dimension_numbers<[1], [0], [0], [1], [0, 0, 1, 1], [], []>} : vector<256x256xbf16>, vector<256x128xbf16>, vector<256x128xf32> -> vector<256x128xf32>
    %c0_4 = arith.constant 0 : index
    %c0_5 = arith.constant 0 : index
    %4 = vector.load %arg3[%c0_4, %c0_5] : memref<1x128xf32, #tpu.memory_space<vmem>>, vector<1x128xf32>
    %5 = vector.broadcast %4 : vector<1x128xf32> to vector<256x128xf32>
    %6 = arith.addf %3, %5 : vector<256x128xf32>
    %cst_6 = arith.constant dense<0.000000e+00> : vector<128xf32>
    %7 = vector.multi_reduction <add>, %6, %cst_6 [0] : vector<256x128xf32> to vector<128xf32>
    %8 = vector.shape_cast %7 : vector<128xf32> to vector<1x128xf32>
    %cst_7 = arith.constant 3.906250e-03 : f32
    %9 = vector.broadcast %cst_7 : f32 to vector<1x128xf32>
    %10 = arith.mulf %8, %9 : vector<1x128xf32>
    %11 = arith.mulf %6, %6 : vector<256x128xf32>
    %cst_8 = arith.constant dense<0.000000e+00> : vector<128xf32>
    %12 = vector.multi_reduction <add>, %11, %cst_8 [0] : vector<256x128xf32> to vector<128xf32>
    %13 = vector.shape_cast %12 : vector<128xf32> to vector<1x128xf32>
    %cst_9 = arith.constant 3.906250e-03 : f32
    %14 = vector.broadcast %cst_9 : f32 to vector<1x128xf32>
    %15 = arith.mulf %13, %14 : vector<1x128xf32>
    %16 = arith.mulf %10, %10 : vector<1x128xf32>
    %17 = arith.subf %15, %16 : vector<1x128xf32>
    %cst_10 = arith.constant 0.000000e+00 : f32
    %18 = vector.broadcast %cst_10 : f32 to vector<1x128xf32>
    %19 = arith.maximumf %17, %18 : vector<1x128xf32>
    %20 = vector.broadcast %10 : vector<1x128xf32> to vector<256x128xf32>
    %21 = arith.subf %6, %20 : vector<256x128xf32>
    %cst_11 = arith.constant 9.99999974E-6 : f32
    %22 = vector.broadcast %cst_11 : f32 to vector<1x128xf32>
    %23 = arith.addf %19, %22 : vector<1x128xf32>
    %24 = math.rsqrt %23 : vector<1x128xf32>
    %25 = vector.broadcast %24 : vector<1x128xf32> to vector<256x128xf32>
    %26 = arith.mulf %21, %25 : vector<256x128xf32>
    %cst_12 = arith.constant 0.000000e+00 : f32
    %27 = vector.broadcast %cst_12 : f32 to vector<256x128xf32>
    %28 = arith.maximumf %26, %27 : vector<256x128xf32>
    %c0_13 = arith.constant 0 : index
    %c0_14 = arith.constant 0 : index
    %c0_15 = arith.constant 0 : index
    %29 = vector.load %arg4[%c0_13, %c0_14, %c0_15] : memref<1x256x128xf32, #tpu.memory_space<vmem>>, vector<1x256x128xf32>
    %30 = vector.shape_cast %29 : vector<1x256x128xf32> to vector<256x128xf32>
    %31 = vector.shape_cast %28 : vector<256x128xf32> to vector<1x256x128xf32>
    tpu.vector_store %arg4[%c0_13, %c0_14, %c0_15], %31 {strides = array<i32>} : memref<1x256x128xf32, #tpu.memory_space<vmem>>, vector<1x256x128xf32>,
    return
  }
  func.func @transform_0(%arg0: i32) -> (i32, i32, i32) {
    %c0_i32 = arith.constant 0 : i32
    %c0_i32_0 = arith.constant 0 : i32
    %c0_i32_1 = arith.constant 0 : i32
    return %arg0, %c0_i32, %c0_i32_0 : i32, i32, i32
  }
  func.func @transform_1(%arg0: i32) -> (i32, i32) {
    %c0_i32 = arith.constant 0 : i32
    %c0_i32_0 = arith.constant 0 : i32
    %c0_i32_1 = arith.constant 0 : i32
    return %c0_i32, %c0_i32_0 : i32, i32
  }
  func.func @transform_2(%arg0: i32) -> (i32, i32) {
    %c0_i32 = arith.constant 0 : i32
    %c0_i32_0 = arith.constant 0 : i32
    %c0_i32_1 = arith.constant 0 : i32
    return %c0_i32, %c0_i32_0 : i32, i32
  }
  func.func @transform_3(%arg0: i32) -> (i32, i32, i32) {
    %c0_i32 = arith.constant 0 : i32
    %c0_i32_0 = arith.constant 0 : i32
    %c0_i32_1 = arith.constant 0 : i32
    return %arg0, %c0_i32, %c0_i32_0 : i32, i32, i32
  }
}

module attributes {stable_mosaic.version = 11 : i64} {
  func.func @_fused_full_kernel(%arg0: i32, %arg1: memref<1x64x128xbf16, #tpu.memory_space<vmem>>, %arg2: memref<128x128xbf16, #tpu.memory_space<vmem>>, %arg3: memref<1x128xf32, #tpu.memory_space<vmem>>, %arg4: memref<1x64x128xf32, #tpu.memory_space<vmem>>) attributes {dimension_semantics = [#tpu.dimension_semantics<parallel>], iteration_bounds = array<i64: 2>, scalar_prefetch = 0 : i64, scratch_operands = 0 : i64, tpu.core_type = #tpu.core_type<tc>, window_params = [{transform_indices = @transform_0, window_bounds = array<i64: 1, 64, 128>}, {pipeline_mode = #tpu.pipeline_mode<synchronous>, transform_indices = @transform_1, window_bounds = array<i64: 128, 128>}, {pipeline_mode = #tpu.pipeline_mode<synchronous>, transform_indices = @transform_2, window_bounds = array<i64: 1, 128>}, {transform_indices = @transform_3, window_bounds = array<i64: 1, 64, 128>}]} {
    %c0 = arith.constant 0 : index
    %c0_0 = arith.constant 0 : index
    %c0_1 = arith.constant 0 : index
    %0 = vector.load %arg1[%c0, %c0_0, %c0_1] : memref<1x64x128xbf16, #tpu.memory_space<vmem>>, vector<1x64x128xbf16>
    %1 = vector.shape_cast %0 : vector<1x64x128xbf16> to vector<64x128xbf16>
    %c0_2 = arith.constant 0 : index
    %c0_3 = arith.constant 0 : index
    %2 = vector.load %arg2[%c0_2, %c0_3] : memref<128x128xbf16, #tpu.memory_space<vmem>>, vector<128x128xbf16>
    %cst = arith.constant dense<0.000000e+00> : vector<64x128xf32>
    %3 = tpu.matmul %1, %2, %cst {dimension_numbers = #tpu.dot_dimension_numbers<[1], [0], [0], [1], [0, 0, 1, 1], [], []>} : vector<64x128xbf16>, vector<128x128xbf16>, vector<64x128xf32> -> vector<64x128xf32>
    %c0_4 = arith.constant 0 : index
    %c0_5 = arith.constant 0 : index
    %4 = vector.load %arg3[%c0_4, %c0_5] : memref<1x128xf32, #tpu.memory_space<vmem>>, vector<1x128xf32>
    %5 = vector.broadcast %4 : vector<1x128xf32> to vector<64x128xf32>
    %6 = arith.addf %3, %5 : vector<64x128xf32>
    %cst_6 = arith.constant dense<0.000000e+00> : vector<128xf32>
    %7 = vector.multi_reduction <add>, %6, %cst_6 [0] : vector<64x128xf32> to vector<128xf32>
    %8 = vector.shape_cast %7 : vector<128xf32> to vector<1x128xf32>
    %cst_7 = arith.constant 1.562500e-02 : f32
    %9 = vector.broadcast %cst_7 : f32 to vector<1x128xf32>
    %10 = arith.mulf %8, %9 : vector<1x128xf32>
    %11 = arith.mulf %6, %6 : vector<64x128xf32>
    %cst_8 = arith.constant dense<0.000000e+00> : vector<128xf32>
    %12 = vector.multi_reduction <add>, %11, %cst_8 [0] : vector<64x128xf32> to vector<128xf32>
    %13 = vector.shape_cast %12 : vector<128xf32> to vector<1x128xf32>
    %cst_9 = arith.constant 1.562500e-02 : f32
    %14 = vector.broadcast %cst_9 : f32 to vector<1x128xf32>
    %15 = arith.mulf %13, %14 : vector<1x128xf32>
    %16 = arith.mulf %10, %10 : vector<1x128xf32>
    %17 = arith.subf %15, %16 : vector<1x128xf32>
    %cst_10 = arith.constant 0.000000e+00 : f32
    %18 = vector.broadcast %cst_10 : f32 to vector<1x128xf32>
    %19 = arith.maximumf %17, %18 : vector<1x128xf32>
    %20 = vector.broadcast %10 : vector<1x128xf32> to vector<64x128xf32>
    %21 = arith.subf %6, %20 : vector<64x128xf32>
    %cst_11 = arith.constant 9.99999974E-6 : f32
    %22 = vector.broadcast %cst_11 : f32 to vector<1x128xf32>
    %23 = arith.addf %19, %22 : vector<1x128xf32>
    %24 = math.rsqrt %23 : vector<1x128xf32>
    %25 = vector.broadcast %24 : vector<1x128xf32> to vector<64x128xf32>
    %26 = arith.mulf %21, %25 : vector<64x128xf32>
    %cst_12 = arith.constant 0.000000e+00 : f32
    %27 = vector.broadcast %cst_12 : f32 to vector<64x128xf32>
    %28 = arith.maximumf %26, %27 : vector<64x128xf32>
    %c0_13 = arith.constant 0 : index
    %c0_14 = arith.constant 0 : index
    %c0_15 = arith.constant 0 : index
    %29 = vector.load %arg4[%c0_13, %c0_14, %c0_15] : memref<1x64x128xf32, #tpu.memory_space<vmem>>, vector<1x64x128xf32>
    %30 = vector.shape_cast %29 : vector<1x64x128xf32> to vector<64x128xf32>
    %31 = vector.shape_cast %28 : vector<64x128xf32> to vector<1x64x128xf32>
    tpu.vector_store %arg4[%c0_13, %c0_14, %c0_15], %31 {strides = array<i32>} : memref<1x64x128xf32, #tpu.memory_space<vmem>>, vector<1x64x128xf32>,
    return
  }
  func.func @transform_0(%arg0: i32) -> (i32, i32, i32) {
    %c0_i32 = arith.constant 0 : i32
    %c0_i32_0 = arith.constant 0 : i32
    %c0_i32_1 = arith.constant 0 : i32
    return %arg0, %c0_i32, %c0_i32_0 : i32, i32, i32
  }
  func.func @transform_1(%arg0: i32) -> (i32, i32) {
    %c0_i32 = arith.constant 0 : i32
    %c0_i32_0 = arith.constant 0 : i32
    %c0_i32_1 = arith.constant 0 : i32
    return %c0_i32, %c0_i32_0 : i32, i32
  }
  func.func @transform_2(%arg0: i32) -> (i32, i32) {
    %c0_i32 = arith.constant 0 : i32
    %c0_i32_0 = arith.constant 0 : i32
    %c0_i32_1 = arith.constant 0 : i32
    return %c0_i32, %c0_i32_0 : i32, i32
  }
  func.func @transform_3(%arg0: i32) -> (i32, i32, i32) {
    %c0_i32 = arith.constant 0 : i32
    %c0_i32_0 = arith.constant 0 : i32
    %c0_i32_1 = arith.constant 0 : i32
    return %arg0, %c0_i32, %c0_i32_0 : i32, i32, i32
  }
}

module attributes {stable_mosaic.version = 11 : i64} {
  func.func @_fused_full_kernel(%arg0: i32, %arg1: memref<1x16x384xbf16, #tpu.memory_space<vmem>>, %arg2: memref<384x128xbf16, #tpu.memory_space<vmem>>, %arg3: memref<1x128xf32, #tpu.memory_space<vmem>>, %arg4: memref<1x16x128xf32, #tpu.memory_space<vmem>>) attributes {dimension_semantics = [#tpu.dimension_semantics<parallel>], iteration_bounds = array<i64: 2>, scalar_prefetch = 0 : i64, scratch_operands = 0 : i64, tpu.core_type = #tpu.core_type<tc>, window_params = [{transform_indices = @transform_0, window_bounds = array<i64: 1, 16, 384>}, {pipeline_mode = #tpu.pipeline_mode<synchronous>, transform_indices = @transform_1, window_bounds = array<i64: 384, 128>}, {pipeline_mode = #tpu.pipeline_mode<synchronous>, transform_indices = @transform_2, window_bounds = array<i64: 1, 128>}, {transform_indices = @transform_3, window_bounds = array<i64: 1, 16, 128>}]} {
    %c0 = arith.constant 0 : index
    %c0_0 = arith.constant 0 : index
    %c0_1 = arith.constant 0 : index
    %0 = vector.load %arg1[%c0, %c0_0, %c0_1] : memref<1x16x384xbf16, #tpu.memory_space<vmem>>, vector<1x16x384xbf16>
    %1 = vector.shape_cast %0 : vector<1x16x384xbf16> to vector<16x384xbf16>
    %c0_2 = arith.constant 0 : index
    %c0_3 = arith.constant 0 : index
    %2 = vector.load %arg2[%c0_2, %c0_3] : memref<384x128xbf16, #tpu.memory_space<vmem>>, vector<384x128xbf16>
    %cst = arith.constant dense<0.000000e+00> : vector<16x128xf32>
    %3 = tpu.matmul %1, %2, %cst {dimension_numbers = #tpu.dot_dimension_numbers<[1], [0], [0], [1], [0, 0, 1, 1], [], []>} : vector<16x384xbf16>, vector<384x128xbf16>, vector<16x128xf32> -> vector<16x128xf32>
    %c0_4 = arith.constant 0 : index
    %c0_5 = arith.constant 0 : index
    %4 = vector.load %arg3[%c0_4, %c0_5] : memref<1x128xf32, #tpu.memory_space<vmem>>, vector<1x128xf32>
    %5 = vector.broadcast %4 : vector<1x128xf32> to vector<16x128xf32>
    %6 = arith.addf %3, %5 : vector<16x128xf32>
    %cst_6 = arith.constant dense<0.000000e+00> : vector<128xf32>
    %7 = vector.multi_reduction <add>, %6, %cst_6 [0] : vector<16x128xf32> to vector<128xf32>
    %8 = vector.shape_cast %7 : vector<128xf32> to vector<1x128xf32>
    %cst_7 = arith.constant 6.250000e-02 : f32
    %9 = vector.broadcast %cst_7 : f32 to vector<1x128xf32>
    %10 = arith.mulf %8, %9 : vector<1x128xf32>
    %11 = arith.mulf %6, %6 : vector<16x128xf32>
    %cst_8 = arith.constant dense<0.000000e+00> : vector<128xf32>
    %12 = vector.multi_reduction <add>, %11, %cst_8 [0] : vector<16x128xf32> to vector<128xf32>
    %13 = vector.shape_cast %12 : vector<128xf32> to vector<1x128xf32>
    %cst_9 = arith.constant 6.250000e-02 : f32
    %14 = vector.broadcast %cst_9 : f32 to vector<1x128xf32>
    %15 = arith.mulf %13, %14 : vector<1x128xf32>
    %16 = arith.mulf %10, %10 : vector<1x128xf32>
    %17 = arith.subf %15, %16 : vector<1x128xf32>
    %cst_10 = arith.constant 0.000000e+00 : f32
    %18 = vector.broadcast %cst_10 : f32 to vector<1x128xf32>
    %19 = arith.maximumf %17, %18 : vector<1x128xf32>
    %20 = vector.broadcast %10 : vector<1x128xf32> to vector<16x128xf32>
    %21 = arith.subf %6, %20 : vector<16x128xf32>
    %cst_11 = arith.constant 9.99999974E-6 : f32
    %22 = vector.broadcast %cst_11 : f32 to vector<1x128xf32>
    %23 = arith.addf %19, %22 : vector<1x128xf32>
    %24 = math.rsqrt %23 : vector<1x128xf32>
    %25 = vector.broadcast %24 : vector<1x128xf32> to vector<16x128xf32>
    %26 = arith.mulf %21, %25 : vector<16x128xf32>
    %cst_12 = arith.constant 0.000000e+00 : f32
    %27 = vector.broadcast %cst_12 : f32 to vector<16x128xf32>
    %28 = arith.maximumf %26, %27 : vector<16x128xf32>
    %c0_13 = arith.constant 0 : index
    %c0_14 = arith.constant 0 : index
    %c0_15 = arith.constant 0 : index
    %29 = vector.load %arg4[%c0_13, %c0_14, %c0_15] : memref<1x16x128xf32, #tpu.memory_space<vmem>>, vector<1x16x128xf32>
    %30 = vector.shape_cast %29 : vector<1x16x128xf32> to vector<16x128xf32>
    %31 = vector.shape_cast %28 : vector<16x128xf32> to vector<1x16x128xf32>
    tpu.vector_store %arg4[%c0_13, %c0_14, %c0_15], %31 {strides = array<i32>} : memref<1x16x128xf32, #tpu.memory_space<vmem>>, vector<1x16x128xf32>,
    return
  }
  func.func @transform_0(%arg0: i32) -> (i32, i32, i32) {
    %c0_i32 = arith.constant 0 : i32
    %c0_i32_0 = arith.constant 0 : i32
    %c0_i32_1 = arith.constant 0 : i32
    return %arg0, %c0_i32, %c0_i32_0 : i32, i32, i32
  }
  func.func @transform_1(%arg0: i32) -> (i32, i32) {
    %c0_i32 = arith.constant 0 : i32
    %c0_i32_0 = arith.constant 0 : i32
    %c0_i32_1 = arith.constant 0 : i32
    return %c0_i32, %c0_i32_0 : i32, i32
  }
  func.func @transform_2(%arg0: i32) -> (i32, i32) {
    %c0_i32 = arith.constant 0 : i32
    %c0_i32_0 = arith.constant 0 : i32
    %c0_i32_1 = arith.constant 0 : i32
    return %c0_i32, %c0_i32_0 : i32, i32
  }
  func.func @transform_3(%arg0: i32) -> (i32, i32, i32) {
    %c0_i32 = arith.constant 0 : i32
    %c0_i32_0 = arith.constant 0 : i32
    %c0_i32_1 = arith.constant 0 : i32
    return %arg0, %c0_i32, %c0_i32_0 : i32, i32, i32
  }
}

module attributes {stable_mosaic.version = 11 : i64} {
  func.func @_fused_full_kernel(%arg0: i32, %arg1: memref<1x16x256xbf16, #tpu.memory_space<vmem>>, %arg2: memref<256x128xbf16, #tpu.memory_space<vmem>>, %arg3: memref<1x128xf32, #tpu.memory_space<vmem>>, %arg4: memref<1x16x128xf32, #tpu.memory_space<vmem>>) attributes {dimension_semantics = [#tpu.dimension_semantics<parallel>], iteration_bounds = array<i64: 2>, scalar_prefetch = 0 : i64, scratch_operands = 0 : i64, tpu.core_type = #tpu.core_type<tc>, window_params = [{transform_indices = @transform_0, window_bounds = array<i64: 1, 16, 256>}, {pipeline_mode = #tpu.pipeline_mode<synchronous>, transform_indices = @transform_1, window_bounds = array<i64: 256, 128>}, {pipeline_mode = #tpu.pipeline_mode<synchronous>, transform_indices = @transform_2, window_bounds = array<i64: 1, 128>}, {transform_indices = @transform_3, window_bounds = array<i64: 1, 16, 128>}]} {
    %c0 = arith.constant 0 : index
    %c0_0 = arith.constant 0 : index
    %c0_1 = arith.constant 0 : index
    %0 = vector.load %arg1[%c0, %c0_0, %c0_1] : memref<1x16x256xbf16, #tpu.memory_space<vmem>>, vector<1x16x256xbf16>
    %1 = vector.shape_cast %0 : vector<1x16x256xbf16> to vector<16x256xbf16>
    %c0_2 = arith.constant 0 : index
    %c0_3 = arith.constant 0 : index
    %2 = vector.load %arg2[%c0_2, %c0_3] : memref<256x128xbf16, #tpu.memory_space<vmem>>, vector<256x128xbf16>
    %cst = arith.constant dense<0.000000e+00> : vector<16x128xf32>
    %3 = tpu.matmul %1, %2, %cst {dimension_numbers = #tpu.dot_dimension_numbers<[1], [0], [0], [1], [0, 0, 1, 1], [], []>} : vector<16x256xbf16>, vector<256x128xbf16>, vector<16x128xf32> -> vector<16x128xf32>
    %c0_4 = arith.constant 0 : index
    %c0_5 = arith.constant 0 : index
    %4 = vector.load %arg3[%c0_4, %c0_5] : memref<1x128xf32, #tpu.memory_space<vmem>>, vector<1x128xf32>
    %5 = vector.broadcast %4 : vector<1x128xf32> to vector<16x128xf32>
    %6 = arith.addf %3, %5 : vector<16x128xf32>
    %cst_6 = arith.constant dense<0.000000e+00> : vector<128xf32>
    %7 = vector.multi_reduction <add>, %6, %cst_6 [0] : vector<16x128xf32> to vector<128xf32>
    %8 = vector.shape_cast %7 : vector<128xf32> to vector<1x128xf32>
    %cst_7 = arith.constant 6.250000e-02 : f32
    %9 = vector.broadcast %cst_7 : f32 to vector<1x128xf32>
    %10 = arith.mulf %8, %9 : vector<1x128xf32>
    %11 = arith.mulf %6, %6 : vector<16x128xf32>
    %cst_8 = arith.constant dense<0.000000e+00> : vector<128xf32>
    %12 = vector.multi_reduction <add>, %11, %cst_8 [0] : vector<16x128xf32> to vector<128xf32>
    %13 = vector.shape_cast %12 : vector<128xf32> to vector<1x128xf32>
    %cst_9 = arith.constant 6.250000e-02 : f32
    %14 = vector.broadcast %cst_9 : f32 to vector<1x128xf32>
    %15 = arith.mulf %13, %14 : vector<1x128xf32>
    %16 = arith.mulf %10, %10 : vector<1x128xf32>
    %17 = arith.subf %15, %16 : vector<1x128xf32>
    %cst_10 = arith.constant 0.000000e+00 : f32
    %18 = vector.broadcast %cst_10 : f32 to vector<1x128xf32>
    %19 = arith.maximumf %17, %18 : vector<1x128xf32>
    %20 = vector.broadcast %10 : vector<1x128xf32> to vector<16x128xf32>
    %21 = arith.subf %6, %20 : vector<16x128xf32>
    %cst_11 = arith.constant 9.99999974E-6 : f32
    %22 = vector.broadcast %cst_11 : f32 to vector<1x128xf32>
    %23 = arith.addf %19, %22 : vector<1x128xf32>
    %24 = math.rsqrt %23 : vector<1x128xf32>
    %25 = vector.broadcast %24 : vector<1x128xf32> to vector<16x128xf32>
    %26 = arith.mulf %21, %25 : vector<16x128xf32>
    %cst_12 = arith.constant 0.000000e+00 : f32
    %27 = vector.broadcast %cst_12 : f32 to vector<16x128xf32>
    %28 = arith.maximumf %26, %27 : vector<16x128xf32>
    %c0_13 = arith.constant 0 : index
    %c0_14 = arith.constant 0 : index
    %c0_15 = arith.constant 0 : index
    %29 = vector.load %arg4[%c0_13, %c0_14, %c0_15] : memref<1x16x128xf32, #tpu.memory_space<vmem>>, vector<1x16x128xf32>
    %30 = vector.shape_cast %29 : vector<1x16x128xf32> to vector<16x128xf32>
    %31 = vector.shape_cast %28 : vector<16x128xf32> to vector<1x16x128xf32>
    tpu.vector_store %arg4[%c0_13, %c0_14, %c0_15], %31 {strides = array<i32>} : memref<1x16x128xf32, #tpu.memory_space<vmem>>, vector<1x16x128xf32>,
    return
  }
  func.func @transform_0(%arg0: i32) -> (i32, i32, i32) {
    %c0_i32 = arith.constant 0 : i32
    %c0_i32_0 = arith.constant 0 : i32
    %c0_i32_1 = arith.constant 0 : i32
    return %arg0, %c0_i32, %c0_i32_0 : i32, i32, i32
  }
  func.func @transform_1(%arg0: i32) -> (i32, i32) {
    %c0_i32 = arith.constant 0 : i32
    %c0_i32_0 = arith.constant 0 : i32
    %c0_i32_1 = arith.constant 0 : i32
    return %c0_i32, %c0_i32_0 : i32, i32
  }
  func.func @transform_2(%arg0: i32) -> (i32, i32) {
    %c0_i32 = arith.constant 0 : i32
    %c0_i32_0 = arith.constant 0 : i32
    %c0_i32_1 = arith.constant 0 : i32
    return %c0_i32, %c0_i32_0 : i32, i32
  }
  func.func @transform_3(%arg0: i32) -> (i32, i32, i32) {
    %c0_i32 = arith.constant 0 : i32
    %c0_i32_0 = arith.constant 0 : i32
    %c0_i32_1 = arith.constant 0 : i32
    return %arg0, %c0_i32, %c0_i32_0 : i32, i32, i32
  }
}

module attributes {stable_mosaic.version = 11 : i64} {
  func.func @_fused_full_kernel(%arg0: i32, %arg1: memref<1x16x384xbf16, #tpu.memory_space<vmem>>, %arg2: memref<384x128xbf16, #tpu.memory_space<vmem>>, %arg3: memref<1x128xf32, #tpu.memory_space<vmem>>, %arg4: memref<1x16x128xf32, #tpu.memory_space<vmem>>, %arg5: memref<1x16x128xf32, #tpu.memory_space<vmem>>) attributes {dimension_semantics = [#tpu.dimension_semantics<parallel>], iteration_bounds = array<i64: 2>, scalar_prefetch = 0 : i64, scratch_operands = 0 : i64, tpu.core_type = #tpu.core_type<tc>, window_params = [{transform_indices = @transform_0, window_bounds = array<i64: 1, 16, 384>}, {pipeline_mode = #tpu.pipeline_mode<synchronous>, transform_indices = @transform_1, window_bounds = array<i64: 384, 128>}, {pipeline_mode = #tpu.pipeline_mode<synchronous>, transform_indices = @transform_2, window_bounds = array<i64: 1, 128>}, {transform_indices = @transform_3, window_bounds = array<i64: 1, 16, 128>}, {transform_indices = @transform_4, window_bounds = array<i64: 1, 16, 128>}]} {
    %c0 = arith.constant 0 : index
    %c0_0 = arith.constant 0 : index
    %c0_1 = arith.constant 0 : index
    %0 = vector.load %arg1[%c0, %c0_0, %c0_1] : memref<1x16x384xbf16, #tpu.memory_space<vmem>>, vector<1x16x384xbf16>
    %1 = vector.shape_cast %0 : vector<1x16x384xbf16> to vector<16x384xbf16>
    %c0_2 = arith.constant 0 : index
    %c0_3 = arith.constant 0 : index
    %2 = vector.load %arg2[%c0_2, %c0_3] : memref<384x128xbf16, #tpu.memory_space<vmem>>, vector<384x128xbf16>
    %cst = arith.constant dense<0.000000e+00> : vector<16x128xf32>
    %3 = tpu.matmul %1, %2, %cst {dimension_numbers = #tpu.dot_dimension_numbers<[1], [0], [0], [1], [0, 0, 1, 1], [], []>} : vector<16x384xbf16>, vector<384x128xbf16>, vector<16x128xf32> -> vector<16x128xf32>
    %c0_4 = arith.constant 0 : index
    %c0_5 = arith.constant 0 : index
    %4 = vector.load %arg3[%c0_4, %c0_5] : memref<1x128xf32, #tpu.memory_space<vmem>>, vector<1x128xf32>
    %5 = vector.broadcast %4 : vector<1x128xf32> to vector<16x128xf32>
    %6 = arith.addf %3, %5 : vector<16x128xf32>
    %cst_6 = arith.constant dense<0.000000e+00> : vector<128xf32>
    %7 = vector.multi_reduction <add>, %6, %cst_6 [0] : vector<16x128xf32> to vector<128xf32>
    %8 = vector.shape_cast %7 : vector<128xf32> to vector<1x128xf32>
    %cst_7 = arith.constant 6.250000e-02 : f32
    %9 = vector.broadcast %cst_7 : f32 to vector<1x128xf32>
    %10 = arith.mulf %8, %9 : vector<1x128xf32>
    %11 = arith.mulf %6, %6 : vector<16x128xf32>
    %cst_8 = arith.constant dense<0.000000e+00> : vector<128xf32>
    %12 = vector.multi_reduction <add>, %11, %cst_8 [0] : vector<16x128xf32> to vector<128xf32>
    %13 = vector.shape_cast %12 : vector<128xf32> to vector<1x128xf32>
    %cst_9 = arith.constant 6.250000e-02 : f32
    %14 = vector.broadcast %cst_9 : f32 to vector<1x128xf32>
    %15 = arith.mulf %13, %14 : vector<1x128xf32>
    %16 = arith.mulf %10, %10 : vector<1x128xf32>
    %17 = arith.subf %15, %16 : vector<1x128xf32>
    %cst_10 = arith.constant 0.000000e+00 : f32
    %18 = vector.broadcast %cst_10 : f32 to vector<1x128xf32>
    %19 = arith.maximumf %17, %18 : vector<1x128xf32>
    %20 = vector.broadcast %10 : vector<1x128xf32> to vector<16x128xf32>
    %21 = arith.subf %6, %20 : vector<16x128xf32>
    %cst_11 = arith.constant 9.99999974E-6 : f32
    %22 = vector.broadcast %cst_11 : f32 to vector<1x128xf32>
    %23 = arith.addf %19, %22 : vector<1x128xf32>
    %24 = math.rsqrt %23 : vector<1x128xf32>
    %25 = vector.broadcast %24 : vector<1x128xf32> to vector<16x128xf32>
    %26 = arith.mulf %21, %25 : vector<16x128xf32>
    %c0_12 = arith.constant 0 : index
    %c0_13 = arith.constant 0 : index
    %c0_14 = arith.constant 0 : index
    %27 = vector.load %arg4[%c0_12, %c0_13, %c0_14] : memref<1x16x128xf32, #tpu.memory_space<vmem>>, vector<1x16x128xf32>
    %28 = vector.shape_cast %27 : vector<1x16x128xf32> to vector<16x128xf32>
    %29 = arith.addf %26, %28 : vector<16x128xf32>
    %c0_15 = arith.constant 0 : index
    %c0_16 = arith.constant 0 : index
    %c0_17 = arith.constant 0 : index
    %30 = vector.load %arg5[%c0_15, %c0_16, %c0_17] : memref<1x16x128xf32, #tpu.memory_space<vmem>>, vector<1x16x128xf32>
    %31 = vector.shape_cast %30 : vector<1x16x128xf32> to vector<16x128xf32>
    %32 = vector.shape_cast %29 : vector<16x128xf32> to vector<1x16x128xf32>
    tpu.vector_store %arg5[%c0_15, %c0_16, %c0_17], %32 {strides = array<i32>} : memref<1x16x128xf32, #tpu.memory_space<vmem>>, vector<1x16x128xf32>,
    return
  }
  func.func @transform_0(%arg0: i32) -> (i32, i32, i32) {
    %c0_i32 = arith.constant 0 : i32
    %c0_i32_0 = arith.constant 0 : i32
    %c0_i32_1 = arith.constant 0 : i32
    return %arg0, %c0_i32, %c0_i32_0 : i32, i32, i32
  }
  func.func @transform_1(%arg0: i32) -> (i32, i32) {
    %c0_i32 = arith.constant 0 : i32
    %c0_i32_0 = arith.constant 0 : i32
    %c0_i32_1 = arith.constant 0 : i32
    return %c0_i32, %c0_i32_0 : i32, i32
  }
  func.func @transform_2(%arg0: i32) -> (i32, i32) {
    %c0_i32 = arith.constant 0 : i32
    %c0_i32_0 = arith.constant 0 : i32
    %c0_i32_1 = arith.constant 0 : i32
    return %c0_i32, %c0_i32_0 : i32, i32
  }
  func.func @transform_3(%arg0: i32) -> (i32, i32, i32) {
    %c0_i32 = arith.constant 0 : i32
    %c0_i32_0 = arith.constant 0 : i32
    %c0_i32_1 = arith.constant 0 : i32
    return %arg0, %c0_i32, %c0_i32_0 : i32, i32, i32
  }
  func.func @transform_4(%arg0: i32) -> (i32, i32, i32) {
    %c0_i32 = arith.constant 0 : i32
    %c0_i32_0 = arith.constant 0 : i32
    %c0_i32_1 = arith.constant 0 : i32
    return %arg0, %c0_i32, %c0_i32_0 : i32, i32, i32
  }
}

module attributes {stable_mosaic.version = 11 : i64} {
  func.func @_fused_full_kernel(%arg0: i32, %arg1: memref<1x64x384xbf16, #tpu.memory_space<vmem>>, %arg2: memref<384x128xbf16, #tpu.memory_space<vmem>>, %arg3: memref<1x128xf32, #tpu.memory_space<vmem>>, %arg4: memref<1x64x128xf32, #tpu.memory_space<vmem>>) attributes {dimension_semantics = [#tpu.dimension_semantics<parallel>], iteration_bounds = array<i64: 2>, scalar_prefetch = 0 : i64, scratch_operands = 0 : i64, tpu.core_type = #tpu.core_type<tc>, window_params = [{transform_indices = @transform_0, window_bounds = array<i64: 1, 64, 384>}, {pipeline_mode = #tpu.pipeline_mode<synchronous>, transform_indices = @transform_1, window_bounds = array<i64: 384, 128>}, {pipeline_mode = #tpu.pipeline_mode<synchronous>, transform_indices = @transform_2, window_bounds = array<i64: 1, 128>}, {transform_indices = @transform_3, window_bounds = array<i64: 1, 64, 128>}]} {
    %c0 = arith.constant 0 : index
    %c0_0 = arith.constant 0 : index
    %c0_1 = arith.constant 0 : index
    %0 = vector.load %arg1[%c0, %c0_0, %c0_1] : memref<1x64x384xbf16, #tpu.memory_space<vmem>>, vector<1x64x384xbf16>
    %1 = vector.shape_cast %0 : vector<1x64x384xbf16> to vector<64x384xbf16>
    %c0_2 = arith.constant 0 : index
    %c0_3 = arith.constant 0 : index
    %2 = vector.load %arg2[%c0_2, %c0_3] : memref<384x128xbf16, #tpu.memory_space<vmem>>, vector<384x128xbf16>
    %cst = arith.constant dense<0.000000e+00> : vector<64x128xf32>
    %3 = tpu.matmul %1, %2, %cst {dimension_numbers = #tpu.dot_dimension_numbers<[1], [0], [0], [1], [0, 0, 1, 1], [], []>} : vector<64x384xbf16>, vector<384x128xbf16>, vector<64x128xf32> -> vector<64x128xf32>
    %c0_4 = arith.constant 0 : index
    %c0_5 = arith.constant 0 : index
    %4 = vector.load %arg3[%c0_4, %c0_5] : memref<1x128xf32, #tpu.memory_space<vmem>>, vector<1x128xf32>
    %5 = vector.broadcast %4 : vector<1x128xf32> to vector<64x128xf32>
    %6 = arith.addf %3, %5 : vector<64x128xf32>
    %cst_6 = arith.constant dense<0.000000e+00> : vector<128xf32>
    %7 = vector.multi_reduction <add>, %6, %cst_6 [0] : vector<64x128xf32> to vector<128xf32>
    %8 = vector.shape_cast %7 : vector<128xf32> to vector<1x128xf32>
    %cst_7 = arith.constant 1.562500e-02 : f32
    %9 = vector.broadcast %cst_7 : f32 to vector<1x128xf32>
    %10 = arith.mulf %8, %9 : vector<1x128xf32>
    %11 = arith.mulf %6, %6 : vector<64x128xf32>
    %cst_8 = arith.constant dense<0.000000e+00> : vector<128xf32>
    %12 = vector.multi_reduction <add>, %11, %cst_8 [0] : vector<64x128xf32> to vector<128xf32>
    %13 = vector.shape_cast %12 : vector<128xf32> to vector<1x128xf32>
    %cst_9 = arith.constant 1.562500e-02 : f32
    %14 = vector.broadcast %cst_9 : f32 to vector<1x128xf32>
    %15 = arith.mulf %13, %14 : vector<1x128xf32>
    %16 = arith.mulf %10, %10 : vector<1x128xf32>
    %17 = arith.subf %15, %16 : vector<1x128xf32>
    %cst_10 = arith.constant 0.000000e+00 : f32
    %18 = vector.broadcast %cst_10 : f32 to vector<1x128xf32>
    %19 = arith.maximumf %17, %18 : vector<1x128xf32>
    %20 = vector.broadcast %10 : vector<1x128xf32> to vector<64x128xf32>
    %21 = arith.subf %6, %20 : vector<64x128xf32>
    %cst_11 = arith.constant 9.99999974E-6 : f32
    %22 = vector.broadcast %cst_11 : f32 to vector<1x128xf32>
    %23 = arith.addf %19, %22 : vector<1x128xf32>
    %24 = math.rsqrt %23 : vector<1x128xf32>
    %25 = vector.broadcast %24 : vector<1x128xf32> to vector<64x128xf32>
    %26 = arith.mulf %21, %25 : vector<64x128xf32>
    %cst_12 = arith.constant 0.000000e+00 : f32
    %27 = vector.broadcast %cst_12 : f32 to vector<64x128xf32>
    %28 = arith.maximumf %26, %27 : vector<64x128xf32>
    %c0_13 = arith.constant 0 : index
    %c0_14 = arith.constant 0 : index
    %c0_15 = arith.constant 0 : index
    %29 = vector.load %arg4[%c0_13, %c0_14, %c0_15] : memref<1x64x128xf32, #tpu.memory_space<vmem>>, vector<1x64x128xf32>
    %30 = vector.shape_cast %29 : vector<1x64x128xf32> to vector<64x128xf32>
    %31 = vector.shape_cast %28 : vector<64x128xf32> to vector<1x64x128xf32>
    tpu.vector_store %arg4[%c0_13, %c0_14, %c0_15], %31 {strides = array<i32>} : memref<1x64x128xf32, #tpu.memory_space<vmem>>, vector<1x64x128xf32>,
    return
  }
  func.func @transform_0(%arg0: i32) -> (i32, i32, i32) {
    %c0_i32 = arith.constant 0 : i32
    %c0_i32_0 = arith.constant 0 : i32
    %c0_i32_1 = arith.constant 0 : i32
    return %arg0, %c0_i32, %c0_i32_0 : i32, i32, i32
  }
  func.func @transform_1(%arg0: i32) -> (i32, i32) {
    %c0_i32 = arith.constant 0 : i32
    %c0_i32_0 = arith.constant 0 : i32
    %c0_i32_1 = arith.constant 0 : i32
    return %c0_i32, %c0_i32_0 : i32, i32
  }
  func.func @transform_2(%arg0: i32) -> (i32, i32) {
    %c0_i32 = arith.constant 0 : i32
    %c0_i32_0 = arith.constant 0 : i32
    %c0_i32_1 = arith.constant 0 : i32
    return %c0_i32, %c0_i32_0 : i32, i32
  }
  func.func @transform_3(%arg0: i32) -> (i32, i32, i32) {
    %c0_i32 = arith.constant 0 : i32
    %c0_i32_0 = arith.constant 0 : i32
    %c0_i32_1 = arith.constant 0 : i32
    return %arg0, %c0_i32, %c0_i32_0 : i32, i32, i32
  }
}

module attributes {stable_mosaic.version = 11 : i64} {
  func.func @_fused_full_kernel(%arg0: i32, %arg1: memref<1x256x512xbf16, #tpu.memory_space<vmem>>, %arg2: memref<512x128xbf16, #tpu.memory_space<vmem>>, %arg3: memref<1x128xf32, #tpu.memory_space<vmem>>, %arg4: memref<1x256x128xf32, #tpu.memory_space<vmem>>) attributes {dimension_semantics = [#tpu.dimension_semantics<parallel>], iteration_bounds = array<i64: 2>, scalar_prefetch = 0 : i64, scratch_operands = 0 : i64, tpu.core_type = #tpu.core_type<tc>, window_params = [{transform_indices = @transform_0, window_bounds = array<i64: 1, 256, 512>}, {pipeline_mode = #tpu.pipeline_mode<synchronous>, transform_indices = @transform_1, window_bounds = array<i64: 512, 128>}, {pipeline_mode = #tpu.pipeline_mode<synchronous>, transform_indices = @transform_2, window_bounds = array<i64: 1, 128>}, {transform_indices = @transform_3, window_bounds = array<i64: 1, 256, 128>}]} {
    %c0 = arith.constant 0 : index
    %c0_0 = arith.constant 0 : index
    %c0_1 = arith.constant 0 : index
    %0 = vector.load %arg1[%c0, %c0_0, %c0_1] : memref<1x256x512xbf16, #tpu.memory_space<vmem>>, vector<1x256x512xbf16>
    %1 = vector.shape_cast %0 : vector<1x256x512xbf16> to vector<256x512xbf16>
    %c0_2 = arith.constant 0 : index
    %c0_3 = arith.constant 0 : index
    %2 = vector.load %arg2[%c0_2, %c0_3] : memref<512x128xbf16, #tpu.memory_space<vmem>>, vector<512x128xbf16>
    %cst = arith.constant dense<0.000000e+00> : vector<256x128xf32>
    %3 = tpu.matmul %1, %2, %cst {dimension_numbers = #tpu.dot_dimension_numbers<[1], [0], [0], [1], [0, 0, 1, 1], [], []>} : vector<256x512xbf16>, vector<512x128xbf16>, vector<256x128xf32> -> vector<256x128xf32>
    %c0_4 = arith.constant 0 : index
    %c0_5 = arith.constant 0 : index
    %4 = vector.load %arg3[%c0_4, %c0_5] : memref<1x128xf32, #tpu.memory_space<vmem>>, vector<1x128xf32>
    %5 = vector.broadcast %4 : vector<1x128xf32> to vector<256x128xf32>
    %6 = arith.addf %3, %5 : vector<256x128xf32>
    %7 = math.tanh %6 : vector<256x128xf32>
    %c0_6 = arith.constant 0 : index
    %c0_7 = arith.constant 0 : index
    %c0_8 = arith.constant 0 : index
    %8 = vector.load %arg4[%c0_6, %c0_7, %c0_8] : memref<1x256x128xf32, #tpu.memory_space<vmem>>, vector<1x256x128xf32>
    %9 = vector.shape_cast %8 : vector<1x256x128xf32> to vector<256x128xf32>
    %10 = vector.shape_cast %7 : vector<256x128xf32> to vector<1x256x128xf32>
    tpu.vector_store %arg4[%c0_6, %c0_7, %c0_8], %10 {strides = array<i32>} : memref<1x256x128xf32, #tpu.memory_space<vmem>>, vector<1x256x128xf32>,
    return
  }
  func.func @transform_0(%arg0: i32) -> (i32, i32, i32) {
    %c0_i32 = arith.constant 0 : i32
    %c0_i32_0 = arith.constant 0 : i32
    %c0_i32_1 = arith.constant 0 : i32
    return %arg0, %c0_i32, %c0_i32_0 : i32, i32, i32
  }
  func.func @transform_1(%arg0: i32) -> (i32, i32) {
    %c0_i32 = arith.constant 0 : i32
    %c0_i32_0 = arith.constant 0 : i32
    %c0_i32_1 = arith.constant 0 : i32
    return %c0_i32, %c0_i32_0 : i32, i32
  }
  func.func @transform_2(%arg0: i32) -> (i32, i32) {
    %c0_i32 = arith.constant 0 : i32
    %c0_i32_0 = arith.constant 0 : i32
    %c0_i32_1 = arith.constant 0 : i32
    return %c0_i32, %c0_i32_0 : i32, i32
  }
  func.func @transform_3(%arg0: i32) -> (i32, i32, i32) {
    %c0_i32 = arith.constant 0 : i32
    %c0_i32_0 = arith.constant 0 : i32
    %c0_i32_1 = arith.constant 0 : i32
    return %arg0, %c0_i32, %c0_i32_0 : i32, i32, i32
  }
}

</mosaic_0001>

<llo_original>
// kernel: generator_forward.10
$region0: #{generator_forward.10}
  #allocation0 [shape = 'u32[]', space=smem, size = 0x4, offset = 0x4, fixed_abs, tag = 'smem constant byte address 0x4 - core index']
  #allocation1 [shape = 'u32[144,128]{1,0:T(1,128)}', space=vmem, size = 0x12000, scoped, tag = 'internal scratch']
  %s0 = inlined_call_operand.vmem [shape: bf16[2,256,256], index: 0, kind: input, shape index: {}]
  %s1 = inlined_call_operand.vmem [shape: bf16[256,128], index: 1, kind: input, shape index: {}]
  %s2 = inlined_call_operand.vmem [shape: f32[1,128], index: 2, kind: input, shape index: {}]
  %s3 = inlined_call_operand.vmem [shape: f32[2,256,128], index: 3, kind: output, shape index: {}]
  %s4 = sld [smem:[#allocation0]]
  $region45: #{generator_forward.10} parent=0
    _
  %s6 = ssub.s32 1, %s4
  %s7 = scalar_select 0, %s6, %s4
  loop: start=0, step=1, limit=4
  $region2: #{generator_forward.10} parent=0 // loop_pre_header
    _
  $region3: #{generator_forward.10} parent=0 // loop_header
    %s9 = sphi 0, %s13
    %p10 = scmp.ge.s32.totalorder %s9, 4
    %s19 = sphi 0, %s21
    %s22 = sphi 0, %s19
    %s23 = sphi 0, %s22
    %s39 = sphi 0, %s23
    %s43 = sphi 0, %s43
    %s45 = sphi 0, %s43
    %s46 = sphi 0, %s45
    %s60 = sphi 0, %s46
    %s64 = sphi 0, %s64
    %s66 = sphi 0, %s64
    %s67 = sphi 0, %s66
    %s81 = sphi 0, %s67
    %s87 = sphi 0, %s89
    %s90 = sphi 0, %s87
    %s91 = sphi 0, %s90
    %s107 = sphi 0, %s91
  $region4: #{generator_forward.10} parent=0 // loop_header_branch
    %12 = sbr.rel (%p10) target = $region8
  $region5: #{generator_forward.10} parent=0 // loop_body
    %s14 = ssub.s32 %s9, 1
    %s15 = ssub.s32 %s9, 2
    %s16 = sadd.s32 %s9, 1
    %s17 = ssub.s32 %s9, %s16
    %p18 = scmp.eq.s32.totalorder %s17, 0
    %s20 = sadd.s32 %s19, 1
    %s21 = scalar_select %p18, %s19, %s20
    %p24 = pneg %p18
    %p25 = scmp.eq.s32.totalorder %s9, 1
    %p26 = por %p24, %p25
    %p27 = scmp.ne.s32.totalorder %s19, %s22
    %p28 = scmp.eq.s32.totalorder %s9, 0
    %p29 = por %p27, %p28
    %p30 = scmp.ne.s32.totalorder %s19, %s22
    %p31 = scmp.eq.s32.totalorder %s14, 1
    %p32 = por %p30, %p31
    %p33 = scmp.ne.s32.totalorder %s22, %s23
    %p34 = scmp.eq.s32.totalorder %s14, 0
    %p35 = por %p33, %p34
    %p36 = scmp.ne.s32.totalorder %s22, %s23
    %p37 = scmp.eq.s32.totalorder %s15, 1
    %p38 = por %p36, %p37
    %p40 = scmp.ne.s32.totalorder %s23, %s39
    %p41 = scmp.eq.s32.totalorder %s15, 0
    %p42 = por %p40, %p41
    %s44 = sadd.s32 %s43, 1
    %p47 = scmp.eq.s32.totalorder %s9, 1
    %p48 = scmp.ne.s32.totalorder %s43, %s45
    %p49 = scmp.eq.s32.totalorder %s9, 0
    %p50 = por %p48, %p49
    %p51 = scmp.ne.s32.totalorder %s43, %s45
    %p52 = scmp.eq.s32.totalorder %s14, 1
    %p53 = por %p51, %p52
    %p54 = scmp.ne.s32.totalorder %s45, %s46
    %p55 = scmp.eq.s32.totalorder %s14, 0
    %p56 = por %p54, %p55
    %p57 = scmp.ne.s32.totalorder %s45, %s46
    %p58 = scmp.eq.s32.totalorder %s15, 1
    %p59 = por %p57, %p58
    %p61 = scmp.ne.s32.totalorder %s46, %s60
    %p62 = scmp.eq.s32.totalorder %s15, 0
    %p63 = por %p61, %p62
    %s65 = sadd.s32 %s64, 1
    %p68 = scmp.eq.s32.totalorder %s9, 1
    %p69 = scmp.ne.s32.totalorder %s64, %s66
    %p70 = scmp.eq.s32.totalorder %s9, 0
    %p71 = por %p69, %p70
    %p72 = scmp.ne.s32.totalorder %s64, %s66
    %p73 = scmp.eq.s32.totalorder %s14, 1
    %p74 = por %p72, %p73
    %p75 = scmp.ne.s32.totalorder %s66, %s67
    %p76 = scmp.eq.s32.totalorder %s14, 0
    %p77 = por %p75, %p76
    %p78 = scmp.ne.s32.totalorder %s66, %s67
    %p79 = scmp.eq.s32.totalorder %s15, 1
    %p80 = por %p78, %p79
    %p82 = scmp.ne.s32.totalorder %s67, %s81
    %p83 = scmp.eq.s32.totalorder %s15, 0
    %p84 = por %p82, %p83
    %s85 = ssub.s32 %s9, %s16
    %p86 = scmp.eq.s32.totalorder %s85, 0
    %s88 = sadd.s32 %s87, 1
    %s89 = scalar_select %p86, %s87, %s88
    %p92 = pneg %p86
    %p93 = scmp.eq.s32.totalorder %s9, 1
    %p94 = por %p92, %p93
    %p95 = scmp.ne.s32.totalorder %s87, %s90
    %p96 = scmp.eq.s32.totalorder %s9, 0
    %p97 = por %p95, %p96
    %p98 = scmp.ne.s32.totalorder %s87, %s90
    %p99 = scmp.eq.s32.totalorder %s14, 1
    %p100 = por %p98, %p99
    %p101 = scmp.ne.s32.totalorder %s90, %s91
    %p102 = scmp.eq.s32.totalorder %s14, 0
    %p103 = por %p101, %p102
    %p104 = scmp.ne.s32.totalorder %s90, %s91
    %p105 = scmp.eq.s32.totalorder %s15, 1
    %p106 = por %p104, %p105
    %p108 = scmp.ne.s32.totalorder %s91, %s107
    %p109 = scmp.eq.s32.totalorder %s15, 0
    %p110 = por %p108, %p109
    %p111 = scmp.le.s32.totalorder 1, %s9
    %p112 = scmp.lt.s32.totalorder %s9, 3
    %p113 = pnand %p111, %p112
    %p114 = pneg %p113
    // Predicated region
    $region9: #{generator_forward.10} parent=5 // pred_check
      _
    $region10: #{generator_forward.10} parent=5 // pred_check_branch
      %116 = sbr.rel (%p113) target = $region12
    $region11: #{generator_forward.10} parent=5 // pred_region
      %s117 = ssub.s32 %s9, 1
      // Predicated region
      $region13: #{generator_forward.10} parent=11 // pred_check
        %p118 = pneg %p56
      $region14: #{generator_forward.10} parent=11 // pred_check_branch
        %120 = sbr.rel (%p118) target = $region16
      $region15: #{generator_forward.10} parent=11 // pred_region
        _
      $region16: #{generator_forward.10} parent=11 // pred_fallthru
        _
      // Predicated region
      $region17: #{generator_forward.10} parent=11 // pred_check
        %p121 = pneg %p77
      $region18: #{generator_forward.10} parent=11 // pred_check_branch
        %123 = sbr.rel (%p121) target = $region20
      $region19: #{generator_forward.10} parent=11 // pred_region
        _
      $region20: #{generator_forward.10} parent=11 // pred_fallthru
        _
    $region12: #{generator_forward.10} parent=5 // pred_fallthru
      _
    %p124 = scmp.lt.s32.totalorder %s9, 2
    // Predicated region
    $region21: #{generator_forward.10} parent=5 // pred_check
      %p125 = pneg %p124
    $region22: #{generator_forward.10} parent=5 // pred_check_branch
      %127 = sbr.rel (%p125) target = $region24
    $region23: #{generator_forward.10} parent=5 // pred_region
      // Predicated region
      $region25: #{generator_forward.10} parent=23 // pred_check
        %p128 = pneg %p29
      $region26: #{generator_forward.10} parent=23 // pred_check_branch
        %130 = sbr.rel (%p128) target = $region28
      $region27: #{generator_forward.10} parent=23 // pred_region
        %p131 = scmp.lt.s32.totalorder %s9, 1
        %s132 = scalar_select %p131, %s9, 1
        %s133 = smul.addr %s132, 64
        %s134 = smul.addr %s133, 4
        %s135 = scalar_lea.vmem %s0, %s134
      $region28: #{generator_forward.10} parent=23 // pred_fallthru
        _
    $region24: #{generator_forward.10} parent=5 // pred_fallthru
      _
    %p136 = scmp.le.s32.totalorder 1, %s9
    %p137 = scmp.lt.s32.totalorder %s9, 3
    %p138 = pnand %p136, %p137
    %p139 = pneg %p138
    // Predicated region
    $region29: #{generator_forward.10} parent=5 // pred_check
      _
    $region30: #{generator_forward.10} parent=5 // pred_check_branch
      %141 = sbr.rel (%p138) target = $region32
    $region31: #{generator_forward.10} parent=5 // pred_region
      %s142 = ssub.s32 %s9, 1
      %p143 = scmp.lt.s32.totalorder %s14, 1
      %s144 = scalar_select %p143, %s14, 1
      %s145 = smul.addr %s144, 64
      %s146 = smul.addr %s145, 4
      %s147 = scalar_lea.vmem %s0, %s146
      %p148 = pneg %p35
      %p149 = pneg %p32
      %p150 = pneg %p56
      %p151 = pneg %p53
      %p152 = pneg %p77
      %p153 = pneg %p74
      %p154 = pneg %p103
      %p155 = pneg %p100
      %p156 = scmp.lt.s32.totalorder %s14, 1
      %s157 = scalar_select %p156, %s14, 1
      %s158 = smul.addr %s157, 32
      %s159 = smul.addr %s158, 8
      %s160 = scalar_lea.vmem %s3, %s159
      %p161 = scmp.lt.s32.totalorder %s14, 1
      %s162 = scalar_select %p161, %s14, 1
      %s163 = smul.addr %s162, 64
      %s164 = smul.addr %s163, 4
      %s165 = scalar_lea.vmem %s0, %s164
      %p166 = scmp.lt.s32.totalorder %s14, 1
      %s167 = scalar_select %p166, %s14, 1
      %s168 = smul.addr %s167, 32
      %s169 = smul.addr %s168, 8
      %s170 = scalar_lea.vmem %s3, %s169
      %v172 = vld [vmem:[%s165] sm:$0xff]
      %v173 = vld [vmem:[%s165 + $0x8] sm:$0xff]
      %v174 = vld [vmem:[%s165 + $0x10] sm:$0xff]
      %v175 = vld [vmem:[%s165 + $0x18] sm:$0xff]
      %v176 = vld [vmem:[%s165 + $0x20] sm:$0xff]
      %v177 = vld [vmem:[%s165 + $0x28] sm:$0xff]
      %v178 = vld [vmem:[%s165 + $0x30] sm:$0xff]
      %v179 = vld [vmem:[%s165 + $0x38] sm:$0xff]
      %v180 = vld [vmem:[%s165 + $0x40] sm:$0xff]
      %v181 = vld [vmem:[%s165 + $0x48] sm:$0xff]
      %v182 = vld [vmem:[%s165 + $0x50] sm:$0xff]
      %v183 = vld [vmem:[%s165 + $0x58] sm:$0xff]
      %v184 = vld [vmem:[%s165 + $0x60] sm:$0xff]
      %v185 = vld [vmem:[%s165 + $0x68] sm:$0xff]
      %v186 = vld [vmem:[%s165 + $0x70] sm:$0xff]
      %v187 = vld [vmem:[%s165 + $0x78] sm:$0xff]
      %v188 = vld [vmem:[%s165 + $0x80] sm:$0xff]
      %v189 = vld [vmem:[%s165 + $0x88] sm:$0xff]
      %v190 = vld [vmem:[%s165 + $0x90] sm:$0xff]
      %v191 = vld [vmem:[%s165 + $0x98] sm:$0xff]
      %v192 = vld [vmem:[%s165 + $0xa0] sm:$0xff]
      %v193 = vld [vmem:[%s165 + $0xa8] sm:$0xff]
      %v194 = vld [vmem:[%s165 + $0xb0] sm:$0xff]
      %v195 = vld [vmem:[%s165 + $0xb8] sm:$0xff]
      %v196 = vld [vmem:[%s165 + $0xc0] sm:$0xff]
      %v197 = vld [vmem:[%s165 + $0xc8] sm:$0xff]
      %v198 = vld [vmem:[%s165 + $0xd0] sm:$0xff]
      %v199 = vld [vmem:[%s165 + $0xd8] sm:$0xff]
      %v200 = vld [vmem:[%s165 + $0xe0] sm:$0xff]
      %v201 = vld [vmem:[%s165 + $0xe8] sm:$0xff]
      %v202 = vld [vmem:[%s165 + $0xf0] sm:$0xff]
      %v203 = vld [vmem:[%s165 + $0xf8] sm:$0xff]
      %v204 = vld [vmem:[%s1] sm:$0xf]
      %v205 = vld [vmem:[%s1 + $0x4] sm:$0xf]
      %v206 = vld [vmem:[%s1 + $0x8] sm:$0xf]
      %v207 = vld [vmem:[%s1 + $0xc] sm:$0xf]
      %v208 = vld [vmem:[%s1 + $0x10] sm:$0xf]
      %v209 = vld [vmem:[%s1 + $0x14] sm:$0xf]
      %v210 = vld [vmem:[%s1 + $0x18] sm:$0xf]
      %v211 = vld [vmem:[%s1 + $0x1c] sm:$0xf]
      %v212 = vld [vmem:[%s1 + $0x20] sm:$0xf]
      %v213 = vld [vmem:[%s1 + $0x24] sm:$0xf]
      %v214 = vld [vmem:[%s1 + $0x28] sm:$0xf]
      %v215 = vld [vmem:[%s1 + $0x2c] sm:$0xf]
      %v216 = vld [vmem:[%s1 + $0x30] sm:$0xf]
      %v217 = vld [vmem:[%s1 + $0x34] sm:$0xf]
      %v218 = vld [vmem:[%s1 + $0x38] sm:$0xf]
      %v219 = vld [vmem:[%s1 + $0x3c] sm:$0xf]
      %v220 = vld [vmem:[%s1 + $0x40] sm:$0xf]
      %v221 = vld [vmem:[%s1 + $0x44] sm:$0xf]
      %v222 = vld [vmem:[%s1 + $0x48] sm:$0xf]
      %v223 = vld [vmem:[%s1 + $0x4c] sm:$0xf]
      %v224 = vld [vmem:[%s1 + $0x50] sm:$0xf]
      %v225 = vld [vmem:[%s1 + $0x54] sm:$0xf]
      %v226 = vld [vmem:[%s1 + $0x58] sm:$0xf]
      %v227 = vld [vmem:[%s1 + $0x5c] sm:$0xf]
      %v228 = vld [vmem:[%s1 + $0x60] sm:$0xf]
      %v229 = vld [vmem:[%s1 + $0x64] sm:$0xf]
      %v230 = vld [vmem:[%s1 + $0x68] sm:$0xf]
      %v231 = vld [vmem:[%s1 + $0x6c] sm:$0xf]
      %v232 = vld [vmem:[%s1 + $0x70] sm:$0xf]
      %v233 = vld [vmem:[%s1 + $0x74] sm:$0xf]
      %v234 = vld [vmem:[%s1 + $0x78] sm:$0xf]
      %v235 = vld [vmem:[%s1 + $0x7c] sm:$0xf]
      %v236 = vld [vmem:[%s2] sm:$0x1]
      %v238 = vlaneseq
      %v239 = vshrl.u32 %v238, 7
      %v240 = vsub.s32 0, %v239
      %v241 = vrot.slane %v236, %v240
      %v275 = vunpack.c.l.b16 %v172
      %v276 = vunpack.c.h.b16 %v172
      %v277 = vunpack.c.l.b16 %v173
      %v278 = vunpack.c.h.b16 %v173
      %v279 = vunpack.c.l.b16 %v174
      %v280 = vunpack.c.h.b16 %v174
      %v281 = vunpack.c.l.b16 %v175
      %v282 = vunpack.c.h.b16 %v175
      %v283 = vunpack.c.l.b16 %v176
      %v284 = vunpack.c.h.b16 %v176
      %v285 = vunpack.c.l.b16 %v177
      %v286 = vunpack.c.h.b16 %v177
      %v287 = vunpack.c.l.b16 %v178
      %v288 = vunpack.c.h.b16 %v178
      %v289 = vunpack.c.l.b16 %v179
      %v290 = vunpack.c.h.b16 %v179
      %v291 = vunpack.c.l.b16 %v180
      %v292 = vunpack.c.h.b16 %v180
      %v293 = vunpack.c.l.b16 %v181
      %v294 = vunpack.c.h.b16 %v181
      %v295 = vunpack.c.l.b16 %v182
      %v296 = vunpack.c.h.b16 %v182
      %v297 = vunpack.c.l.b16 %v183
      %v298 = vunpack.c.h.b16 %v183
      %v299 = vunpack.c.l.b16 %v184
      %v300 = vunpack.c.h.b16 %v184
      %v301 = vunpack.c.l.b16 %v185
      %v302 = vunpack.c.h.b16 %v185
      %v303 = vunpack.c.l.b16 %v186
      %v304 = vunpack.c.h.b16 %v186
      %v305 = vunpack.c.l.b16 %v187
      %v306 = vunpack.c.h.b16 %v187
      %v307 = vunpack.c.l.b16 %v188
      %v308 = vunpack.c.h.b16 %v188
      %v309 = vunpack.c.l.b16 %v189
      %v310 = vunpack.c.h.b16 %v189
      %v311 = vunpack.c.l.b16 %v190
      %v312 = vunpack.c.h.b16 %v190
      %v313 = vunpack.c.l.b16 %v191
      %v314 = vunpack.c.h.b16 %v191
      %v315 = vunpack.c.l.b16 %v192
      %v316 = vunpack.c.h.b16 %v192
      %v317 = vunpack.c.l.b16 %v193
      %v318 = vunpack.c.h.b16 %v193
      %v319 = vunpack.c.l.b16 %v194
      %v320 = vunpack.c.h.b16 %v194
      %v321 = vunpack.c.l.b16 %v195
      %v322 = vunpack.c.h.b16 %v195
      %v323 = vunpack.c.l.b16 %v196
      %v324 = vunpack.c.h.b16 %v196
      %v325 = vunpack.c.l.b16 %v197
      %v326 = vunpack.c.h.b16 %v197
      %v327 = vunpack.c.l.b16 %v198
      %v328 = vunpack.c.h.b16 %v198
      %v329 = vunpack.c.l.b16 %v199
      %v330 = vunpack.c.h.b16 %v199
      %v331 = vunpack.c.l.b16 %v200
      %v332 = vunpack.c.h.b16 %v200
      %v333 = vunpack.c.l.b16 %v201
      %v334 = vunpack.c.h.b16 %v201
      %v335 = vunpack.c.l.b16 %v202
      %v336 = vunpack.c.h.b16 %v202
      %v337 = vunpack.c.l.b16 %v203
      %v338 = vunpack.c.h.b16 %v203
      %v339 = vpack.c.b16 %v277, %v275
      %v340 = vpack.c.b16 %v278, %v276
      %v341 = vpack.c.b16 %v281, %v279
      %v342 = vpack.c.b16 %v282, %v280
      %v343 = vpack.c.b16 %v285, %v283
      %v344 = vpack.c.b16 %v286, %v284
      %v345 = vpack.c.b16 %v289, %v287
      %v346 = vpack.c.b16 %v290, %v288
      %v347 = vpack.c.b16 %v293, %v291
      %v348 = vpack.c.b16 %v294, %v292
      %v349 = vpack.c.b16 %v297, %v295
      %v350 = vpack.c.b16 %v298, %v296
      %v351 = vpack.c.b16 %v301, %v299
      %v352 = vpack.c.b16 %v302, %v300
      %v353 = vpack.c.b16 %v305, %v303
      %v354 = vpack.c.b16 %v306, %v304
      %v355 = vpack.c.b16 %v309, %v307
      %v356 = vpack.c.b16 %v310, %v308
      %v357 = vpack.c.b16 %v313, %v311
      %v358 = vpack.c.b16 %v314, %v312
      %v359 = vpack.c.b16 %v317, %v315
      %v360 = vpack.c.b16 %v318, %v316
      %v361 = vpack.c.b16 %v321, %v319
      %v362 = vpack.c.b16 %v322, %v320
      %v363 = vpack.c.b16 %v325, %v323
      %v364 = vpack.c.b16 %v326, %v324
      %v365 = vpack.c.b16 %v329, %v327
      %v366 = vpack.c.b16 %v330, %v328
      %v367 = vpack.c.b16 %v333, %v331
      %v368 = vpack.c.b16 %v334, %v332
      %v369 = vpack.c.b16 %v337, %v335
      %v370 = vpack.c.b16 %v338, %v336
      %v435 = vunpack.c.l.b16 %v204
      %v436 = vunpack.c.l.b16 %v205
      %v437 = vunpack.c.l.b16 %v206
      %v438 = vunpack.c.l.b16 %v207
      %v439 = vunpack.c.l.b16 %v208
      %v440 = vunpack.c.l.b16 %v209
      %v441 = vunpack.c.l.b16 %v210
      %v442 = vunpack.c.l.b16 %v211
      %v443 = vunpack.c.l.b16 %v212
      %v444 = vunpack.c.l.b16 %v213
      %v445 = vunpack.c.l.b16 %v214
      %v446 = vunpack.c.l.b16 %v215
      %v447 = vunpack.c.l.b16 %v216
      %v448 = vunpack.c.l.b16 %v217
      %v449 = vunpack.c.l.b16 %v218
      %v450 = vunpack.c.l.b16 %v219
      %v451 = vunpack.c.l.b16 %v220
      %v452 = vunpack.c.l.b16 %v221
      %v453 = vunpack.c.l.b16 %v222
      %v454 = vunpack.c.l.b16 %v223
      %v455 = vunpack.c.l.b16 %v224
      %v456 = vunpack.c.l.b16 %v225
      %v457 = vunpack.c.l.b16 %v226
      %v458 = vunpack.c.l.b16 %v227
      %v459 = vunpack.c.l.b16 %v228
      %v460 = vunpack.c.l.b16 %v229
      %v461 = vunpack.c.l.b16 %v230
      %v462 = vunpack.c.l.b16 %v231
      %v463 = vunpack.c.l.b16 %v232
      %v464 = vunpack.c.l.b16 %v233
      %v465 = vunpack.c.l.b16 %v234
      %v466 = vunpack.c.l.b16 %v235
      %v467 = vpack.c.b16 %v436, %v435
      %v468 = vpack.c.b16 %v438, %v437
      %v469 = vpack.c.b16 %v440, %v439
      %v470 = vpack.c.b16 %v442, %v441
      %v471 = vpack.c.b16 %v444, %v443
      %v472 = vpack.c.b16 %v446, %v445
      %v473 = vpack.c.b16 %v448, %v447
      %v474 = vpack.c.b16 %v450, %v449
      %v475 = vpack.c.b16 %v452, %v451
      %v476 = vpack.c.b16 %v454, %v453
      %v477 = vpack.c.b16 %v456, %v455
      %v478 = vpack.c.b16 %v458, %v457
      %v479 = vpack.c.b16 %v460, %v459
      %v480 = vpack.c.b16 %v462, %v461
      %v481 = vpack.c.b16 %v464, %v463
      %v482 = vpack.c.b16 %v466, %v465
      %499 = vmatprep.subr.bf16.mxu0 0
      %500 = vmatpush1.bf16.msra.mxu0 %v467
      %501 = vmatprep.subr.bf16.mxu0 0
      %502 = vmatpush1.bf16.msra.mxu0 %v468
      %503 = vmatprep.subr.bf16.mxu0 0
      %504 = vmatpush1.bf16.msra.mxu0 %v469
      %505 = vmatprep.subr.bf16.mxu0 0
      %506 = vmatpush1.bf16.msra.mxu0 %v470
      %507 = vmatprep.subr.bf16.mxu0 0
      %508 = vmatpush1.bf16.msra.mxu0 %v471
      %509 = vmatprep.subr.bf16.mxu0 0
      %510 = vmatpush1.bf16.msra.mxu0 %v472
      %511 = vmatprep.subr.bf16.mxu0 0
      %512 = vmatpush1.bf16.msra.mxu0 %v473
      %513 = vmatprep.subr.bf16.mxu0 0
      %514 = vmatpush1.bf16.msra.mxu0 %v474
      %515 = vmatprep.subr.bf16.mxu0 0
      %516 = vmatpush1.bf16.msra.mxu0 %v475
      %517 = vmatprep.subr.bf16.mxu0 0
      %518 = vmatpush1.bf16.msra.mxu0 %v476
      %519 = vmatprep.subr.bf16.mxu0 0
      %520 = vmatpush1.bf16.msra.mxu0 %v477
      %521 = vmatprep.subr.bf16.mxu0 0
      %522 = vmatpush1.bf16.msra.mxu0 %v478
      %523 = vmatprep.subr.bf16.mxu0 0
      %524 = vmatpush1.bf16.msra.mxu0 %v479
      %525 = vmatprep.subr.bf16.mxu0 0
      %526 = vmatpush1.bf16.msra.mxu0 %v480
      %527 = vmatprep.subr.bf16.mxu0 0
      %528 = vmatpush1.bf16.msra.mxu0 %v481
      %529 = vmatprep.subr.bf16.mxu0 0
      %530 = vmatpush1.bf16.msra.mxu0 %v482
      %531 = vmatprep.mubr.bf16.mxu0 %v340
      %532 = vmatmul.mubr.bf16.gmra.mrb[0].mxu0 %v339
      %v533 = vpop.f32.mrb[0].mxu0
      %v534 = vadd.f32 %v241, %v533
      %v535 = vpop.f32.mrb[0].mxu0
      %v536 = vpop.f32.mrb[0].mxu0
      %v537 = vadd.f32 %v241, %v536
      %v538 = vpop.f32.mrb[0].mxu0
      %539 = vmatprep.mubr.bf16.mxu0 %v342
      %540 = vmatmul.mubr.bf16.gmra.mrb[0].mxu0 %v341
      %v541 = vpop.f32.mrb[0].mxu0
      %v542 = vadd.f32 %v241, %v541
      %v543 = vpop.f32.mrb[0].mxu0
      %v544 = vpop.f32.mrb[0].mxu0
      %v545 = vadd.f32 %v241, %v544
      %v546 = vpop.f32.mrb[0].mxu0
      %547 = vmatprep.mubr.bf16.mxu0 %v344
      %548 = vmatmul.mubr.bf16.gmra.mrb[0].mxu0 %v343
      %v549 = vpop.f32.mrb[0].mxu0
      %v550 = vadd.f32 %v241, %v549
      %v551 = vpop.f32.mrb[0].mxu0
      %v552 = vpop.f32.mrb[0].mxu0
      %v553 = vadd.f32 %v241, %v552
      %v554 = vpop.f32.mrb[0].mxu0
      %555 = vmatprep.mubr.bf16.mxu0 %v346
      %556 = vmatmul.mubr.bf16.gmra.mrb[0].mxu0 %v345
      %v557 = vpop.f32.mrb[0].mxu0
      %v558 = vadd.f32 %v241, %v557
      %v559 = vpop.f32.mrb[0].mxu0
      %v560 = vpop.f32.mrb[0].mxu0
      %v561 = vadd.f32 %v241, %v560
      %v562 = vpop.f32.mrb[0].mxu0
      %563 = vmatprep.mubr.bf16.mxu0 %v348
      %564 = vmatmul.mubr.bf16.gmra.mrb[0].mxu0 %v347
      %v565 = vpop.f32.mrb[0].mxu0
      %v566 = vadd.f32 %v241, %v565
      %v567 = vpop.f32.mrb[0].mxu0
      %v568 = vpop.f32.mrb[0].mxu0
      %v569 = vadd.f32 %v241, %v568
      %v570 = vpop.f32.mrb[0].mxu0
      %571 = vmatprep.mubr.bf16.mxu0 %v350
      %572 = vmatmul.mubr.bf16.gmra.mrb[0].mxu0 %v349
      %v573 = vpop.f32.mrb[0].mxu0
      %v574 = vadd.f32 %v241, %v573
      %v575 = vpop.f32.mrb[0].mxu0
      %v576 = vpop.f32.mrb[0].mxu0
      %v577 = vadd.f32 %v241, %v576
      %v578 = vpop.f32.mrb[0].mxu0
      %579 = vmatprep.mubr.bf16.mxu0 %v352
      %580 = vmatmul.mubr.bf16.gmra.mrb[0].mxu0 %v351
      %v581 = vpop.f32.mrb[0].mxu0
      %v582 = vadd.f32 %v241, %v581
      %v583 = vpop.f32.mrb[0].mxu0
      %v584 = vpop.f32.mrb[0].mxu0
      %v585 = vadd.f32 %v241, %v584
      %v586 = vpop.f32.mrb[0].mxu0
      %587 = vmatprep.mubr.bf16.mxu0 %v354
      %588 = vmatmul.mubr.bf16.gmra.mrb[0].mxu0 %v353
      %v589 = vpop.f32.mrb[0].mxu0
      %v590 = vadd.f32 %v241, %v589
      %v591 = vpop.f32.mrb[0].mxu0
      %v592 = vpop.f32.mrb[0].mxu0
      %v593 = vadd.f32 %v241, %v592
      %v594 = vpop.f32.mrb[0].mxu0
      %595 = vmatprep.mubr.bf16.mxu0 %v356
      %596 = vmatmul.mubr.bf16.gmra.mrb[0].mxu0 %v355
      %v597 = vpop.f32.mrb[0].mxu0
      %v598 = vadd.f32 %v241, %v597
      %v599 = vpop.f32.mrb[0].mxu0
      %v600 = vpop.f32.mrb[0].mxu0
      %v601 = vadd.f32 %v241, %v600
      %v602 = vpop.f32.mrb[0].mxu0
      %603 = vmatprep.mubr.bf16.mxu0 %v358
      %604 = vmatmul.mubr.bf16.gmra.mrb[0].mxu0 %v357
      %v605 = vpop.f32.mrb[0].mxu0
      %v606 = vadd.f32 %v241, %v605
      %v607 = vpop.f32.mrb[0].mxu0
      %v608 = vpop.f32.mrb[0].mxu0
      %v609 = vadd.f32 %v241, %v608
      %v610 = vpop.f32.mrb[0].mxu0
      %611 = vmatprep.mubr.bf16.mxu0 %v360
      %612 = vmatmul.mubr.bf16.gmra.mrb[0].mxu0 %v359
      %v613 = vpop.f32.mrb[0].mxu0
      %v614 = vadd.f32 %v241, %v613
      %v615 = vpop.f32.mrb[0].mxu0
      %v616 = vpop.f32.mrb[0].mxu0
      %v617 = vadd.f32 %v241, %v616
      %v618 = vpop.f32.mrb[0].mxu0
      %619 = vmatprep.mubr.bf16.mxu0 %v362
      %620 = vmatmul.mubr.bf16.gmra.mrb[0].mxu0 %v361
      %v621 = vpop.f32.mrb[0].mxu0
      %v622 = vadd.f32 %v241, %v621
      %v623 = vpop.f32.mrb[0].mxu0
      %v624 = vpop.f32.mrb[0].mxu0
      %v625 = vadd.f32 %v241, %v624
      %v626 = vpop.f32.mrb[0].mxu0
      %627 = vmatprep.mubr.bf16.mxu0 %v364
      %628 = vmatmul.mubr.bf16.gmra.mrb[0].mxu0 %v363
      %v629 = vpop.f32.mrb[0].mxu0
      %v630 = vadd.f32 %v241, %v629
      %v631 = vpop.f32.mrb[0].mxu0
      %v632 = vpop.f32.mrb[0].mxu0
      %v633 = vadd.f32 %v241, %v632
      %v634 = vpop.f32.mrb[0].mxu0
      %635 = vmatprep.mubr.bf16.mxu0 %v366
      %636 = vmatmul.mubr.bf16.gmra.mrb[0].mxu0 %v365
      %v637 = vpop.f32.mrb[0].mxu0
      %v638 = vadd.f32 %v241, %v637
      %v639 = vpop.f32.mrb[0].mxu0
      %v640 = vpop.f32.mrb[0].mxu0
      %v641 = vadd.f32 %v241, %v640
      %v642 = vpop.f32.mrb[0].mxu0
      %643 = vmatprep.mubr.bf16.mxu0 %v368
      %644 = vmatmul.mubr.bf16.gmra.mrb[0].mxu0 %v367
      %v645 = vpop.f32.mrb[0].mxu0
      %v646 = vadd.f32 %v241, %v645
      %v647 = vpop.f32.mrb[0].mxu0
      %v648 = vpop.f32.mrb[0].mxu0
      %v649 = vadd.f32 %v241, %v648
      %v650 = vpop.f32.mrb[0].mxu0
      %651 = vmatprep.mubr.bf16.mxu0 %v370
      %652 = vmatmul.mubr.bf16.gmra.mrb[0].mxu0 %v369
      %v653 = vpop.f32.mrb[0].mxu0
      %v654 = vadd.f32 %v241, %v653
      %v655 = vpop.f32.mrb[0].mxu0
      %v656 = vpop.f32.mrb[0].mxu0
      %v657 = vadd.f32 %v241, %v656
      %v658 = vpop.f32.mrb[0].mxu0
      %659 = vdwg.mxu0
      %v660 = vadd.f32 %v534, %v537
      %v661 = vadd.f32 %v660, %v542
      %v662 = vadd.f32 %v661, %v545
      %v663 = vadd.f32 %v662, %v550
      %v664 = vadd.f32 %v663, %v553
      %v665 = vadd.f32 %v664, %v558
      %v666 = vadd.f32 %v665, %v561
      %v667 = vadd.f32 %v666, %v566
      %v668 = vadd.f32 %v667, %v569
      %v669 = vadd.f32 %v668, %v574
      %v670 = vadd.f32 %v669, %v577
      %v671 = vadd.f32 %v670, %v582
      %v672 = vadd.f32 %v671, %v585
      %v673 = vadd.f32 %v672, %v590
      %v674 = vadd.f32 %v673, %v593
      %v675 = vadd.f32 %v674, %v598
      %v676 = vadd.f32 %v675, %v601
      %v677 = vadd.f32 %v676, %v606
      %v678 = vadd.f32 %v677, %v609
      %v679 = vadd.f32 %v678, %v614
      %v680 = vadd.f32 %v679, %v617
      %v681 = vadd.f32 %v680, %v622
      %v682 = vadd.f32 %v681, %v625
      %v683 = vadd.f32 %v682, %v630
      %v684 = vadd.f32 %v683, %v633
      %v685 = vadd.f32 %v684, %v638
      %v686 = vadd.f32 %v685, %v641
      %v687 = vadd.f32 %v686, %v646
      %v688 = vadd.f32 %v687, %v649
      %v689 = vadd.f32 %v688, %v654
      %v690 = vadd.f32 %v689, %v657
      %v691 = vrot.slane %v690, 4
      %v692 = vadd.f32 %v690, %v691
      %v693 = vrot.slane %v692, 2
      %v694 = vadd.f32 %v692, %v693
      %v695 = vrot.slane %v694, 1
      %v696 = vadd.f32 %v694, %v695
      %v697 = vmul.f32 %v696, 0.00390625
      %v698 = vmul.f32 %v534, %v534
      %v699 = vmul.f32 %v537, %v537
      %v700 = vmul.f32 %v542, %v542
      %v701 = vmul.f32 %v545, %v545
      %v702 = vmul.f32 %v550, %v550
      %v703 = vmul.f32 %v553, %v553
      %v704 = vmul.f32 %v558, %v558
      %v705 = vmul.f32 %v561, %v561
      %v706 = vmul.f32 %v566, %v566
      %v707 = vmul.f32 %v569, %v569
      %v708 = vmul.f32 %v574, %v574
      %v709 = vmul.f32 %v577, %v577
      %v710 = vmul.f32 %v582, %v582
      %v711 = vmul.f32 %v585, %v585
      %v712 = vmul.f32 %v590, %v590
      %v713 = vmul.f32 %v593, %v593
      %v714 = vmul.f32 %v598, %v598
      %v715 = vmul.f32 %v601, %v601
      %v716 = vmul.f32 %v606, %v606
      %v717 = vmul.f32 %v609, %v609
      %v718 = vmul.f32 %v614, %v614
      %v719 = vmul.f32 %v617, %v617
      %v720 = vmul.f32 %v622, %v622
      %v721 = vmul.f32 %v625, %v625
      %v722 = vmul.f32 %v630, %v630
      %v723 = vmul.f32 %v633, %v633
      %v724 = vmul.f32 %v638, %v638
      %v725 = vmul.f32 %v641, %v641
      %v726 = vmul.f32 %v646, %v646
      %v727 = vmul.f32 %v649, %v649
      %v728 = vmul.f32 %v654, %v654
      %v729 = vmul.f32 %v657, %v657
      %v730 = vadd.f32 %v698, %v699
      %v731 = vadd.f32 %v730, %v700
      %v732 = vadd.f32 %v731, %v701
      %v733 = vadd.f32 %v732, %v702
      %v734 = vadd.f32 %v733, %v703
      %v735 = vadd.f32 %v734, %v704
      %v736 = vadd.f32 %v735, %v705
      %v737 = vadd.f32 %v736, %v706
      %v738 = vadd.f32 %v737, %v707
      %v739 = vadd.f32 %v738, %v708
      %v740 = vadd.f32 %v739, %v709
      %v741 = vadd.f32 %v740, %v710
      %v742 = vadd.f32 %v741, %v711
      %v743 = vadd.f32 %v742, %v712
      %v744 = vadd.f32 %v743, %v713
      %v745 = vadd.f32 %v744, %v714
      %v746 = vadd.f32 %v745, %v715
      %v747 = vadd.f32 %v746, %v716
      %v748 = vadd.f32 %v747, %v717
      %v749 = vadd.f32 %v748, %v718
      %v750 = vadd.f32 %v749, %v719
      %v751 = vadd.f32 %v750, %v720
      %v752 = vadd.f32 %v751, %v721
      %v753 = vadd.f32 %v752, %v722
      %v754 = vadd.f32 %v753, %v723
      %v755 = vadd.f32 %v754, %v724
      %v756 = vadd.f32 %v755, %v725
      %v757 = vadd.f32 %v756, %v726
      %v758 = vadd.f32 %v757, %v727
      %v759 = vadd.f32 %v758, %v728
      %v760 = vadd.f32 %v759, %v729
      %v761 = vrot.slane %v760, 4
      %v762 = vadd.f32 %v760, %v761
      %v763 = vrot.slane %v762, 2
      %v764 = vadd.f32 %v762, %v763
      %v765 = vrot.slane %v764, 1
      %v766 = vadd.f32 %v764, %v765
      %v767 = vmul.f32 %v766, 0.00390625
      %v768 = vmul.f32 %v697, %v697
      %v769 = vsub.f32 %v767, %v768
      %v770 = vmax.f32 %v769, 0.0
      %v771 = vsub.f32 %v534, %v697
      %v772 = vsub.f32 %v537, %v697
      %v773 = vsub.f32 %v542, %v697
      %v774 = vsub.f32 %v545, %v697
      %v775 = vsub.f32 %v550, %v697
      %v776 = vsub.f32 %v553, %v697
      %v777 = vsub.f32 %v558, %v697
      %v778 = vsub.f32 %v561, %v697
      %v779 = vsub.f32 %v566, %v697
      %v780 = vsub.f32 %v569, %v697
      %v781 = vsub.f32 %v574, %v697
      %v782 = vsub.f32 %v577, %v697
      %v783 = vsub.f32 %v582, %v697
      %v784 = vsub.f32 %v585, %v697
      %v785 = vsub.f32 %v590, %v697
      %v786 = vsub.f32 %v593, %v697
      %v787 = vsub.f32 %v598, %v697
      %v788 = vsub.f32 %v601, %v697
      %v789 = vsub.f32 %v606, %v697
      %v790 = vsub.f32 %v609, %v697
      %v791 = vsub.f32 %v614, %v697
      %v792 = vsub.f32 %v617, %v697
      %v793 = vsub.f32 %v622, %v697
      %v794 = vsub.f32 %v625, %v697
      %v795 = vsub.f32 %v630, %v697
      %v796 = vsub.f32 %v633, %v697
      %v797 = vsub.f32 %v638, %v697
      %v798 = vsub.f32 %v641, %v697
      %v799 = vsub.f32 %v646, %v697
      %v800 = vsub.f32 %v649, %v697
      %v801 = vsub.f32 %v654, %v697
      %v802 = vsub.f32 %v657, %v697
      %v803 = vadd.f32 %v770, 1e-05
      %v804 = vrsqrt.pop %v803
      %v805 = vmul.f32 %v771, %v804
      %v806 = vmul.f32 %v772, %v804
      %v807 = vmul.f32 %v773, %v804
      %v808 = vmul.f32 %v774, %v804
      %v809 = vmul.f32 %v775, %v804
      %v810 = vmul.f32 %v776, %v804
      %v811 = vmul.f32 %v777, %v804
      %v812 = vmul.f32 %v778, %v804
      %v813 = vmul.f32 %v779, %v804
      %v814 = vmul.f32 %v780, %v804
      %v815 = vmul.f32 %v781, %v804
      %v816 = vmul.f32 %v782, %v804
      %v817 = vmul.f32 %v783, %v804
      %v818 = vmul.f32 %v784, %v804
      %v819 = vmul.f32 %v785, %v804
      %v820 = vmul.f32 %v786, %v804
      %v821 = vmul.f32 %v787, %v804
      %v822 = vmul.f32 %v788, %v804
      %v823 = vmul.f32 %v789, %v804
      %v824 = vmul.f32 %v790, %v804
      %v825 = vmul.f32 %v791, %v804
      %v826 = vmul.f32 %v792, %v804
      %v827 = vmul.f32 %v793, %v804
      %v828 = vmul.f32 %v794, %v804
      %v829 = vmul.f32 %v795, %v804
      %v830 = vmul.f32 %v796, %v804
      %v831 = vmul.f32 %v797, %v804
      %v832 = vmul.f32 %v798, %v804
      %v833 = vmul.f32 %v799, %v804
      %v834 = vmul.f32 %v800, %v804
      %v835 = vmul.f32 %v801, %v804
      %v836 = vmul.f32 %v802, %v804
      %v837 = vmax.f32 %v805, 0.0
      %v838 = vmax.f32 %v806, 0.0
      %v839 = vmax.f32 %v807, 0.0
      %v840 = vmax.f32 %v808, 0.0
      %v841 = vmax.f32 %v809, 0.0
      %v842 = vmax.f32 %v810, 0.0
      %v843 = vmax.f32 %v811, 0.0
      %v844 = vmax.f32 %v812, 0.0
      %v845 = vmax.f32 %v813, 0.0
      %v846 = vmax.f32 %v814, 0.0
      %v847 = vmax.f32 %v815, 0.0
      %v848 = vmax.f32 %v816, 0.0
      %v849 = vmax.f32 %v817, 0.0
      %v850 = vmax.f32 %v818, 0.0
      %v851 = vmax.f32 %v819, 0.0
      %v852 = vmax.f32 %v820, 0.0
      %v853 = vmax.f32 %v821, 0.0
      %v854 = vmax.f32 %v822, 0.0
      %v855 = vmax.f32 %v823, 0.0
      %v856 = vmax.f32 %v824, 0.0
      %v857 = vmax.f32 %v825, 0.0
      %v858 = vmax.f32 %v826, 0.0
      %v859 = vmax.f32 %v827, 0.0
      %v860 = vmax.f32 %v828, 0.0
      %v861 = vmax.f32 %v829, 0.0
      %v862 = vmax.f32 %v830, 0.0
      %v863 = vmax.f32 %v831, 0.0
      %v864 = vmax.f32 %v832, 0.0
      %v865 = vmax.f32 %v833, 0.0
      %v866 = vmax.f32 %v834, 0.0
      %v867 = vmax.f32 %v835, 0.0
      %v868 = vmax.f32 %v836, 0.0
      %869 = vst [vmem:[%s170] sm:$0xff] %v837
      %870 = vst [vmem:[%s170 + $0x8] sm:$0xff] %v838
      %871 = vst [vmem:[%s170 + $0x10] sm:$0xff] %v839
      %872 = vst [vmem:[%s170 + $0x18] sm:$0xff] %v840
      %873 = vst [vmem:[%s170 + $0x20] sm:$0xff] %v841
      %874 = vst [vmem:[%s170 + $0x28] sm:$0xff] %v842
      %875 = vst [vmem:[%s170 + $0x30] sm:$0xff] %v843
      %876 = vst [vmem:[%s170 + $0x38] sm:$0xff] %v844
      %877 = vst [vmem:[%s170 + $0x40] sm:$0xff] %v845
      %878 = vst [vmem:[%s170 + $0x48] sm:$0xff] %v846
      %879 = vst [vmem:[%s170 + $0x50] sm:$0xff] %v847
      %880 = vst [vmem:[%s170 + $0x58] sm:$0xff] %v848
      %881 = vst [vmem:[%s170 + $0x60] sm:$0xff] %v849
      %882 = vst [vmem:[%s170 + $0x68] sm:$0xff] %v850
      %883 = vst [vmem:[%s170 + $0x70] sm:$0xff] %v851
      %884 = vst [vmem:[%s170 + $0x78] sm:$0xff] %v852
      %885 = vst [vmem:[%s170 + $0x80] sm:$0xff] %v853
      %886 = vst [vmem:[%s170 + $0x88] sm:$0xff] %v854
      %887 = vst [vmem:[%s170 + $0x90] sm:$0xff] %v855
      %888 = vst [vmem:[%s170 + $0x98] sm:$0xff] %v856
      %889 = vst [vmem:[%s170 + $0xa0] sm:$0xff] %v857
      %890 = vst [vmem:[%s170 + $0xa8] sm:$0xff] %v858
      %891 = vst [vmem:[%s170 + $0xb0] sm:$0xff] %v859
      %892 = vst [vmem:[%s170 + $0xb8] sm:$0xff] %v860
      %893 = vst [vmem:[%s170 + $0xc0] sm:$0xff] %v861
      %894 = vst [vmem:[%s170 + $0xc8] sm:$0xff] %v862
      %895 = vst [vmem:[%s170 + $0xd0] sm:$0xff] %v863
      %896 = vst [vmem:[%s170 + $0xd8] sm:$0xff] %v864
      %897 = vst [vmem:[%s170 + $0xe0] sm:$0xff] %v865
      %898 = vst [vmem:[%s170 + $0xe8] sm:$0xff] %v866
      %899 = vst [vmem:[%s170 + $0xf0] sm:$0xff] %v867
      %900 = vst [vmem:[%s170 + $0xf8] sm:$0xff] %v868
      %p901 = scmp.lt.s32.totalorder %s14, 1
      %s902 = scalar_select %p901, %s14, 1
      %s903 = smul.addr %s902, 32
      %s904 = smul.addr %s903, 8
      %s905 = scalar_lea.vmem %s3, %s904
      // Predicated region
      $region33: #{generator_forward.10} parent=31 // pred_check
        %p906 = pneg %p100
      $region34: #{generator_forward.10} parent=31 // pred_check_branch
        %908 = sbr.rel (%p906) target = $region36
      $region35: #{generator_forward.10} parent=31 // pred_region
        _
      $region36: #{generator_forward.10} parent=31 // pred_fallthru
        _
    $region32: #{generator_forward.10} parent=5 // pred_fallthru
      _
    %p909 = scmp.le.s32.totalorder 2, %s9
    // Predicated region
    $region37: #{generator_forward.10} parent=5 // pred_check
      %p910 = pneg %p909
    $region38: #{generator_forward.10} parent=5 // pred_check_branch
      %912 = sbr.rel (%p910) target = $region40
    $region39: #{generator_forward.10} parent=5 // pred_region
      %s913 = ssub.s32 %s9, 2
      // Predicated region
      $region41: #{generator_forward.10} parent=39 // pred_check
        %p914 = pneg %p106
      $region42: #{generator_forward.10} parent=39 // pred_check_branch
        %916 = sbr.rel (%p914) target = $region44
      $region43: #{generator_forward.10} parent=39 // pred_region
        %p917 = scmp.lt.s32.totalorder %s15, 1
        %s918 = scalar_select %p917, %s15, 1
        %s919 = smul.addr %s918, 32
        %s920 = smul.addr %s919, 8
        %s921 = scalar_lea.vmem %s3, %s920
      $region44: #{generator_forward.10} parent=39 // pred_fallthru
        _
    $region40: #{generator_forward.10} parent=5 // pred_fallthru
      _
  $region6: #{generator_forward.10} parent=0 // loop_footer
    %s13 = sadd.s32 1, %s9
  $region7: #{generator_forward.10} parent=0 // loop_footer_branch
    %8 = sbr.rel target = $region3
  $region8: #{generator_forward.10} parent=0 // loop_exit
    _

// kernel: generator_forward.11
$region0: #{generator_forward.11}
  #allocation0 [shape = 'u32[]', space=smem, size = 0x4, offset = 0x4, fixed_abs, tag = 'smem constant byte address 0x4 - core index']
  #allocation1 [shape = 'u32[144,128]{1,0:T(1,128)}', space=vmem, size = 0x12000, scoped, tag = 'internal scratch']
  %s0 = inlined_call_operand.vmem [shape: bf16[2,64,128], index: 0, kind: input, shape index: {}]
  %s1 = inlined_call_operand.vmem [shape: bf16[128,128], index: 1, kind: input, shape index: {}]
  %s2 = inlined_call_operand.vmem [shape: f32[1,128], index: 2, kind: input, shape index: {}]
  %s3 = inlined_call_operand.vmem [shape: f32[2,64,128], index: 3, kind: output, shape index: {}]
  %s4 = sld [smem:[#allocation0]]
  $region45: #{generator_forward.11} parent=0
    _
  %s6 = ssub.s32 1, %s4
  %s7 = scalar_select 0, %s6, %s4
  loop: start=0, step=1, limit=4
  $region2: #{generator_forward.11} parent=0 // loop_pre_header
    _
  $region3: #{generator_forward.11} parent=0 // loop_header
    %s9 = sphi 0, %s13
    %p10 = scmp.ge.s32.totalorder %s9, 4
    %s19 = sphi 0, %s21
    %s22 = sphi 0, %s19
    %s23 = sphi 0, %s22
    %s39 = sphi 0, %s23
    %s43 = sphi 0, %s43
    %s45 = sphi 0, %s43
    %s46 = sphi 0, %s45
    %s60 = sphi 0, %s46
    %s64 = sphi 0, %s64
    %s66 = sphi 0, %s64
    %s67 = sphi 0, %s66
    %s81 = sphi 0, %s67
    %s87 = sphi 0, %s89
    %s90 = sphi 0, %s87
    %s91 = sphi 0, %s90
    %s107 = sphi 0, %s91
  $region4: #{generator_forward.11} parent=0 // loop_header_branch
    %12 = sbr.rel (%p10) target = $region8
  $region5: #{generator_forward.11} parent=0 // loop_body
    %s14 = ssub.s32 %s9, 1
    %s15 = ssub.s32 %s9, 2
    %s16 = sadd.s32 %s9, 1
    %s17 = ssub.s32 %s9, %s16
    %p18 = scmp.eq.s32.totalorder %s17, 0
    %s20 = sadd.s32 %s19, 1
    %s21 = scalar_select %p18, %s19, %s20
    %p24 = pneg %p18
    %p25 = scmp.eq.s32.totalorder %s9, 1
    %p26 = por %p24, %p25
    %p27 = scmp.ne.s32.totalorder %s19, %s22
    %p28 = scmp.eq.s32.totalorder %s9, 0
    %p29 = por %p27, %p28
    %p30 = scmp.ne.s32.totalorder %s19, %s22
    %p31 = scmp.eq.s32.totalorder %s14, 1
    %p32 = por %p30, %p31
    %p33 = scmp.ne.s32.totalorder %s22, %s23
    %p34 = scmp.eq.s32.totalorder %s14, 0
    %p35 = por %p33, %p34
    %p36 = scmp.ne.s32.totalorder %s22, %s23
    %p37 = scmp.eq.s32.totalorder %s15, 1
    %p38 = por %p36, %p37
    %p40 = scmp.ne.s32.totalorder %s23, %s39
    %p41 = scmp.eq.s32.totalorder %s15, 0
    %p42 = por %p40, %p41
    %s44 = sadd.s32 %s43, 1
    %p47 = scmp.eq.s32.totalorder %s9, 1
    %p48 = scmp.ne.s32.totalorder %s43, %s45
    %p49 = scmp.eq.s32.totalorder %s9, 0
    %p50 = por %p48, %p49
    %p51 = scmp.ne.s32.totalorder %s43, %s45
    %p52 = scmp.eq.s32.totalorder %s14, 1
    %p53 = por %p51, %p52
    %p54 = scmp.ne.s32.totalorder %s45, %s46
    %p55 = scmp.eq.s32.totalorder %s14, 0
    %p56 = por %p54, %p55
    %p57 = scmp.ne.s32.totalorder %s45, %s46
    %p58 = scmp.eq.s32.totalorder %s15, 1
    %p59 = por %p57, %p58
    %p61 = scmp.ne.s32.totalorder %s46, %s60
    %p62 = scmp.eq.s32.totalorder %s15, 0
    %p63 = por %p61, %p62
    %s65 = sadd.s32 %s64, 1
    %p68 = scmp.eq.s32.totalorder %s9, 1
    %p69 = scmp.ne.s32.totalorder %s64, %s66
    %p70 = scmp.eq.s32.totalorder %s9, 0
    %p71 = por %p69, %p70
    %p72 = scmp.ne.s32.totalorder %s64, %s66
    %p73 = scmp.eq.s32.totalorder %s14, 1
    %p74 = por %p72, %p73
    %p75 = scmp.ne.s32.totalorder %s66, %s67
    %p76 = scmp.eq.s32.totalorder %s14, 0
    %p77 = por %p75, %p76
    %p78 = scmp.ne.s32.totalorder %s66, %s67
    %p79 = scmp.eq.s32.totalorder %s15, 1
    %p80 = por %p78, %p79
    %p82 = scmp.ne.s32.totalorder %s67, %s81
    %p83 = scmp.eq.s32.totalorder %s15, 0
    %p84 = por %p82, %p83
    %s85 = ssub.s32 %s9, %s16
    %p86 = scmp.eq.s32.totalorder %s85, 0
    %s88 = sadd.s32 %s87, 1
    %s89 = scalar_select %p86, %s87, %s88
    %p92 = pneg %p86
    %p93 = scmp.eq.s32.totalorder %s9, 1
    %p94 = por %p92, %p93
    %p95 = scmp.ne.s32.totalorder %s87, %s90
    %p96 = scmp.eq.s32.totalorder %s9, 0
    %p97 = por %p95, %p96
    %p98 = scmp.ne.s32.totalorder %s87, %s90
    %p99 = scmp.eq.s32.totalorder %s14, 1
    %p100 = por %p98, %p99
    %p101 = scmp.ne.s32.totalorder %s90, %s91
    %p102 = scmp.eq.s32.totalorder %s14, 0
    %p103 = por %p101, %p102
    %p104 = scmp.ne.s32.totalorder %s90, %s91
    %p105 = scmp.eq.s32.totalorder %s15, 1
    %p106 = por %p104, %p105
    %p108 = scmp.ne.s32.totalorder %s91, %s107
    %p109 = scmp.eq.s32.totalorder %s15, 0
    %p110 = por %p108, %p109
    %p111 = scmp.le.s32.totalorder 1, %s9
    %p112 = scmp.lt.s32.totalorder %s9, 3
    %p113 = pnand %p111, %p112
    %p114 = pneg %p113
    // Predicated region
    $region9: #{generator_forward.11} parent=5 // pred_check
      _
    $region10: #{generator_forward.11} parent=5 // pred_check_branch
      %116 = sbr.rel (%p113) target = $region12
    $region11: #{generator_forward.11} parent=5 // pred_region
      %s117 = ssub.s32 %s9, 1
      // Predicated region
      $region13: #{generator_forward.11} parent=11 // pred_check
        %p118 = pneg %p56
      $region14: #{generator_forward.11} parent=11 // pred_check_branch
        %120 = sbr.rel (%p118) target = $region16
      $region15: #{generator_forward.11} parent=11 // pred_region
        _
      $region16: #{generator_forward.11} parent=11 // pred_fallthru
        _
      // Predicated region
      $region17: #{generator_forward.11} parent=11 // pred_check
        %p121 = pneg %p77
      $region18: #{generator_forward.11} parent=11 // pred_check_branch
        %123 = sbr.rel (%p121) target = $region20
      $region19: #{generator_forward.11} parent=11 // pred_region
        _
      $region20: #{generator_forward.11} parent=11 // pred_fallthru
        _
    $region12: #{generator_forward.11} parent=5 // pred_fallthru
      _
    %p124 = scmp.lt.s32.totalorder %s9, 2
    // Predicated region
    $region21: #{generator_forward.11} parent=5 // pred_check
      %p125 = pneg %p124
    $region22: #{generator_forward.11} parent=5 // pred_check_branch
      %127 = sbr.rel (%p125) target = $region24
    $region23: #{generator_forward.11} parent=5 // pred_region
      // Predicated region
      $region25: #{generator_forward.11} parent=23 // pred_check
        %p128 = pneg %p29
      $region26: #{generator_forward.11} parent=23 // pred_check_branch
        %130 = sbr.rel (%p128) target = $region28
      $region27: #{generator_forward.11} parent=23 // pred_region
        %p131 = scmp.lt.s32.totalorder %s9, 1
        %s132 = scalar_select %p131, %s9, 1
        %s133 = smul.addr %s132, 8
        %s134 = smul.addr %s133, 4
        %s135 = scalar_lea.vmem %s0, %s134
      $region28: #{generator_forward.11} parent=23 // pred_fallthru
        _
    $region24: #{generator_forward.11} parent=5 // pred_fallthru
      _
    %p136 = scmp.le.s32.totalorder 1, %s9
    %p137 = scmp.lt.s32.totalorder %s9, 3
    %p138 = pnand %p136, %p137
    %p139 = pneg %p138
    // Predicated region
    $region29: #{generator_forward.11} parent=5 // pred_check
      _
    $region30: #{generator_forward.11} parent=5 // pred_check_branch
      %141 = sbr.rel (%p138) target = $region32
    $region31: #{generator_forward.11} parent=5 // pred_region
      %s142 = ssub.s32 %s9, 1
      %p143 = scmp.lt.s32.totalorder %s14, 1
      %s144 = scalar_select %p143, %s14, 1
      %s145 = smul.addr %s144, 8
      %s146 = smul.addr %s145, 4
      %s147 = scalar_lea.vmem %s0, %s146
      %p148 = pneg %p35
      %p149 = pneg %p32
      %p150 = pneg %p56
      %p151 = pneg %p53
      %p152 = pneg %p77
      %p153 = pneg %p74
      %p154 = pneg %p103
      %p155 = pneg %p100
      %p156 = scmp.lt.s32.totalorder %s14, 1
      %s157 = scalar_select %p156, %s14, 1
      %s158 = smul.addr %s157, 8
      %s159 = smul.addr %s158, 8
      %s160 = scalar_lea.vmem %s3, %s159
      %p161 = scmp.lt.s32.totalorder %s14, 1
      %s162 = scalar_select %p161, %s14, 1
      %s163 = smul.addr %s162, 8
      %s164 = smul.addr %s163, 4
      %s165 = scalar_lea.vmem %s0, %s164
      %p166 = scmp.lt.s32.totalorder %s14, 1
      %s167 = scalar_select %p166, %s14, 1
      %s168 = smul.addr %s167, 8
      %s169 = smul.addr %s168, 8
      %s170 = scalar_lea.vmem %s3, %s169
      %v172 = vld [vmem:[%s165] sm:$0xf]
      %v173 = vld [vmem:[%s165 + $0x4] sm:$0xf]
      %v174 = vld [vmem:[%s165 + $0x8] sm:$0xf]
      %v175 = vld [vmem:[%s165 + $0xc] sm:$0xf]
      %v176 = vld [vmem:[%s165 + $0x10] sm:$0xf]
      %v177 = vld [vmem:[%s165 + $0x14] sm:$0xf]
      %v178 = vld [vmem:[%s165 + $0x18] sm:$0xf]
      %v179 = vld [vmem:[%s165 + $0x1c] sm:$0xf]
      %v180 = vld [vmem:[%s1] sm:$0xf]
      %v181 = vld [vmem:[%s1 + $0x4] sm:$0xf]
      %v182 = vld [vmem:[%s1 + $0x8] sm:$0xf]
      %v183 = vld [vmem:[%s1 + $0xc] sm:$0xf]
      %v184 = vld [vmem:[%s1 + $0x10] sm:$0xf]
      %v185 = vld [vmem:[%s1 + $0x14] sm:$0xf]
      %v186 = vld [vmem:[%s1 + $0x18] sm:$0xf]
      %v187 = vld [vmem:[%s1 + $0x1c] sm:$0xf]
      %v188 = vld [vmem:[%s1 + $0x20] sm:$0xf]
      %v189 = vld [vmem:[%s1 + $0x24] sm:$0xf]
      %v190 = vld [vmem:[%s1 + $0x28] sm:$0xf]
      %v191 = vld [vmem:[%s1 + $0x2c] sm:$0xf]
      %v192 = vld [vmem:[%s1 + $0x30] sm:$0xf]
      %v193 = vld [vmem:[%s1 + $0x34] sm:$0xf]
      %v194 = vld [vmem:[%s1 + $0x38] sm:$0xf]
      %v195 = vld [vmem:[%s1 + $0x3c] sm:$0xf]
      %v196 = vld [vmem:[%s2] sm:$0x1]
      %v198 = vlaneseq
      %v199 = vshrl.u32 %v198, 7
      %v200 = vsub.s32 0, %v199
      %v201 = vrot.slane %v196, %v200
      %v211 = vunpack.c.l.b16 %v172
      %v212 = vunpack.c.l.b16 %v173
      %v213 = vunpack.c.l.b16 %v174
      %v214 = vunpack.c.l.b16 %v175
      %v215 = vunpack.c.l.b16 %v176
      %v216 = vunpack.c.l.b16 %v177
      %v217 = vunpack.c.l.b16 %v178
      %v218 = vunpack.c.l.b16 %v179
      %v219 = vpack.c.b16 %v212, %v211
      %v220 = vpack.c.b16 %v214, %v213
      %v221 = vpack.c.b16 %v216, %v215
      %v222 = vpack.c.b16 %v218, %v217
      %v243 = vunpack.c.l.b16 %v180
      %v244 = vunpack.c.l.b16 %v181
      %v245 = vunpack.c.l.b16 %v182
      %v246 = vunpack.c.l.b16 %v183
      %v247 = vunpack.c.l.b16 %v184
      %v248 = vunpack.c.l.b16 %v185
      %v249 = vunpack.c.l.b16 %v186
      %v250 = vunpack.c.l.b16 %v187
      %v251 = vunpack.c.l.b16 %v188
      %v252 = vunpack.c.l.b16 %v189
      %v253 = vunpack.c.l.b16 %v190
      %v254 = vunpack.c.l.b16 %v191
      %v255 = vunpack.c.l.b16 %v192
      %v256 = vunpack.c.l.b16 %v193
      %v257 = vunpack.c.l.b16 %v194
      %v258 = vunpack.c.l.b16 %v195
      %v259 = vpack.c.b16 %v244, %v243
      %v260 = vpack.c.b16 %v246, %v245
      %v261 = vpack.c.b16 %v248, %v247
      %v262 = vpack.c.b16 %v250, %v249
      %v263 = vpack.c.b16 %v252, %v251
      %v264 = vpack.c.b16 %v254, %v253
      %v265 = vpack.c.b16 %v256, %v255
      %v266 = vpack.c.b16 %v258, %v257
      %275 = vmatprep.subr.bf16.mxu0 0
      %276 = vmatpush1.bf16.msra.mxu0 %v259
      %277 = vmatprep.subr.bf16.mxu0 0
      %278 = vmatpush1.bf16.msra.mxu0 %v260
      %279 = vmatprep.subr.bf16.mxu0 0
      %280 = vmatpush1.bf16.msra.mxu0 %v261
      %281 = vmatprep.subr.bf16.mxu0 0
      %282 = vmatpush1.bf16.msra.mxu0 %v262
      %283 = vmatprep.subr.bf16.mxu0 0
      %284 = vmatpush1.bf16.msra.mxu0 %v263
      %285 = vmatprep.subr.bf16.mxu0 0
      %286 = vmatpush1.bf16.msra.mxu0 %v264
      %287 = vmatprep.subr.bf16.mxu0 0
      %288 = vmatpush1.bf16.msra.mxu0 %v265
      %289 = vmatprep.subr.bf16.mxu0 0
      %290 = vmatpush1.bf16.msra.mxu0 %v266
      %291 = vmatprep.subr.bf16.mxu0 0
      %292 = vmatpush1.bf16.msra.mxu0 0
      %293 = vmatprep.subr.bf16.mxu0 0
      %294 = vmatpush1.bf16.msra.mxu0 0
      %295 = vmatprep.subr.bf16.mxu0 0
      %296 = vmatpush1.bf16.msra.mxu0 0
      %297 = vmatprep.subr.bf16.mxu0 0
      %298 = vmatpush1.bf16.msra.mxu0 0
      %299 = vmatprep.subr.bf16.mxu0 0
      %300 = vmatpush1.bf16.msra.mxu0 0
      %301 = vmatprep.subr.bf16.mxu0 0
      %302 = vmatpush1.bf16.msra.mxu0 0
      %303 = vmatprep.subr.bf16.mxu0 0
      %304 = vmatpush1.bf16.msra.mxu0 0
      %305 = vmatprep.subr.bf16.mxu0 0
      %306 = vmatpush1.bf16.msra.mxu0 0
      %307 = vmatprep.mubr.bf16.mxu0 0
      %308 = vmatmul.mubr.bf16.gmra.mrb[0].mxu0 %v219
      %v309 = vpop.f32.mrb[0].mxu0
      %v310 = vadd.f32 %v201, %v309
      %v311 = vpop.f32.mrb[0].mxu0
      %v312 = vpop.f32.mrb[0].mxu0
      %v313 = vadd.f32 %v201, %v312
      %v314 = vpop.f32.mrb[0].mxu0
      %315 = vmatprep.mubr.bf16.mxu0 0
      %316 = vmatmul.mubr.bf16.gmra.mrb[0].mxu0 %v220
      %v317 = vpop.f32.mrb[0].mxu0
      %v318 = vadd.f32 %v201, %v317
      %v319 = vpop.f32.mrb[0].mxu0
      %v320 = vpop.f32.mrb[0].mxu0
      %v321 = vadd.f32 %v201, %v320
      %v322 = vpop.f32.mrb[0].mxu0
      %323 = vmatprep.mubr.bf16.mxu0 0
      %324 = vmatmul.mubr.bf16.gmra.mrb[0].mxu0 %v221
      %v325 = vpop.f32.mrb[0].mxu0
      %v326 = vadd.f32 %v201, %v325
      %v327 = vpop.f32.mrb[0].mxu0
      %v328 = vpop.f32.mrb[0].mxu0
      %v329 = vadd.f32 %v201, %v328
      %v330 = vpop.f32.mrb[0].mxu0
      %331 = vmatprep.mubr.bf16.mxu0 0
      %332 = vmatmul.mubr.bf16.gmra.mrb[0].mxu0 %v222
      %v333 = vpop.f32.mrb[0].mxu0
      %v334 = vadd.f32 %v201, %v333
      %v335 = vpop.f32.mrb[0].mxu0
      %v336 = vpop.f32.mrb[0].mxu0
      %v337 = vadd.f32 %v201, %v336
      %v338 = vpop.f32.mrb[0].mxu0
      %339 = vdwg.mxu0
      %v340 = vadd.f32 %v310, %v313
      %v341 = vadd.f32 %v340, %v318
      %v342 = vadd.f32 %v341, %v321
      %v343 = vadd.f32 %v342, %v326
      %v344 = vadd.f32 %v343, %v329
      %v345 = vadd.f32 %v344, %v334
      %v346 = vadd.f32 %v345, %v337
      %v347 = vrot.slane %v346, 4
      %v348 = vadd.f32 %v346, %v347
      %v349 = vrot.slane %v348, 2
      %v350 = vadd.f32 %v348, %v349
      %v351 = vrot.slane %v350, 1
      %v352 = vadd.f32 %v350, %v351
      %v353 = vmul.f32 %v352, 0.015625
      %v354 = vmul.f32 %v310, %v310
      %v355 = vmul.f32 %v313, %v313
      %v356 = vmul.f32 %v318, %v318
      %v357 = vmul.f32 %v321, %v321
      %v358 = vmul.f32 %v326, %v326
      %v359 = vmul.f32 %v329, %v329
      %v360 = vmul.f32 %v334, %v334
      %v361 = vmul.f32 %v337, %v337
      %v362 = vadd.f32 %v354, %v355
      %v363 = vadd.f32 %v362, %v356
      %v364 = vadd.f32 %v363, %v357
      %v365 = vadd.f32 %v364, %v358
      %v366 = vadd.f32 %v365, %v359
      %v367 = vadd.f32 %v366, %v360
      %v368 = vadd.f32 %v367, %v361
      %v369 = vrot.slane %v368, 4
      %v370 = vadd.f32 %v368, %v369
      %v371 = vrot.slane %v370, 2
      %v372 = vadd.f32 %v370, %v371
      %v373 = vrot.slane %v372, 1
      %v374 = vadd.f32 %v372, %v373
      %v375 = vmul.f32 %v374, 0.015625
      %v376 = vmul.f32 %v353, %v353
      %v377 = vsub.f32 %v375, %v376
      %v378 = vmax.f32 %v377, 0.0
      %v379 = vsub.f32 %v310, %v353
      %v380 = vsub.f32 %v313, %v353
      %v381 = vsub.f32 %v318, %v353
      %v382 = vsub.f32 %v321, %v353
      %v383 = vsub.f32 %v326, %v353
      %v384 = vsub.f32 %v329, %v353
      %v385 = vsub.f32 %v334, %v353
      %v386 = vsub.f32 %v337, %v353
      %v387 = vadd.f32 %v378, 1e-05
      %v388 = vrsqrt.pop %v387
      %v389 = vmul.f32 %v379, %v388
      %v390 = vmul.f32 %v380, %v388
      %v391 = vmul.f32 %v381, %v388
      %v392 = vmul.f32 %v382, %v388
      %v393 = vmul.f32 %v383, %v388
      %v394 = vmul.f32 %v384, %v388
      %v395 = vmul.f32 %v385, %v388
      %v396 = vmul.f32 %v386, %v388
      %v397 = vmax.f32 %v389, 0.0
      %v398 = vmax.f32 %v390, 0.0
      %v399 = vmax.f32 %v391, 0.0
      %v400 = vmax.f32 %v392, 0.0
      %v401 = vmax.f32 %v393, 0.0
      %v402 = vmax.f32 %v394, 0.0
      %v403 = vmax.f32 %v395, 0.0
      %v404 = vmax.f32 %v396, 0.0
      %405 = vst [vmem:[%s170] sm:$0xff] %v397
      %406 = vst [vmem:[%s170 + $0x8] sm:$0xff] %v398
      %407 = vst [vmem:[%s170 + $0x10] sm:$0xff] %v399
      %408 = vst [vmem:[%s170 + $0x18] sm:$0xff] %v400
      %409 = vst [vmem:[%s170 + $0x20] sm:$0xff] %v401
      %410 = vst [vmem:[%s170 + $0x28] sm:$0xff] %v402
      %411 = vst [vmem:[%s170 + $0x30] sm:$0xff] %v403
      %412 = vst [vmem:[%s170 + $0x38] sm:$0xff] %v404
      %p413 = scmp.lt.s32.totalorder %s14, 1
      %s414 = scalar_select %p413, %s14, 1
      %s415 = smul.addr %s414, 8
      %s416 = smul.addr %s415, 8
      %s417 = scalar_lea.vmem %s3, %s416
      // Predicated region
      $region33: #{generator_forward.11} parent=31 // pred_check
        %p418 = pneg %p100
      $region34: #{generator_forward.11} parent=31 // pred_check_branch
        %420 = sbr.rel (%p418) target = $region36
      $region35: #{generator_forward.11} parent=31 // pred_region
        _
      $region36: #{generator_forward.11} parent=31 // pred_fallthru
        _
    $region32: #{generator_forward.11} parent=5 // pred_fallthru
      _
    %p421 = scmp.le.s32.totalorder 2, %s9
    // Predicated region
    $region37: #{generator_forward.11} parent=5 // pred_check
      %p422 = pneg %p421
    $region38: #{generator_forward.11} parent=5 // pred_check_branch
      %424 = sbr.rel (%p422) target = $region40
    $region39: #{generator_forward.11} parent=5 // pred_region
      %s425 = ssub.s32 %s9, 2
      // Predicated region
      $region41: #{generator_forward.11} parent=39 // pred_check
        %p426 = pneg %p106
      $region42: #{generator_forward.11} parent=39 // pred_check_branch
        %428 = sbr.rel (%p426) target = $region44
      $region43: #{generator_forward.11} parent=39 // pred_region
        %p429 = scmp.lt.s32.totalorder %s15, 1
        %s430 = scalar_select %p429, %s15, 1
        %s431 = smul.addr %s430, 8
        %s432 = smul.addr %s431, 8
        %s433 = scalar_lea.vmem %s3, %s432
      $region44: #{generator_forward.11} parent=39 // pred_fallthru
        _
    $region40: #{generator_forward.11} parent=5 // pred_fallthru
      _
  $region6: #{generator_forward.11} parent=0 // loop_footer
    %s13 = sadd.s32 1, %s9
  $region7: #{generator_forward.11} parent=0 // loop_footer_branch
    %8 = sbr.rel target = $region3
  $region8: #{generator_forward.11} parent=0 // loop_exit
    _

// kernel: generator_forward.13
$region0: #{generator_forward.13}
  #allocation0 [shape = 'u32[]', space=smem, size = 0x4, offset = 0x4, fixed_abs, tag = 'smem constant byte address 0x4 - core index']
  #allocation1 [shape = 'u32[144,128]{1,0:T(1,128)}', space=vmem, size = 0x12000, scoped, tag = 'internal scratch']
  %s0 = inlined_call_operand.vmem [shape: bf16[2,16,384], index: 0, kind: input, shape index: {}]
  %s1 = inlined_call_operand.vmem [shape: bf16[384,128], index: 1, kind: input, shape index: {}]
  %s2 = inlined_call_operand.vmem [shape: f32[1,128], index: 2, kind: input, shape index: {}]
  %s3 = inlined_call_operand.vmem [shape: f32[2,16,128], index: 3, kind: output, shape index: {}]
  %s4 = sld [smem:[#allocation0]]
  $region45: #{generator_forward.13} parent=0
    _
  %s6 = ssub.s32 1, %s4
  %s7 = scalar_select 0, %s6, %s4
  loop: start=0, step=1, limit=4
  $region2: #{generator_forward.13} parent=0 // loop_pre_header
    _
  $region3: #{generator_forward.13} parent=0 // loop_header
    %s9 = sphi 0, %s13
    %p10 = scmp.ge.s32.totalorder %s9, 4
    %s19 = sphi 0, %s21
    %s22 = sphi 0, %s19
    %s23 = sphi 0, %s22
    %s39 = sphi 0, %s23
    %s43 = sphi 0, %s43
    %s45 = sphi 0, %s43
    %s46 = sphi 0, %s45
    %s60 = sphi 0, %s46
    %s64 = sphi 0, %s64
    %s66 = sphi 0, %s64
    %s67 = sphi 0, %s66
    %s81 = sphi 0, %s67
    %s87 = sphi 0, %s89
    %s90 = sphi 0, %s87
    %s91 = sphi 0, %s90
    %s107 = sphi 0, %s91
  $region4: #{generator_forward.13} parent=0 // loop_header_branch
    %12 = sbr.rel (%p10) target = $region8
  $region5: #{generator_forward.13} parent=0 // loop_body
    %s14 = ssub.s32 %s9, 1
    %s15 = ssub.s32 %s9, 2
    %s16 = sadd.s32 %s9, 1
    %s17 = ssub.s32 %s9, %s16
    %p18 = scmp.eq.s32.totalorder %s17, 0
    %s20 = sadd.s32 %s19, 1
    %s21 = scalar_select %p18, %s19, %s20
    %p24 = pneg %p18
    %p25 = scmp.eq.s32.totalorder %s9, 1
    %p26 = por %p24, %p25
    %p27 = scmp.ne.s32.totalorder %s19, %s22
    %p28 = scmp.eq.s32.totalorder %s9, 0
    %p29 = por %p27, %p28
    %p30 = scmp.ne.s32.totalorder %s19, %s22
    %p31 = scmp.eq.s32.totalorder %s14, 1
    %p32 = por %p30, %p31
    %p33 = scmp.ne.s32.totalorder %s22, %s23
    %p34 = scmp.eq.s32.totalorder %s14, 0
    %p35 = por %p33, %p34
    %p36 = scmp.ne.s32.totalorder %s22, %s23
    %p37 = scmp.eq.s32.totalorder %s15, 1
    %p38 = por %p36, %p37
    %p40 = scmp.ne.s32.totalorder %s23, %s39
    %p41 = scmp.eq.s32.totalorder %s15, 0
    %p42 = por %p40, %p41
    %s44 = sadd.s32 %s43, 1
    %p47 = scmp.eq.s32.totalorder %s9, 1
    %p48 = scmp.ne.s32.totalorder %s43, %s45
    %p49 = scmp.eq.s32.totalorder %s9, 0
    %p50 = por %p48, %p49
    %p51 = scmp.ne.s32.totalorder %s43, %s45
    %p52 = scmp.eq.s32.totalorder %s14, 1
    %p53 = por %p51, %p52
    %p54 = scmp.ne.s32.totalorder %s45, %s46
    %p55 = scmp.eq.s32.totalorder %s14, 0
    %p56 = por %p54, %p55
    %p57 = scmp.ne.s32.totalorder %s45, %s46
    %p58 = scmp.eq.s32.totalorder %s15, 1
    %p59 = por %p57, %p58
    %p61 = scmp.ne.s32.totalorder %s46, %s60
    %p62 = scmp.eq.s32.totalorder %s15, 0
    %p63 = por %p61, %p62
    %s65 = sadd.s32 %s64, 1
    %p68 = scmp.eq.s32.totalorder %s9, 1
    %p69 = scmp.ne.s32.totalorder %s64, %s66
    %p70 = scmp.eq.s32.totalorder %s9, 0
    %p71 = por %p69, %p70
    %p72 = scmp.ne.s32.totalorder %s64, %s66
    %p73 = scmp.eq.s32.totalorder %s14, 1
    %p74 = por %p72, %p73
    %p75 = scmp.ne.s32.totalorder %s66, %s67
    %p76 = scmp.eq.s32.totalorder %s14, 0
    %p77 = por %p75, %p76
    %p78 = scmp.ne.s32.totalorder %s66, %s67
    %p79 = scmp.eq.s32.totalorder %s15, 1
    %p80 = por %p78, %p79
    %p82 = scmp.ne.s32.totalorder %s67, %s81
    %p83 = scmp.eq.s32.totalorder %s15, 0
    %p84 = por %p82, %p83
    %s85 = ssub.s32 %s9, %s16
    %p86 = scmp.eq.s32.totalorder %s85, 0
    %s88 = sadd.s32 %s87, 1
    %s89 = scalar_select %p86, %s87, %s88
    %p92 = pneg %p86
    %p93 = scmp.eq.s32.totalorder %s9, 1
    %p94 = por %p92, %p93
    %p95 = scmp.ne.s32.totalorder %s87, %s90
    %p96 = scmp.eq.s32.totalorder %s9, 0
    %p97 = por %p95, %p96
    %p98 = scmp.ne.s32.totalorder %s87, %s90
    %p99 = scmp.eq.s32.totalorder %s14, 1
    %p100 = por %p98, %p99
    %p101 = scmp.ne.s32.totalorder %s90, %s91
    %p102 = scmp.eq.s32.totalorder %s14, 0
    %p103 = por %p101, %p102
    %p104 = scmp.ne.s32.totalorder %s90, %s91
    %p105 = scmp.eq.s32.totalorder %s15, 1
    %p106 = por %p104, %p105
    %p108 = scmp.ne.s32.totalorder %s91, %s107
    %p109 = scmp.eq.s32.totalorder %s15, 0
    %p110 = por %p108, %p109
    %p111 = scmp.le.s32.totalorder 1, %s9
    %p112 = scmp.lt.s32.totalorder %s9, 3
    %p113 = pnand %p111, %p112
    %p114 = pneg %p113
    // Predicated region
    $region9: #{generator_forward.13} parent=5 // pred_check
      _
    $region10: #{generator_forward.13} parent=5 // pred_check_branch
      %116 = sbr.rel (%p113) target = $region12
    $region11: #{generator_forward.13} parent=5 // pred_region
      %s117 = ssub.s32 %s9, 1
      // Predicated region
      $region13: #{generator_forward.13} parent=11 // pred_check
        %p118 = pneg %p56
      $region14: #{generator_forward.13} parent=11 // pred_check_branch
        %120 = sbr.rel (%p118) target = $region16
      $region15: #{generator_forward.13} parent=11 // pred_region
        _
      $region16: #{generator_forward.13} parent=11 // pred_fallthru
        _
      // Predicated region
      $region17: #{generator_forward.13} parent=11 // pred_check
        %p121 = pneg %p77
      $region18: #{generator_forward.13} parent=11 // pred_check_branch
        %123 = sbr.rel (%p121) target = $region20
      $region19: #{generator_forward.13} parent=11 // pred_region
        _
      $region20: #{generator_forward.13} parent=11 // pred_fallthru
        _
    $region12: #{generator_forward.13} parent=5 // pred_fallthru
      _
    %p124 = scmp.lt.s32.totalorder %s9, 2
    // Predicated region
    $region21: #{generator_forward.13} parent=5 // pred_check
      %p125 = pneg %p124
    $region22: #{generator_forward.13} parent=5 // pred_check_branch
      %127 = sbr.rel (%p125) target = $region24
    $region23: #{generator_forward.13} parent=5 // pred_region
      // Predicated region
      $region25: #{generator_forward.13} parent=23 // pred_check
        %p128 = pneg %p29
      $region26: #{generator_forward.13} parent=23 // pred_check_branch
        %130 = sbr.rel (%p128) target = $region28
      $region27: #{generator_forward.13} parent=23 // pred_region
        %p131 = scmp.lt.s32.totalorder %s9, 1
        %s132 = scalar_select %p131, %s9, 1
        %s133 = smul.addr %s132, 6
        %s134 = smul.addr %s133, 4
        %s135 = scalar_lea.vmem %s0, %s134
      $region28: #{generator_forward.13} parent=23 // pred_fallthru
        _
    $region24: #{generator_forward.13} parent=5 // pred_fallthru
      _
    %p136 = scmp.le.s32.totalorder 1, %s9
    %p137 = scmp.lt.s32.totalorder %s9, 3
    %p138 = pnand %p136, %p137
    %p139 = pneg %p138
    // Predicated region
    $region29: #{generator_forward.13} parent=5 // pred_check
      _
    $region30: #{generator_forward.13} parent=5 // pred_check_branch
      %141 = sbr.rel (%p138) target = $region32
    $region31: #{generator_forward.13} parent=5 // pred_region
      %s142 = ssub.s32 %s9, 1
      %p143 = scmp.lt.s32.totalorder %s14, 1
      %s144 = scalar_select %p143, %s14, 1
      %s145 = smul.addr %s144, 6
      %s146 = smul.addr %s145, 4
      %s147 = scalar_lea.vmem %s0, %s146
      %p148 = pneg %p35
      %p149 = pneg %p32
      %p150 = pneg %p56
      %p151 = pneg %p53
      %p152 = pneg %p77
      %p153 = pneg %p74
      %p154 = pneg %p103
      %p155 = pneg %p100
      %p156 = scmp.lt.s32.totalorder %s14, 1
      %s157 = scalar_select %p156, %s14, 1
      %s158 = smul.addr %s157, 2
      %s159 = smul.addr %s158, 8
      %s160 = scalar_lea.vmem %s3, %s159
      %p161 = scmp.lt.s32.totalorder %s14, 1
      %s162 = scalar_select %p161, %s14, 1
      %s163 = smul.addr %s162, 6
      %s164 = smul.addr %s163, 4
      %s165 = scalar_lea.vmem %s0, %s164
      %p166 = scmp.lt.s32.totalorder %s14, 1
      %s167 = scalar_select %p166, %s14, 1
      %s168 = smul.addr %s167, 2
      %s169 = smul.addr %s168, 8
      %s170 = scalar_lea.vmem %s3, %s169
      %v172 = vld [vmem:[%s165] sm:$0xff]
      %v173 = vld [vmem:[%s165 + $0x8] sm:$0xf]
      %v174 = vld [vmem:[%s165 + $0xc] sm:$0xff]
      %v175 = vld [vmem:[%s165 + $0x14] sm:$0xf]
      %v176 = vld [vmem:[%s1] sm:$0xf]
      %v177 = vld [vmem:[%s1 + $0x4] sm:$0xf]
      %v178 = vld [vmem:[%s1 + $0x8] sm:$0xf]
      %v179 = vld [vmem:[%s1 + $0xc] sm:$0xf]
      %v180 = vld [vmem:[%s1 + $0x10] sm:$0xf]
      %v181 = vld [vmem:[%s1 + $0x14] sm:$0xf]
      %v182 = vld [vmem:[%s1 + $0x18] sm:$0xf]
      %v183 = vld [vmem:[%s1 + $0x1c] sm:$0xf]
      %v184 = vld [vmem:[%s1 + $0x20] sm:$0xf]
      %v185 = vld [vmem:[%s1 + $0x24] sm:$0xf]
      %v186 = vld [vmem:[%s1 + $0x28] sm:$0xf]
      %v187 = vld [vmem:[%s1 + $0x2c] sm:$0xf]
      %v188 = vld [vmem:[%s1 + $0x30] sm:$0xf]
      %v189 = vld [vmem:[%s1 + $0x34] sm:$0xf]
      %v190 = vld [vmem:[%s1 + $0x38] sm:$0xf]
      %v191 = vld [vmem:[%s1 + $0x3c] sm:$0xf]
      %v192 = vld [vmem:[%s1 + $0x40] sm:$0xf]
      %v193 = vld [vmem:[%s1 + $0x44] sm:$0xf]
      %v194 = vld [vmem:[%s1 + $0x48] sm:$0xf]
      %v195 = vld [vmem:[%s1 + $0x4c] sm:$0xf]
      %v196 = vld [vmem:[%s1 + $0x50] sm:$0xf]
      %v197 = vld [vmem:[%s1 + $0x54] sm:$0xf]
      %v198 = vld [vmem:[%s1 + $0x58] sm:$0xf]
      %v199 = vld [vmem:[%s1 + $0x5c] sm:$0xf]
      %v200 = vld [vmem:[%s1 + $0x60] sm:$0xf]
      %v201 = vld [vmem:[%s1 + $0x64] sm:$0xf]
      %v202 = vld [vmem:[%s1 + $0x68] sm:$0xf]
      %v203 = vld [vmem:[%s1 + $0x6c] sm:$0xf]
      %v204 = vld [vmem:[%s1 + $0x70] sm:$0xf]
      %v205 = vld [vmem:[%s1 + $0x74] sm:$0xf]
      %v206 = vld [vmem:[%s1 + $0x78] sm:$0xf]
      %v207 = vld [vmem:[%s1 + $0x7c] sm:$0xf]
      %v208 = vld [vmem:[%s1 + $0x80] sm:$0xf]
      %v209 = vld [vmem:[%s1 + $0x84] sm:$0xf]
      %v210 = vld [vmem:[%s1 + $0x88] sm:$0xf]
      %v211 = vld [vmem:[%s1 + $0x8c] sm:$0xf]
      %v212 = vld [vmem:[%s1 + $0x90] sm:$0xf]
      %v213 = vld [vmem:[%s1 + $0x94] sm:$0xf]
      %v214 = vld [vmem:[%s1 + $0x98] sm:$0xf]
      %v215 = vld [vmem:[%s1 + $0x9c] sm:$0xf]
      %v216 = vld [vmem:[%s1 + $0xa0] sm:$0xf]
      %v217 = vld [vmem:[%s1 + $0xa4] sm:$0xf]
      %v218 = vld [vmem:[%s1 + $0xa8] sm:$0xf]
      %v219 = vld [vmem:[%s1 + $0xac] sm:$0xf]
      %v220 = vld [vmem:[%s1 + $0xb0] sm:$0xf]
      %v221 = vld [vmem:[%s1 + $0xb4] sm:$0xf]
      %v222 = vld [vmem:[%s1 + $0xb8] sm:$0xf]
      %v223 = vld [vmem:[%s1 + $0xbc] sm:$0xf]
      %v224 = vld [vmem:[%s2] sm:$0x1]
      %v226 = vlaneseq
      %v227 = vshrl.u32 %v226, 7
      %v228 = vsub.s32 0, %v227
      %v229 = vrot.slane %v224, %v228
      %v235 = vunpack.c.l.b16 %v172
      %v236 = vunpack.c.h.b16 %v172
      %v237 = vunpack.c.l.b16 %v173
      %v238 = vunpack.c.l.b16 %v174
      %v239 = vunpack.c.h.b16 %v174
      %v240 = vunpack.c.l.b16 %v175
      %v241 = vpack.c.b16 %v238, %v235
      %v242 = vpack.c.b16 %v239, %v236
      %v243 = vpack.c.b16 %v240, %v237
      %v295 = vunpack.c.l.b16 %v176
      %v296 = vunpack.c.l.b16 %v177
      %v297 = vunpack.c.l.b16 %v178
      %v298 = vunpack.c.l.b16 %v179
      %v299 = vunpack.c.l.b16 %v180
      %v300 = vunpack.c.l.b16 %v181
      %v301 = vunpack.c.l.b16 %v182
      %v302 = vunpack.c.l.b16 %v183
      %v303 = vunpack.c.l.b16 %v184
      %v304 = vunpack.c.l.b16 %v185
      %v305 = vunpack.c.l.b16 %v186
      %v306 = vunpack.c.l.b16 %v187
      %v307 = vunpack.c.l.b16 %v188
      %v308 = vunpack.c.l.b16 %v189
      %v309 = vunpack.c.l.b16 %v190
      %v310 = vunpack.c.l.b16 %v191
      %v311 = vunpack.c.l.b16 %v192
      %v312 = vunpack.c.l.b16 %v193
      %v313 = vunpack.c.l.b16 %v194
      %v314 = vunpack.c.l.b16 %v195
      %v315 = vunpack.c.l.b16 %v196
      %v316 = vunpack.c.l.b16 %v197
      %v317 = vunpack.c.l.b16 %v198
      %v318 = vunpack.c.l.b16 %v199
      %v319 = vunpack.c.l.b16 %v200
      %v320 = vunpack.c.l.b16 %v201
      %v321 = vunpack.c.l.b16 %v202
      %v322 = vunpack.c.l.b16 %v203
      %v323 = vunpack.c.l.b16 %v204
      %v324 = vunpack.c.l.b16 %v205
      %v325 = vunpack.c.l.b16 %v206
      %v326 = vunpack.c.l.b16 %v207
      %v327 = vunpack.c.l.b16 %v208
      %v328 = vunpack.c.l.b16 %v209
      %v329 = vunpack.c.l.b16 %v210
      %v330 = vunpack.c.l.b16 %v211
      %v331 = vunpack.c.l.b16 %v212
      %v332 = vunpack.c.l.b16 %v213
      %v333 = vunpack.c.l.b16 %v214
      %v334 = vunpack.c.l.b16 %v215
      %v335 = vunpack.c.l.b16 %v216
      %v336 = vunpack.c.l.b16 %v217
      %v337 = vunpack.c.l.b16 %v218
      %v338 = vunpack.c.l.b16 %v219
      %v339 = vunpack.c.l.b16 %v220
      %v340 = vunpack.c.l.b16 %v221
      %v341 = vunpack.c.l.b16 %v222
      %v342 = vunpack.c.l.b16 %v223
      %v343 = vpack.c.b16 %v296, %v295
      %v344 = vpack.c.b16 %v298, %v297
      %v345 = vpack.c.b16 %v300, %v299
      %v346 = vpack.c.b16 %v302, %v301
      %v347 = vpack.c.b16 %v304, %v303
      %v348 = vpack.c.b16 %v306, %v305
      %v349 = vpack.c.b16 %v308, %v307
      %v350 = vpack.c.b16 %v310, %v309
      %v351 = vpack.c.b16 %v312, %v311
      %v352 = vpack.c.b16 %v314, %v313
      %v353 = vpack.c.b16 %v316, %v315
      %v354 = vpack.c.b16 %v318, %v317
      %v355 = vpack.c.b16 %v320, %v319
      %v356 = vpack.c.b16 %v322, %v321
      %v357 = vpack.c.b16 %v324, %v323
      %v358 = vpack.c.b16 %v326, %v325
      %v359 = vpack.c.b16 %v328, %v327
      %v360 = vpack.c.b16 %v330, %v329
      %v361 = vpack.c.b16 %v332, %v331
      %v362 = vpack.c.b16 %v334, %v333
      %v363 = vpack.c.b16 %v336, %v335
      %v364 = vpack.c.b16 %v338, %v337
      %v365 = vpack.c.b16 %v340, %v339
      %v366 = vpack.c.b16 %v342, %v341
      %391 = vmatprep.subr.bf16.mxu0 0
      %392 = vmatpush1.bf16.msra.mxu0 %v343
      %393 = vmatprep.subr.bf16.mxu0 0
      %394 = vmatpush1.bf16.msra.mxu0 %v344
      %395 = vmatprep.subr.bf16.mxu0 0
      %396 = vmatpush1.bf16.msra.mxu0 %v345
      %397 = vmatprep.subr.bf16.mxu0 0
      %398 = vmatpush1.bf16.msra.mxu0 %v346
      %399 = vmatprep.subr.bf16.mxu0 0
      %400 = vmatpush1.bf16.msra.mxu0 %v347
      %401 = vmatprep.subr.bf16.mxu0 0
      %402 = vmatpush1.bf16.msra.mxu0 %v348
      %403 = vmatprep.subr.bf16.mxu0 0
      %404 = vmatpush1.bf16.msra.mxu0 %v349
      %405 = vmatprep.subr.bf16.mxu0 0
      %406 = vmatpush1.bf16.msra.mxu0 %v350
      %407 = vmatprep.subr.bf16.mxu0 0
      %408 = vmatpush1.bf16.msra.mxu0 %v351
      %409 = vmatprep.subr.bf16.mxu0 0
      %410 = vmatpush1.bf16.msra.mxu0 %v352
      %411 = vmatprep.subr.bf16.mxu0 0
      %412 = vmatpush1.bf16.msra.mxu0 %v353
      %413 = vmatprep.subr.bf16.mxu0 0
      %414 = vmatpush1.bf16.msra.mxu0 %v354
      %415 = vmatprep.subr.bf16.mxu0 0
      %416 = vmatpush1.bf16.msra.mxu0 %v355
      %417 = vmatprep.subr.bf16.mxu0 0
      %418 = vmatpush1.bf16.msra.mxu0 %v356
      %419 = vmatprep.subr.bf16.mxu0 0
      %420 = vmatpush1.bf16.msra.mxu0 %v357
      %421 = vmatprep.subr.bf16.mxu0 0
      %422 = vmatpush1.bf16.msra.mxu0 %v358
      %423 = vmatprep.mubr.bf16.mxu0 %v242
      %424 = vmatmul.mubr.bf16.gmra.mrb[0].mxu0 %v241
      %v425 = vpop.f32.mrb[0].mxu0
      %v426 = vadd.f32 %v229, %v425
      %v427 = vpop.f32.mrb[0].mxu0
      %v428 = vpop.f32.mrb[0].mxu0
      %v429 = vadd.f32 %v229, %v428
      %v430 = vpop.f32.mrb[0].mxu0
      %431 = vdwg.mxu0
      %432 = vmatprep.subr.bf16.mxu0 0
      %433 = vmatpush1.bf16.msra.mxu0 %v359
      %434 = vmatprep.subr.bf16.mxu0 0
      %435 = vmatpush1.bf16.msra.mxu0 %v360
      %436 = vmatprep.subr.bf16.mxu0 0
      %437 = vmatpush1.bf16.msra.mxu0 %v361
      %438 = vmatprep.subr.bf16.mxu0 0
      %439 = vmatpush1.bf16.msra.mxu0 %v362
      %440 = vmatprep.subr.bf16.mxu0 0
      %441 = vmatpush1.bf16.msra.mxu0 %v363
      %442 = vmatprep.subr.bf16.mxu0 0
      %443 = vmatpush1.bf16.msra.mxu0 %v364
      %444 = vmatprep.subr.bf16.mxu0 0
      %445 = vmatpush1.bf16.msra.mxu0 %v365
      %446 = vmatprep.subr.bf16.mxu0 0
      %447 = vmatpush1.bf16.msra.mxu0 %v366
      %448 = vmatprep.subr.bf16.mxu0 0
      %449 = vmatpush1.bf16.msra.mxu0 0
      %450 = vmatprep.subr.bf16.mxu0 0
      %451 = vmatpush1.bf16.msra.mxu0 0
      %452 = vmatprep.subr.bf16.mxu0 0
      %453 = vmatpush1.bf16.msra.mxu0 0
      %454 = vmatprep.subr.bf16.mxu0 0
      %455 = vmatpush1.bf16.msra.mxu0 0
      %456 = vmatprep.subr.bf16.mxu0 0
      %457 = vmatpush1.bf16.msra.mxu0 0
      %458 = vmatprep.subr.bf16.mxu0 0
      %459 = vmatpush1.bf16.msra.mxu0 0
      %460 = vmatprep.subr.bf16.mxu0 0
      %461 = vmatpush1.bf16.msra.mxu0 0
      %462 = vmatprep.subr.bf16.mxu0 0
      %463 = vmatpush1.bf16.msra.mxu0 0
      %464 = vmatprep.mubr.bf16.mxu0 0
      %465 = vmatmul.mubr.bf16.gmra.mrb[0].mxu0 %v243
      %v466 = vpop.f32.mrb[0].mxu0
      %v467 = vadd.f32 %v426, %v466
      %v468 = vpop.f32.mrb[0].mxu0
      %v469 = vpop.f32.mrb[0].mxu0
      %v470 = vadd.f32 %v429, %v469
      %v471 = vpop.f32.mrb[0].mxu0
      %472 = vdwg.mxu0
      %v473 = vadd.f32 %v467, %v470
      %v474 = vrot.slane %v473, 4
      %v475 = vadd.f32 %v473, %v474
      %v476 = vrot.slane %v475, 2
      %v477 = vadd.f32 %v475, %v476
      %v478 = vrot.slane %v477, 1
      %v479 = vadd.f32 %v477, %v478
      %v480 = vmul.f32 %v479, 0.0625
      %v481 = vmul.f32 %v467, %v467
      %v482 = vmul.f32 %v470, %v470
      %v483 = vadd.f32 %v481, %v482
      %v484 = vrot.slane %v483, 4
      %v485 = vadd.f32 %v483, %v484
      %v486 = vrot.slane %v485, 2
      %v487 = vadd.f32 %v485, %v486
      %v488 = vrot.slane %v487, 1
      %v489 = vadd.f32 %v487, %v488
      %v490 = vmul.f32 %v489, 0.0625
      %v491 = vmul.f32 %v480, %v480
      %v492 = vsub.f32 %v490, %v491
      %v493 = vmax.f32 %v492, 0.0
      %v494 = vsub.f32 %v467, %v480
      %v495 = vsub.f32 %v470, %v480
      %v496 = vadd.f32 %v493, 1e-05
      %v497 = vrsqrt.pop %v496
      %v498 = vmul.f32 %v494, %v497
      %v499 = vmul.f32 %v495, %v497
      %v500 = vmax.f32 %v498, 0.0
      %v501 = vmax.f32 %v499, 0.0
      %502 = vst [vmem:[%s170] sm:$0xff] %v500
      %503 = vst [vmem:[%s170 + $0x8] sm:$0xff] %v501
      %p504 = scmp.lt.s32.totalorder %s14, 1
      %s505 = scalar_select %p504, %s14, 1
      %s506 = smul.addr %s505, 2
      %s507 = smul.addr %s506, 8
      %s508 = scalar_lea.vmem %s3, %s507
      // Predicated region
      $region33: #{generator_forward.13} parent=31 // pred_check
        %p509 = pneg %p100
      $region34: #{generator_forward.13} parent=31 // pred_check_branch
        %511 = sbr.rel (%p509) target = $region36
      $region35: #{generator_forward.13} parent=31 // pred_region
        _
      $region36: #{generator_forward.13} parent=31 // pred_fallthru
        _
    $region32: #{generator_forward.13} parent=5 // pred_fallthru
      _
    %p512 = scmp.le.s32.totalorder 2, %s9
    // Predicated region
    $region37: #{generator_forward.13} parent=5 // pred_check
      %p513 = pneg %p512
    $region38: #{generator_forward.13} parent=5 // pred_check_branch
      %515 = sbr.rel (%p513) target = $region40
    $region39: #{generator_forward.13} parent=5 // pred_region
      %s516 = ssub.s32 %s9, 2
      // Predicated region
      $region41: #{generator_forward.13} parent=39 // pred_check
        %p517 = pneg %p106
      $region42: #{generator_forward.13} parent=39 // pred_check_branch
        %519 = sbr.rel (%p517) target = $region44
      $region43: #{generator_forward.13} parent=39 // pred_region
        %p520 = scmp.lt.s32.totalorder %s15, 1
        %s521 = scalar_select %p520, %s15, 1
        %s522 = smul.addr %s521, 2
        %s523 = smul.addr %s522, 8
        %s524 = scalar_lea.vmem %s3, %s523
      $region44: #{generator_forward.13} parent=39 // pred_fallthru
        _
    $region40: #{generator_forward.13} parent=5 // pred_fallthru
      _
  $region6: #{generator_forward.13} parent=0 // loop_footer
    %s13 = sadd.s32 1, %s9
  $region7: #{generator_forward.13} parent=0 // loop_footer_branch
    %8 = sbr.rel target = $region3
  $region8: #{generator_forward.13} parent=0 // loop_exit
    _

// kernel: generator_forward.12
$region0: #{generator_forward.12}
  #allocation0 [shape = 'u32[]', space=smem, size = 0x4, offset = 0x4, fixed_abs, tag = 'smem constant byte address 0x4 - core index']
  #allocation1 [shape = 'u32[144,128]{1,0:T(1,128)}', space=vmem, size = 0x12000, scoped, tag = 'internal scratch']
  %s0 = inlined_call_operand.vmem [shape: bf16[2,16,256], index: 0, kind: input, shape index: {}]
  %s1 = inlined_call_operand.vmem [shape: bf16[256,128], index: 1, kind: input, shape index: {}]
  %s2 = inlined_call_operand.vmem [shape: f32[1,128], index: 2, kind: input, shape index: {}]
  %s3 = inlined_call_operand.vmem [shape: f32[2,16,128], index: 3, kind: output, shape index: {}]
  %s4 = sld [smem:[#allocation0]]
  $region45: #{generator_forward.12} parent=0
    _
  %s6 = ssub.s32 1, %s4
  %s7 = scalar_select 0, %s6, %s4
  loop: start=0, step=1, limit=4
  $region2: #{generator_forward.12} parent=0 // loop_pre_header
    _
  $region3: #{generator_forward.12} parent=0 // loop_header
    %s9 = sphi 0, %s13
    %p10 = scmp.ge.s32.totalorder %s9, 4
    %s19 = sphi 0, %s21
    %s22 = sphi 0, %s19
    %s23 = sphi 0, %s22
    %s39 = sphi 0, %s23
    %s43 = sphi 0, %s43
    %s45 = sphi 0, %s43
    %s46 = sphi 0, %s45
    %s60 = sphi 0, %s46
    %s64 = sphi 0, %s64
    %s66 = sphi 0, %s64
    %s67 = sphi 0, %s66
    %s81 = sphi 0, %s67
    %s87 = sphi 0, %s89
    %s90 = sphi 0, %s87
    %s91 = sphi 0, %s90
    %s107 = sphi 0, %s91
  $region4: #{generator_forward.12} parent=0 // loop_header_branch
    %12 = sbr.rel (%p10) target = $region8
  $region5: #{generator_forward.12} parent=0 // loop_body
    %s14 = ssub.s32 %s9, 1
    %s15 = ssub.s32 %s9, 2
    %s16 = sadd.s32 %s9, 1
    %s17 = ssub.s32 %s9, %s16
    %p18 = scmp.eq.s32.totalorder %s17, 0
    %s20 = sadd.s32 %s19, 1
    %s21 = scalar_select %p18, %s19, %s20
    %p24 = pneg %p18
    %p25 = scmp.eq.s32.totalorder %s9, 1
    %p26 = por %p24, %p25
    %p27 = scmp.ne.s32.totalorder %s19, %s22
    %p28 = scmp.eq.s32.totalorder %s9, 0
    %p29 = por %p27, %p28
    %p30 = scmp.ne.s32.totalorder %s19, %s22
    %p31 = scmp.eq.s32.totalorder %s14, 1
    %p32 = por %p30, %p31
    %p33 = scmp.ne.s32.totalorder %s22, %s23
    %p34 = scmp.eq.s32.totalorder %s14, 0
    %p35 = por %p33, %p34
    %p36 = scmp.ne.s32.totalorder %s22, %s23
    %p37 = scmp.eq.s32.totalorder %s15, 1
    %p38 = por %p36, %p37
    %p40 = scmp.ne.s32.totalorder %s23, %s39
    %p41 = scmp.eq.s32.totalorder %s15, 0
    %p42 = por %p40, %p41
    %s44 = sadd.s32 %s43, 1
    %p47 = scmp.eq.s32.totalorder %s9, 1
    %p48 = scmp.ne.s32.totalorder %s43, %s45
    %p49 = scmp.eq.s32.totalorder %s9, 0
    %p50 = por %p48, %p49
    %p51 = scmp.ne.s32.totalorder %s43, %s45
    %p52 = scmp.eq.s32.totalorder %s14, 1
    %p53 = por %p51, %p52
    %p54 = scmp.ne.s32.totalorder %s45, %s46
    %p55 = scmp.eq.s32.totalorder %s14, 0
    %p56 = por %p54, %p55
    %p57 = scmp.ne.s32.totalorder %s45, %s46
    %p58 = scmp.eq.s32.totalorder %s15, 1
    %p59 = por %p57, %p58
    %p61 = scmp.ne.s32.totalorder %s46, %s60
    %p62 = scmp.eq.s32.totalorder %s15, 0
    %p63 = por %p61, %p62
    %s65 = sadd.s32 %s64, 1
    %p68 = scmp.eq.s32.totalorder %s9, 1
    %p69 = scmp.ne.s32.totalorder %s64, %s66
    %p70 = scmp.eq.s32.totalorder %s9, 0
    %p71 = por %p69, %p70
    %p72 = scmp.ne.s32.totalorder %s64, %s66
    %p73 = scmp.eq.s32.totalorder %s14, 1
    %p74 = por %p72, %p73
    %p75 = scmp.ne.s32.totalorder %s66, %s67
    %p76 = scmp.eq.s32.totalorder %s14, 0
    %p77 = por %p75, %p76
    %p78 = scmp.ne.s32.totalorder %s66, %s67
    %p79 = scmp.eq.s32.totalorder %s15, 1
    %p80 = por %p78, %p79
    %p82 = scmp.ne.s32.totalorder %s67, %s81
    %p83 = scmp.eq.s32.totalorder %s15, 0
    %p84 = por %p82, %p83
    %s85 = ssub.s32 %s9, %s16
    %p86 = scmp.eq.s32.totalorder %s85, 0
    %s88 = sadd.s32 %s87, 1
    %s89 = scalar_select %p86, %s87, %s88
    %p92 = pneg %p86
    %p93 = scmp.eq.s32.totalorder %s9, 1
    %p94 = por %p92, %p93
    %p95 = scmp.ne.s32.totalorder %s87, %s90
    %p96 = scmp.eq.s32.totalorder %s9, 0
    %p97 = por %p95, %p96
    %p98 = scmp.ne.s32.totalorder %s87, %s90
    %p99 = scmp.eq.s32.totalorder %s14, 1
    %p100 = por %p98, %p99
    %p101 = scmp.ne.s32.totalorder %s90, %s91
    %p102 = scmp.eq.s32.totalorder %s14, 0
    %p103 = por %p101, %p102
    %p104 = scmp.ne.s32.totalorder %s90, %s91
    %p105 = scmp.eq.s32.totalorder %s15, 1
    %p106 = por %p104, %p105
    %p108 = scmp.ne.s32.totalorder %s91, %s107
    %p109 = scmp.eq.s32.totalorder %s15, 0
    %p110 = por %p108, %p109
    %p111 = scmp.le.s32.totalorder 1, %s9
    %p112 = scmp.lt.s32.totalorder %s9, 3
    %p113 = pnand %p111, %p112
    %p114 = pneg %p113
    // Predicated region
    $region9: #{generator_forward.12} parent=5 // pred_check
      _
    $region10: #{generator_forward.12} parent=5 // pred_check_branch
      %116 = sbr.rel (%p113) target = $region12
    $region11: #{generator_forward.12} parent=5 // pred_region
      %s117 = ssub.s32 %s9, 1
      // Predicated region
      $region13: #{generator_forward.12} parent=11 // pred_check
        %p118 = pneg %p56
      $region14: #{generator_forward.12} parent=11 // pred_check_branch
        %120 = sbr.rel (%p118) target = $region16
      $region15: #{generator_forward.12} parent=11 // pred_region
        _
      $region16: #{generator_forward.12} parent=11 // pred_fallthru
        _
      // Predicated region
      $region17: #{generator_forward.12} parent=11 // pred_check
        %p121 = pneg %p77
      $region18: #{generator_forward.12} parent=11 // pred_check_branch
        %123 = sbr.rel (%p121) target = $region20
      $region19: #{generator_forward.12} parent=11 // pred_region
        _
      $region20: #{generator_forward.12} parent=11 // pred_fallthru
        _
    $region12: #{generator_forward.12} parent=5 // pred_fallthru
      _
    %p124 = scmp.lt.s32.totalorder %s9, 2
    // Predicated region
    $region21: #{generator_forward.12} parent=5 // pred_check
      %p125 = pneg %p124
    $region22: #{generator_forward.12} parent=5 // pred_check_branch
      %127 = sbr.rel (%p125) target = $region24
    $region23: #{generator_forward.12} parent=5 // pred_region
      // Predicated region
      $region25: #{generator_forward.12} parent=23 // pred_check
        %p128 = pneg %p29
      $region26: #{generator_forward.12} parent=23 // pred_check_branch
        %130 = sbr.rel (%p128) target = $region28
      $region27: #{generator_forward.12} parent=23 // pred_region
        %p131 = scmp.lt.s32.totalorder %s9, 1
        %s132 = scalar_select %p131, %s9, 1
        %s133 = smul.addr %s132, 4
        %s134 = smul.addr %s133, 4
        %s135 = scalar_lea.vmem %s0, %s134
      $region28: #{generator_forward.12} parent=23 // pred_fallthru
        _
    $region24: #{generator_forward.12} parent=5 // pred_fallthru
      _
    %p136 = scmp.le.s32.totalorder 1, %s9
    %p137 = scmp.lt.s32.totalorder %s9, 3
    %p138 = pnand %p136, %p137
    %p139 = pneg %p138
    // Predicated region
    $region29: #{generator_forward.12} parent=5 // pred_check
      _
    $region30: #{generator_forward.12} parent=5 // pred_check_branch
      %141 = sbr.rel (%p138) target = $region32
    $region31: #{generator_forward.12} parent=5 // pred_region
      %s142 = ssub.s32 %s9, 1
      %p143 = scmp.lt.s32.totalorder %s14, 1
      %s144 = scalar_select %p143, %s14, 1
      %s145 = smul.addr %s144, 4
      %s146 = smul.addr %s145, 4
      %s147 = scalar_lea.vmem %s0, %s146
      %p148 = pneg %p35
      %p149 = pneg %p32
      %p150 = pneg %p56
      %p151 = pneg %p53
      %p152 = pneg %p77
      %p153 = pneg %p74
      %p154 = pneg %p103
      %p155 = pneg %p100
      %p156 = scmp.lt.s32.totalorder %s14, 1
      %s157 = scalar_select %p156, %s14, 1
      %s158 = smul.addr %s157, 2
      %s159 = smul.addr %s158, 8
      %s160 = scalar_lea.vmem %s3, %s159
      %p161 = scmp.lt.s32.totalorder %s14, 1
      %s162 = scalar_select %p161, %s14, 1
      %s163 = smul.addr %s162, 4
      %s164 = smul.addr %s163, 4
      %s165 = scalar_lea.vmem %s0, %s164
      %p166 = scmp.lt.s32.totalorder %s14, 1
      %s167 = scalar_select %p166, %s14, 1
      %s168 = smul.addr %s167, 2
      %s169 = smul.addr %s168, 8
      %s170 = scalar_lea.vmem %s3, %s169
      %v172 = vld [vmem:[%s165] sm:$0xff]
      %v173 = vld [vmem:[%s165 + $0x8] sm:$0xff]
      %v174 = vld [vmem:[%s1] sm:$0xf]
      %v175 = vld [vmem:[%s1 + $0x4] sm:$0xf]
      %v176 = vld [vmem:[%s1 + $0x8] sm:$0xf]
      %v177 = vld [vmem:[%s1 + $0xc] sm:$0xf]
      %v178 = vld [vmem:[%s1 + $0x10] sm:$0xf]
      %v179 = vld [vmem:[%s1 + $0x14] sm:$0xf]
      %v180 = vld [vmem:[%s1 + $0x18] sm:$0xf]
      %v181 = vld [vmem:[%s1 + $0x1c] sm:$0xf]
      %v182 = vld [vmem:[%s1 + $0x20] sm:$0xf]
      %v183 = vld [vmem:[%s1 + $0x24] sm:$0xf]
      %v184 = vld [vmem:[%s1 + $0x28] sm:$0xf]
      %v185 = vld [vmem:[%s1 + $0x2c] sm:$0xf]
      %v186 = vld [vmem:[%s1 + $0x30] sm:$0xf]
      %v187 = vld [vmem:[%s1 + $0x34] sm:$0xf]
      %v188 = vld [vmem:[%s1 + $0x38] sm:$0xf]
      %v189 = vld [vmem:[%s1 + $0x3c] sm:$0xf]
      %v190 = vld [vmem:[%s1 + $0x40] sm:$0xf]
      %v191 = vld [vmem:[%s1 + $0x44] sm:$0xf]
      %v192 = vld [vmem:[%s1 + $0x48] sm:$0xf]
      %v193 = vld [vmem:[%s1 + $0x4c] sm:$0xf]
      %v194 = vld [vmem:[%s1 + $0x50] sm:$0xf]
      %v195 = vld [vmem:[%s1 + $0x54] sm:$0xf]
      %v196 = vld [vmem:[%s1 + $0x58] sm:$0xf]
      %v197 = vld [vmem:[%s1 + $0x5c] sm:$0xf]
      %v198 = vld [vmem:[%s1 + $0x60] sm:$0xf]
      %v199 = vld [vmem:[%s1 + $0x64] sm:$0xf]
      %v200 = vld [vmem:[%s1 + $0x68] sm:$0xf]
      %v201 = vld [vmem:[%s1 + $0x6c] sm:$0xf]
      %v202 = vld [vmem:[%s1 + $0x70] sm:$0xf]
      %v203 = vld [vmem:[%s1 + $0x74] sm:$0xf]
      %v204 = vld [vmem:[%s1 + $0x78] sm:$0xf]
      %v205 = vld [vmem:[%s1 + $0x7c] sm:$0xf]
      %v206 = vld [vmem:[%s2] sm:$0x1]
      %v208 = vlaneseq
      %v209 = vshrl.u32 %v208, 7
      %v210 = vsub.s32 0, %v209
      %v211 = vrot.slane %v206, %v210
      %v215 = vunpack.c.l.b16 %v172
      %v216 = vunpack.c.h.b16 %v172
      %v217 = vunpack.c.l.b16 %v173
      %v218 = vunpack.c.h.b16 %v173
      %v219 = vpack.c.b16 %v217, %v215
      %v220 = vpack.c.b16 %v218, %v216
      %v255 = vunpack.c.l.b16 %v174
      %v256 = vunpack.c.l.b16 %v175
      %v257 = vunpack.c.l.b16 %v176
      %v258 = vunpack.c.l.b16 %v177
      %v259 = vunpack.c.l.b16 %v178
      %v260 = vunpack.c.l.b16 %v179
      %v261 = vunpack.c.l.b16 %v180
      %v262 = vunpack.c.l.b16 %v181
      %v263 = vunpack.c.l.b16 %v182
      %v264 = vunpack.c.l.b16 %v183
      %v265 = vunpack.c.l.b16 %v184
      %v266 = vunpack.c.l.b16 %v185
      %v267 = vunpack.c.l.b16 %v186
      %v268 = vunpack.c.l.b16 %v187
      %v269 = vunpack.c.l.b16 %v188
      %v270 = vunpack.c.l.b16 %v189
      %v271 = vunpack.c.l.b16 %v190
      %v272 = vunpack.c.l.b16 %v191
      %v273 = vunpack.c.l.b16 %v192
      %v274 = vunpack.c.l.b16 %v193
      %v275 = vunpack.c.l.b16 %v194
      %v276 = vunpack.c.l.b16 %v195
      %v277 = vunpack.c.l.b16 %v196
      %v278 = vunpack.c.l.b16 %v197
      %v279 = vunpack.c.l.b16 %v198
      %v280 = vunpack.c.l.b16 %v199
      %v281 = vunpack.c.l.b16 %v200
      %v282 = vunpack.c.l.b16 %v201
      %v283 = vunpack.c.l.b16 %v202
      %v284 = vunpack.c.l.b16 %v203
      %v285 = vunpack.c.l.b16 %v204
      %v286 = vunpack.c.l.b16 %v205
      %v287 = vpack.c.b16 %v256, %v255
      %v288 = vpack.c.b16 %v258, %v257
      %v289 = vpack.c.b16 %v260, %v259
      %v290 = vpack.c.b16 %v262, %v261
      %v291 = vpack.c.b16 %v264, %v263
      %v292 = vpack.c.b16 %v266, %v265
      %v293 = vpack.c.b16 %v268, %v267
      %v294 = vpack.c.b16 %v270, %v269
      %v295 = vpack.c.b16 %v272, %v271
      %v296 = vpack.c.b16 %v274, %v273
      %v297 = vpack.c.b16 %v276, %v275
      %v298 = vpack.c.b16 %v278, %v277
      %v299 = vpack.c.b16 %v280, %v279
      %v300 = vpack.c.b16 %v282, %v281
      %v301 = vpack.c.b16 %v284, %v283
      %v302 = vpack.c.b16 %v286, %v285
      %319 = vmatprep.subr.bf16.mxu0 0
      %320 = vmatpush1.bf16.msra.mxu0 %v287
      %321 = vmatprep.subr.bf16.mxu0 0
      %322 = vmatpush1.bf16.msra.mxu0 %v288
      %323 = vmatprep.subr.bf16.mxu0 0
      %324 = vmatpush1.bf16.msra.mxu0 %v289
      %325 = vmatprep.subr.bf16.mxu0 0
      %326 = vmatpush1.bf16.msra.mxu0 %v290
      %327 = vmatprep.subr.bf16.mxu0 0
      %328 = vmatpush1.bf16.msra.mxu0 %v291
      %329 = vmatprep.subr.bf16.mxu0 0
      %330 = vmatpush1.bf16.msra.mxu0 %v292
      %331 = vmatprep.subr.bf16.mxu0 0
      %332 = vmatpush1.bf16.msra.mxu0 %v293
      %333 = vmatprep.subr.bf16.mxu0 0
      %334 = vmatpush1.bf16.msra.mxu0 %v294
      %335 = vmatprep.subr.bf16.mxu0 0
      %336 = vmatpush1.bf16.msra.mxu0 %v295
      %337 = vmatprep.subr.bf16.mxu0 0
      %338 = vmatpush1.bf16.msra.mxu0 %v296
      %339 = vmatprep.subr.bf16.mxu0 0
      %340 = vmatpush1.bf16.msra.mxu0 %v297
      %341 = vmatprep.subr.bf16.mxu0 0
      %342 = vmatpush1.bf16.msra.mxu0 %v298
      %343 = vmatprep.subr.bf16.mxu0 0
      %344 = vmatpush1.bf16.msra.mxu0 %v299
      %345 = vmatprep.subr.bf16.mxu0 0
      %346 = vmatpush1.bf16.msra.mxu0 %v300
      %347 = vmatprep.subr.bf16.mxu0 0
      %348 = vmatpush1.bf16.msra.mxu0 %v301
      %349 = vmatprep.subr.bf16.mxu0 0
      %350 = vmatpush1.bf16.msra.mxu0 %v302
      %351 = vmatprep.mubr.bf16.mxu0 %v220
      %352 = vmatmul.mubr.bf16.gmra.mrb[0].mxu0 %v219
      %v353 = vpop.f32.mrb[0].mxu0
      %v354 = vadd.f32 %v211, %v353
      %v355 = vpop.f32.mrb[0].mxu0
      %v356 = vpop.f32.mrb[0].mxu0
      %v357 = vadd.f32 %v211, %v356
      %v358 = vpop.f32.mrb[0].mxu0
      %359 = vdwg.mxu0
      %v360 = vadd.f32 %v354, %v357
      %v361 = vrot.slane %v360, 4
      %v362 = vadd.f32 %v360, %v361
      %v363 = vrot.slane %v362, 2
      %v364 = vadd.f32 %v362, %v363
      %v365 = vrot.slane %v364, 1
      %v366 = vadd.f32 %v364, %v365
      %v367 = vmul.f32 %v366, 0.0625
      %v368 = vmul.f32 %v354, %v354
      %v369 = vmul.f32 %v357, %v357
      %v370 = vadd.f32 %v368, %v369
      %v371 = vrot.slane %v370, 4
      %v372 = vadd.f32 %v370, %v371
      %v373 = vrot.slane %v372, 2
      %v374 = vadd.f32 %v372, %v373
      %v375 = vrot.slane %v374, 1
      %v376 = vadd.f32 %v374, %v375
      %v377 = vmul.f32 %v376, 0.0625
      %v378 = vmul.f32 %v367, %v367
      %v379 = vsub.f32 %v377, %v378
      %v380 = vmax.f32 %v379, 0.0
      %v381 = vsub.f32 %v354, %v367
      %v382 = vsub.f32 %v357, %v367
      %v383 = vadd.f32 %v380, 1e-05
      %v384 = vrsqrt.pop %v383
      %v385 = vmul.f32 %v381, %v384
      %v386 = vmul.f32 %v382, %v384
      %v387 = vmax.f32 %v385, 0.0
      %v388 = vmax.f32 %v386, 0.0
      %389 = vst [vmem:[%s170] sm:$0xff] %v387
      %390 = vst [vmem:[%s170 + $0x8] sm:$0xff] %v388
      %p391 = scmp.lt.s32.totalorder %s14, 1
      %s392 = scalar_select %p391, %s14, 1
      %s393 = smul.addr %s392, 2
      %s394 = smul.addr %s393, 8
      %s395 = scalar_lea.vmem %s3, %s394
      // Predicated region
      $region33: #{generator_forward.12} parent=31 // pred_check
        %p396 = pneg %p100
      $region34: #{generator_forward.12} parent=31 // pred_check_branch
        %398 = sbr.rel (%p396) target = $region36
      $region35: #{generator_forward.12} parent=31 // pred_region
        _
      $region36: #{generator_forward.12} parent=31 // pred_fallthru
        _
    $region32: #{generator_forward.12} parent=5 // pred_fallthru
      _
    %p399 = scmp.le.s32.totalorder 2, %s9
    // Predicated region
    $region37: #{generator_forward.12} parent=5 // pred_check
      %p400 = pneg %p399
    $region38: #{generator_forward.12} parent=5 // pred_check_branch
      %402 = sbr.rel (%p400) target = $region40
    $region39: #{generator_forward.12} parent=5 // pred_region
      %s403 = ssub.s32 %s9, 2
      // Predicated region
      $region41: #{generator_forward.12} parent=39 // pred_check
        %p404 = pneg %p106
      $region42: #{generator_forward.12} parent=39 // pred_check_branch
        %406 = sbr.rel (%p404) target = $region44
      $region43: #{generator_forward.12} parent=39 // pred_region
        %p407 = scmp.lt.s32.totalorder %s15, 1
        %s408 = scalar_select %p407, %s15, 1
        %s409 = smul.addr %s408, 2
        %s410 = smul.addr %s409, 8
        %s411 = scalar_lea.vmem %s3, %s410
      $region44: #{generator_forward.12} parent=39 // pred_fallthru
        _
    $region40: #{generator_forward.12} parent=5 // pred_fallthru
      _
  $region6: #{generator_forward.12} parent=0 // loop_footer
    %s13 = sadd.s32 1, %s9
  $region7: #{generator_forward.12} parent=0 // loop_footer_branch
    %8 = sbr.rel target = $region3
  $region8: #{generator_forward.12} parent=0 // loop_exit
    _

// kernel: generator_forward.14
$region0: #{generator_forward.14}
  #allocation0 [shape = 'u32[]', space=smem, size = 0x4, offset = 0x4, fixed_abs, tag = 'smem constant byte address 0x4 - core index']
  #allocation1 [shape = 'u32[144,128]{1,0:T(1,128)}', space=vmem, size = 0x12000, scoped, tag = 'internal scratch']
  %s0 = inlined_call_operand.vmem [shape: bf16[2,16,384], index: 0, kind: input, shape index: {}]
  %s1 = inlined_call_operand.vmem [shape: bf16[384,128], index: 1, kind: input, shape index: {}]
  %s2 = inlined_call_operand.vmem [shape: f32[1,128], index: 2, kind: input, shape index: {}]
  %s3 = inlined_call_operand.vmem [shape: f32[2,16,128], index: 3, kind: input, shape index: {}]
  %s4 = inlined_call_operand.vmem [shape: f32[2,16,128], index: 4, kind: output, shape index: {}]
  %s5 = sld [smem:[#allocation0]]
  $region49: #{generator_forward.14} parent=0
    _
  %s7 = ssub.s32 1, %s5
  %s8 = scalar_select 0, %s7, %s5
  loop: start=0, step=1, limit=4
  $region2: #{generator_forward.14} parent=0 // loop_pre_header
    _
  $region3: #{generator_forward.14} parent=0 // loop_header
    %s10 = sphi 0, %s14
    %p11 = scmp.ge.s32.totalorder %s10, 4
    %s20 = sphi 0, %s22
    %s23 = sphi 0, %s20
    %s24 = sphi 0, %s23
    %s40 = sphi 0, %s24
    %s44 = sphi 0, %s44
    %s46 = sphi 0, %s44
    %s47 = sphi 0, %s46
    %s61 = sphi 0, %s47
    %s65 = sphi 0, %s65
    %s67 = sphi 0, %s65
    %s68 = sphi 0, %s67
    %s82 = sphi 0, %s68
    %s88 = sphi 0, %s90
    %s91 = sphi 0, %s88
    %s92 = sphi 0, %s91
    %s108 = sphi 0, %s92
    %s114 = sphi 0, %s116
    %s117 = sphi 0, %s114
    %s118 = sphi 0, %s117
    %s134 = sphi 0, %s118
  $region4: #{generator_forward.14} parent=0 // loop_header_branch
    %13 = sbr.rel (%p11) target = $region8
  $region5: #{generator_forward.14} parent=0 // loop_body
    %s15 = ssub.s32 %s10, 1
    %s16 = ssub.s32 %s10, 2
    %s17 = sadd.s32 %s10, 1
    %s18 = ssub.s32 %s10, %s17
    %p19 = scmp.eq.s32.totalorder %s18, 0
    %s21 = sadd.s32 %s20, 1
    %s22 = scalar_select %p19, %s20, %s21
    %p25 = pneg %p19
    %p26 = scmp.eq.s32.totalorder %s10, 1
    %p27 = por %p25, %p26
    %p28 = scmp.ne.s32.totalorder %s20, %s23
    %p29 = scmp.eq.s32.totalorder %s10, 0
    %p30 = por %p28, %p29
    %p31 = scmp.ne.s32.totalorder %s20, %s23
    %p32 = scmp.eq.s32.totalorder %s15, 1
    %p33 = por %p31, %p32
    %p34 = scmp.ne.s32.totalorder %s23, %s24
    %p35 = scmp.eq.s32.totalorder %s15, 0
    %p36 = por %p34, %p35
    %p37 = scmp.ne.s32.totalorder %s23, %s24
    %p38 = scmp.eq.s32.totalorder %s16, 1
    %p39 = por %p37, %p38
    %p41 = scmp.ne.s32.totalorder %s24, %s40
    %p42 = scmp.eq.s32.totalorder %s16, 0
    %p43 = por %p41, %p42
    %s45 = sadd.s32 %s44, 1
    %p48 = scmp.eq.s32.totalorder %s10, 1
    %p49 = scmp.ne.s32.totalorder %s44, %s46
    %p50 = scmp.eq.s32.totalorder %s10, 0
    %p51 = por %p49, %p50
    %p52 = scmp.ne.s32.totalorder %s44, %s46
    %p53 = scmp.eq.s32.totalorder %s15, 1
    %p54 = por %p52, %p53
    %p55 = scmp.ne.s32.totalorder %s46, %s47
    %p56 = scmp.eq.s32.totalorder %s15, 0
    %p57 = por %p55, %p56
    %p58 = scmp.ne.s32.totalorder %s46, %s47
    %p59 = scmp.eq.s32.totalorder %s16, 1
    %p60 = por %p58, %p59
    %p62 = scmp.ne.s32.totalorder %s47, %s61
    %p63 = scmp.eq.s32.totalorder %s16, 0
    %p64 = por %p62, %p63
    %s66 = sadd.s32 %s65, 1
    %p69 = scmp.eq.s32.totalorder %s10, 1
    %p70 = scmp.ne.s32.totalorder %s65, %s67
    %p71 = scmp.eq.s32.totalorder %s10, 0
    %p72 = por %p70, %p71
    %p73 = scmp.ne.s32.totalorder %s65, %s67
    %p74 = scmp.eq.s32.totalorder %s15, 1
    %p75 = por %p73, %p74
    %p76 = scmp.ne.s32.totalorder %s67, %s68
    %p77 = scmp.eq.s32.totalorder %s15, 0
    %p78 = por %p76, %p77
    %p79 = scmp.ne.s32.totalorder %s67, %s68
    %p80 = scmp.eq.s32.totalorder %s16, 1
    %p81 = por %p79, %p80
    %p83 = scmp.ne.s32.totalorder %s68, %s82
    %p84 = scmp.eq.s32.totalorder %s16, 0
    %p85 = por %p83, %p84
    %s86 = ssub.s32 %s10, %s17
    %p87 = scmp.eq.s32.totalorder %s86, 0
    %s89 = sadd.s32 %s88, 1
    %s90 = scalar_select %p87, %s88, %s89
    %p93 = pneg %p87
    %p94 = scmp.eq.s32.totalorder %s10, 1
    %p95 = por %p93, %p94
    %p96 = scmp.ne.s32.totalorder %s88, %s91
    %p97 = scmp.eq.s32.totalorder %s10, 0
    %p98 = por %p96, %p97
    %p99 = scmp.ne.s32.totalorder %s88, %s91
    %p100 = scmp.eq.s32.totalorder %s15, 1
    %p101 = por %p99, %p100
    %p102 = scmp.ne.s32.totalorder %s91, %s92
    %p103 = scmp.eq.s32.totalorder %s15, 0
    %p104 = por %p102, %p103
    %p105 = scmp.ne.s32.totalorder %s91, %s92
    %p106 = scmp.eq.s32.totalorder %s16, 1
    %p107 = por %p105, %p106
    %p109 = scmp.ne.s32.totalorder %s92, %s108
    %p110 = scmp.eq.s32.totalorder %s16, 0
    %p111 = por %p109, %p110
    %s112 = ssub.s32 %s10, %s17
    %p113 = scmp.eq.s32.totalorder %s112, 0
    %s115 = sadd.s32 %s114, 1
    %s116 = scalar_select %p113, %s114, %s115
    %p119 = pneg %p113
    %p120 = scmp.eq.s32.totalorder %s10, 1
    %p121 = por %p119, %p120
    %p122 = scmp.ne.s32.totalorder %s114, %s117
    %p123 = scmp.eq.s32.totalorder %s10, 0
    %p124 = por %p122, %p123
    %p125 = scmp.ne.s32.totalorder %s114, %s117
    %p126 = scmp.eq.s32.totalorder %s15, 1
    %p127 = por %p125, %p126
    %p128 = scmp.ne.s32.totalorder %s117, %s118
    %p129 = scmp.eq.s32.totalorder %s15, 0
    %p130 = por %p128, %p129
    %p131 = scmp.ne.s32.totalorder %s117, %s118
    %p132 = scmp.eq.s32.totalorder %s16, 1
    %p133 = por %p131, %p132
    %p135 = scmp.ne.s32.totalorder %s118, %s134
    %p136 = scmp.eq.s32.totalorder %s16, 0
    %p137 = por %p135, %p136
    %p138 = scmp.le.s32.totalorder 1, %s10
    %p139 = scmp.lt.s32.totalorder %s10, 3
    %p140 = pnand %p138, %p139
    %p141 = pneg %p140
    // Predicated region
    $region9: #{generator_forward.14} parent=5 // pred_check
      _
    $region10: #{generator_forward.14} parent=5 // pred_check_branch
      %143 = sbr.rel (%p140) target = $region12
    $region11: #{generator_forward.14} parent=5 // pred_region
      %s144 = ssub.s32 %s10, 1
      // Predicated region
      $region13: #{generator_forward.14} parent=11 // pred_check
        %p145 = pneg %p57
      $region14: #{generator_forward.14} parent=11 // pred_check_branch
        %147 = sbr.rel (%p145) target = $region16
      $region15: #{generator_forward.14} parent=11 // pred_region
        _
      $region16: #{generator_forward.14} parent=11 // pred_fallthru
        _
      // Predicated region
      $region17: #{generator_forward.14} parent=11 // pred_check
        %p148 = pneg %p78
      $region18: #{generator_forward.14} parent=11 // pred_check_branch
        %150 = sbr.rel (%p148) target = $region20
      $region19: #{generator_forward.14} parent=11 // pred_region
        _
      $region20: #{generator_forward.14} parent=11 // pred_fallthru
        _
    $region12: #{generator_forward.14} parent=5 // pred_fallthru
      _
    %p151 = scmp.lt.s32.totalorder %s10, 2
    // Predicated region
    $region21: #{generator_forward.14} parent=5 // pred_check
      %p152 = pneg %p151
    $region22: #{generator_forward.14} parent=5 // pred_check_branch
      %154 = sbr.rel (%p152) target = $region24
    $region23: #{generator_forward.14} parent=5 // pred_region
      // Predicated region
      $region25: #{generator_forward.14} parent=23 // pred_check
        %p155 = pneg %p30
      $region26: #{generator_forward.14} parent=23 // pred_check_branch
        %157 = sbr.rel (%p155) target = $region28
      $region27: #{generator_forward.14} parent=23 // pred_region
        %p158 = scmp.lt.s32.totalorder %s10, 1
        %s159 = scalar_select %p158, %s10, 1
        %s160 = smul.addr %s159, 6
        %s161 = smul.addr %s160, 4
        %s162 = scalar_lea.vmem %s0, %s161
      $region28: #{generator_forward.14} parent=23 // pred_fallthru
        _
      // Predicated region
      $region29: #{generator_forward.14} parent=23 // pred_check
        %p163 = pneg %p98
      $region30: #{generator_forward.14} parent=23 // pred_check_branch
        %165 = sbr.rel (%p163) target = $region32
      $region31: #{generator_forward.14} parent=23 // pred_region
        %p166 = scmp.lt.s32.totalorder %s10, 1
        %s167 = scalar_select %p166, %s10, 1
        %s168 = smul.addr %s167, 2
        %s169 = smul.addr %s168, 8
        %s170 = scalar_lea.vmem %s3, %s169
      $region32: #{generator_forward.14} parent=23 // pred_fallthru
        _
    $region24: #{generator_forward.14} parent=5 // pred_fallthru
      _
    %p171 = scmp.le.s32.totalorder 1, %s10
    %p172 = scmp.lt.s32.totalorder %s10, 3
    %p173 = pnand %p171, %p172
    %p174 = pneg %p173
    // Predicated region
    $region33: #{generator_forward.14} parent=5 // pred_check
      _
    $region34: #{generator_forward.14} parent=5 // pred_check_branch
      %176 = sbr.rel (%p173) target = $region36
    $region35: #{generator_forward.14} parent=5 // pred_region
      %s177 = ssub.s32 %s10, 1
      %p178 = scmp.lt.s32.totalorder %s15, 1
      %s179 = scalar_select %p178, %s15, 1
      %s180 = smul.addr %s179, 6
      %s181 = smul.addr %s180, 4
      %s182 = scalar_lea.vmem %s0, %s181
      %p183 = pneg %p36
      %p184 = pneg %p33
      %p185 = pneg %p57
      %p186 = pneg %p54
      %p187 = pneg %p78
      %p188 = pneg %p75
      %p189 = scmp.lt.s32.totalorder %s15, 1
      %s190 = scalar_select %p189, %s15, 1
      %s191 = smul.addr %s190, 2
      %s192 = smul.addr %s191, 8
      %s193 = scalar_lea.vmem %s3, %s192
      %p194 = pneg %p104
      %p195 = pneg %p101
      %p196 = pneg %p130
      %p197 = pneg %p127
      %p198 = scmp.lt.s32.totalorder %s15, 1
      %s199 = scalar_select %p198, %s15, 1
      %s200 = smul.addr %s199, 2
      %s201 = smul.addr %s200, 8
      %s202 = scalar_lea.vmem %s4, %s201
      %p203 = scmp.lt.s32.totalorder %s15, 1
      %s204 = scalar_select %p203, %s15, 1
      %s205 = smul.addr %s204, 6
      %s206 = smul.addr %s205, 4
      %s207 = scalar_lea.vmem %s0, %s206
      %p208 = scmp.lt.s32.totalorder %s15, 1
      %s209 = scalar_select %p208, %s15, 1
      %s210 = smul.addr %s209, 2
      %s211 = smul.addr %s210, 8
      %s212 = scalar_lea.vmem %s3, %s211
      %p213 = scmp.lt.s32.totalorder %s15, 1
      %s214 = scalar_select %p213, %s15, 1
      %s215 = smul.addr %s214, 2
      %s216 = smul.addr %s215, 8
      %s217 = scalar_lea.vmem %s4, %s216
      %v219 = vld [vmem:[%s207] sm:$0xff]
      %v220 = vld [vmem:[%s207 + $0x8] sm:$0xf]
      %v221 = vld [vmem:[%s207 + $0xc] sm:$0xff]
      %v222 = vld [vmem:[%s207 + $0x14] sm:$0xf]
      %v223 = vld [vmem:[%s1] sm:$0xf]
      %v224 = vld [vmem:[%s1 + $0x4] sm:$0xf]
      %v225 = vld [vmem:[%s1 + $0x8] sm:$0xf]
      %v226 = vld [vmem:[%s1 + $0xc] sm:$0xf]
      %v227 = vld [vmem:[%s1 + $0x10] sm:$0xf]
      %v228 = vld [vmem:[%s1 + $0x14] sm:$0xf]
      %v229 = vld [vmem:[%s1 + $0x18] sm:$0xf]
      %v230 = vld [vmem:[%s1 + $0x1c] sm:$0xf]
      %v231 = vld [vmem:[%s1 + $0x20] sm:$0xf]
      %v232 = vld [vmem:[%s1 + $0x24] sm:$0xf]
      %v233 = vld [vmem:[%s1 + $0x28] sm:$0xf]
      %v234 = vld [vmem:[%s1 + $0x2c] sm:$0xf]
      %v235 = vld [vmem:[%s1 + $0x30] sm:$0xf]
      %v236 = vld [vmem:[%s1 + $0x34] sm:$0xf]
      %v237 = vld [vmem:[%s1 + $0x38] sm:$0xf]
      %v238 = vld [vmem:[%s1 + $0x3c] sm:$0xf]
      %v239 = vld [vmem:[%s1 + $0x40] sm:$0xf]
      %v240 = vld [vmem:[%s1 + $0x44] sm:$0xf]
      %v241 = vld [vmem:[%s1 + $0x48] sm:$0xf]
      %v242 = vld [vmem:[%s1 + $0x4c] sm:$0xf]
      %v243 = vld [vmem:[%s1 + $0x50] sm:$0xf]
      %v244 = vld [vmem:[%s1 + $0x54] sm:$0xf]
      %v245 = vld [vmem:[%s1 + $0x58] sm:$0xf]
      %v246 = vld [vmem:[%s1 + $0x5c] sm:$0xf]
      %v247 = vld [vmem:[%s1 + $0x60] sm:$0xf]
      %v248 = vld [vmem:[%s1 + $0x64] sm:$0xf]
      %v249 = vld [vmem:[%s1 + $0x68] sm:$0xf]
      %v250 = vld [vmem:[%s1 + $0x6c] sm:$0xf]
      %v251 = vld [vmem:[%s1 + $0x70] sm:$0xf]
      %v252 = vld [vmem:[%s1 + $0x74] sm:$0xf]
      %v253 = vld [vmem:[%s1 + $0x78] sm:$0xf]
      %v254 = vld [vmem:[%s1 + $0x7c] sm:$0xf]
      %v255 = vld [vmem:[%s1 + $0x80] sm:$0xf]
      %v256 = vld [vmem:[%s1 + $0x84] sm:$0xf]
      %v257 = vld [vmem:[%s1 + $0x88] sm:$0xf]
      %v258 = vld [vmem:[%s1 + $0x8c] sm:$0xf]
      %v259 = vld [vmem:[%s1 + $0x90] sm:$0xf]
      %v260 = vld [vmem:[%s1 + $0x94] sm:$0xf]
      %v261 = vld [vmem:[%s1 + $0x98] sm:$0xf]
      %v262 = vld [vmem:[%s1 + $0x9c] sm:$0xf]
      %v263 = vld [vmem:[%s1 + $0xa0] sm:$0xf]
      %v264 = vld [vmem:[%s1 + $0xa4] sm:$0xf]
      %v265 = vld [vmem:[%s1 + $0xa8] sm:$0xf]
      %v266 = vld [vmem:[%s1 + $0xac] sm:$0xf]
      %v267 = vld [vmem:[%s1 + $0xb0] sm:$0xf]
      %v268 = vld [vmem:[%s1 + $0xb4] sm:$0xf]
      %v269 = vld [vmem:[%s1 + $0xb8] sm:$0xf]
      %v270 = vld [vmem:[%s1 + $0xbc] sm:$0xf]
      %v271 = vld [vmem:[%s2] sm:$0x1]
      %v273 = vlaneseq
      %v274 = vshrl.u32 %v273, 7
      %v275 = vsub.s32 0, %v274
      %v276 = vrot.slane %v271, %v275
      %v282 = vunpack.c.l.b16 %v219
      %v283 = vunpack.c.h.b16 %v219
      %v284 = vunpack.c.l.b16 %v220
      %v285 = vunpack.c.l.b16 %v221
      %v286 = vunpack.c.h.b16 %v221
      %v287 = vunpack.c.l.b16 %v222
      %v288 = vpack.c.b16 %v285, %v282
      %v289 = vpack.c.b16 %v286, %v283
      %v290 = vpack.c.b16 %v287, %v284
      %v342 = vunpack.c.l.b16 %v223
      %v343 = vunpack.c.l.b16 %v224
      %v344 = vunpack.c.l.b16 %v225
      %v345 = vunpack.c.l.b16 %v226
      %v346 = vunpack.c.l.b16 %v227
      %v347 = vunpack.c.l.b16 %v228
      %v348 = vunpack.c.l.b16 %v229
      %v349 = vunpack.c.l.b16 %v230
      %v350 = vunpack.c.l.b16 %v231
      %v351 = vunpack.c.l.b16 %v232
      %v352 = vunpack.c.l.b16 %v233
      %v353 = vunpack.c.l.b16 %v234
      %v354 = vunpack.c.l.b16 %v235
      %v355 = vunpack.c.l.b16 %v236
      %v356 = vunpack.c.l.b16 %v237
      %v357 = vunpack.c.l.b16 %v238
      %v358 = vunpack.c.l.b16 %v239
      %v359 = vunpack.c.l.b16 %v240
      %v360 = vunpack.c.l.b16 %v241
      %v361 = vunpack.c.l.b16 %v242
      %v362 = vunpack.c.l.b16 %v243
      %v363 = vunpack.c.l.b16 %v244
      %v364 = vunpack.c.l.b16 %v245
      %v365 = vunpack.c.l.b16 %v246
      %v366 = vunpack.c.l.b16 %v247
      %v367 = vunpack.c.l.b16 %v248
      %v368 = vunpack.c.l.b16 %v249
      %v369 = vunpack.c.l.b16 %v250
      %v370 = vunpack.c.l.b16 %v251
      %v371 = vunpack.c.l.b16 %v252
      %v372 = vunpack.c.l.b16 %v253
      %v373 = vunpack.c.l.b16 %v254
      %v374 = vunpack.c.l.b16 %v255
      %v375 = vunpack.c.l.b16 %v256
      %v376 = vunpack.c.l.b16 %v257
      %v377 = vunpack.c.l.b16 %v258
      %v378 = vunpack.c.l.b16 %v259
      %v379 = vunpack.c.l.b16 %v260
      %v380 = vunpack.c.l.b16 %v261
      %v381 = vunpack.c.l.b16 %v262
      %v382 = vunpack.c.l.b16 %v263
      %v383 = vunpack.c.l.b16 %v264
      %v384 = vunpack.c.l.b16 %v265
      %v385 = vunpack.c.l.b16 %v266
      %v386 = vunpack.c.l.b16 %v267
      %v387 = vunpack.c.l.b16 %v268
      %v388 = vunpack.c.l.b16 %v269
      %v389 = vunpack.c.l.b16 %v270
      %v390 = vpack.c.b16 %v343, %v342
      %v391 = vpack.c.b16 %v345, %v344
      %v392 = vpack.c.b16 %v347, %v346
      %v393 = vpack.c.b16 %v349, %v348
      %v394 = vpack.c.b16 %v351, %v350
      %v395 = vpack.c.b16 %v353, %v352
      %v396 = vpack.c.b16 %v355, %v354
      %v397 = vpack.c.b16 %v357, %v356
      %v398 = vpack.c.b16 %v359, %v358
      %v399 = vpack.c.b16 %v361, %v360
      %v400 = vpack.c.b16 %v363, %v362
      %v401 = vpack.c.b16 %v365, %v364
      %v402 = vpack.c.b16 %v367, %v366
      %v403 = vpack.c.b16 %v369, %v368
      %v404 = vpack.c.b16 %v371, %v370
      %v405 = vpack.c.b16 %v373, %v372
      %v406 = vpack.c.b16 %v375, %v374
      %v407 = vpack.c.b16 %v377, %v376
      %v408 = vpack.c.b16 %v379, %v378
      %v409 = vpack.c.b16 %v381, %v380
      %v410 = vpack.c.b16 %v383, %v382
      %v411 = vpack.c.b16 %v385, %v384
      %v412 = vpack.c.b16 %v387, %v386
      %v413 = vpack.c.b16 %v389, %v388
      %438 = vmatprep.subr.bf16.mxu0 0
      %439 = vmatpush1.bf16.msra.mxu0 %v390
      %440 = vmatprep.subr.bf16.mxu0 0
      %441 = vmatpush1.bf16.msra.mxu0 %v391
      %442 = vmatprep.subr.bf16.mxu0 0
      %443 = vmatpush1.bf16.msra.mxu0 %v392
      %444 = vmatprep.subr.bf16.mxu0 0
      %445 = vmatpush1.bf16.msra.mxu0 %v393
      %446 = vmatprep.subr.bf16.mxu0 0
      %447 = vmatpush1.bf16.msra.mxu0 %v394
      %448 = vmatprep.subr.bf16.mxu0 0
      %449 = vmatpush1.bf16.msra.mxu0 %v395
      %450 = vmatprep.subr.bf16.mxu0 0
      %451 = vmatpush1.bf16.msra.mxu0 %v396
      %452 = vmatprep.subr.bf16.mxu0 0
      %453 = vmatpush1.bf16.msra.mxu0 %v397
      %454 = vmatprep.subr.bf16.mxu0 0
      %455 = vmatpush1.bf16.msra.mxu0 %v398
      %456 = vmatprep.subr.bf16.mxu0 0
      %457 = vmatpush1.bf16.msra.mxu0 %v399
      %458 = vmatprep.subr.bf16.mxu0 0
      %459 = vmatpush1.bf16.msra.mxu0 %v400
      %460 = vmatprep.subr.bf16.mxu0 0
      %461 = vmatpush1.bf16.msra.mxu0 %v401
      %462 = vmatprep.subr.bf16.mxu0 0
      %463 = vmatpush1.bf16.msra.mxu0 %v402
      %464 = vmatprep.subr.bf16.mxu0 0
      %465 = vmatpush1.bf16.msra.mxu0 %v403
      %466 = vmatprep.subr.bf16.mxu0 0
      %467 = vmatpush1.bf16.msra.mxu0 %v404
      %468 = vmatprep.subr.bf16.mxu0 0
      %469 = vmatpush1.bf16.msra.mxu0 %v405
      %470 = vmatprep.mubr.bf16.mxu0 %v289
      %471 = vmatmul.mubr.bf16.gmra.mrb[0].mxu0 %v288
      %v472 = vpop.f32.mrb[0].mxu0
      %v473 = vadd.f32 %v276, %v472
      %v474 = vpop.f32.mrb[0].mxu0
      %v475 = vpop.f32.mrb[0].mxu0
      %v476 = vadd.f32 %v276, %v475
      %v477 = vpop.f32.mrb[0].mxu0
      %478 = vdwg.mxu0
      %479 = vmatprep.subr.bf16.mxu0 0
      %480 = vmatpush1.bf16.msra.mxu0 %v406
      %481 = vmatprep.subr.bf16.mxu0 0
      %482 = vmatpush1.bf16.msra.mxu0 %v407
      %483 = vmatprep.subr.bf16.mxu0 0
      %484 = vmatpush1.bf16.msra.mxu0 %v408
      %485 = vmatprep.subr.bf16.mxu0 0
      %486 = vmatpush1.bf16.msra.mxu0 %v409
      %487 = vmatprep.subr.bf16.mxu0 0
      %488 = vmatpush1.bf16.msra.mxu0 %v410
      %489 = vmatprep.subr.bf16.mxu0 0
      %490 = vmatpush1.bf16.msra.mxu0 %v411
      %491 = vmatprep.subr.bf16.mxu0 0
      %492 = vmatpush1.bf16.msra.mxu0 %v412
      %493 = vmatprep.subr.bf16.mxu0 0
      %494 = vmatpush1.bf16.msra.mxu0 %v413
      %495 = vmatprep.subr.bf16.mxu0 0
      %496 = vmatpush1.bf16.msra.mxu0 0
      %497 = vmatprep.subr.bf16.mxu0 0
      %498 = vmatpush1.bf16.msra.mxu0 0
      %499 = vmatprep.subr.bf16.mxu0 0
      %500 = vmatpush1.bf16.msra.mxu0 0
      %501 = vmatprep.subr.bf16.mxu0 0
      %502 = vmatpush1.bf16.msra.mxu0 0
      %503 = vmatprep.subr.bf16.mxu0 0
      %504 = vmatpush1.bf16.msra.mxu0 0
      %505 = vmatprep.subr.bf16.mxu0 0
      %506 = vmatpush1.bf16.msra.mxu0 0
      %507 = vmatprep.subr.bf16.mxu0 0
      %508 = vmatpush1.bf16.msra.mxu0 0
      %509 = vmatprep.subr.bf16.mxu0 0
      %510 = vmatpush1.bf16.msra.mxu0 0
      %511 = vmatprep.mubr.bf16.mxu0 0
      %512 = vmatmul.mubr.bf16.gmra.mrb[0].mxu0 %v290
      %v513 = vpop.f32.mrb[0].mxu0
      %v514 = vadd.f32 %v473, %v513
      %v515 = vpop.f32.mrb[0].mxu0
      %v516 = vpop.f32.mrb[0].mxu0
      %v517 = vadd.f32 %v476, %v516
      %v518 = vpop.f32.mrb[0].mxu0
      %519 = vdwg.mxu0
      %v520 = vadd.f32 %v514, %v517
      %v521 = vrot.slane %v520, 4
      %v522 = vadd.f32 %v520, %v521
      %v523 = vrot.slane %v522, 2
      %v524 = vadd.f32 %v522, %v523
      %v525 = vrot.slane %v524, 1
      %v526 = vadd.f32 %v524, %v525
      %v527 = vmul.f32 %v526, 0.0625
      %v528 = vmul.f32 %v514, %v514
      %v529 = vmul.f32 %v517, %v517
      %v530 = vadd.f32 %v528, %v529
      %v531 = vrot.slane %v530, 4
      %v532 = vadd.f32 %v530, %v531
      %v533 = vrot.slane %v532, 2
      %v534 = vadd.f32 %v532, %v533
      %v535 = vrot.slane %v534, 1
      %v536 = vadd.f32 %v534, %v535
      %v537 = vmul.f32 %v536, 0.0625
      %v538 = vmul.f32 %v527, %v527
      %v539 = vsub.f32 %v537, %v538
      %v540 = vmax.f32 %v539, 0.0
      %v541 = vsub.f32 %v514, %v527
      %v542 = vsub.f32 %v517, %v527
      %v543 = vadd.f32 %v540, 1e-05
      %v544 = vrsqrt.pop %v543
      %v545 = vmul.f32 %v541, %v544
      %v546 = vmul.f32 %v542, %v544
      %v547 = vld [vmem:[%s212] sm:$0xff]
      %v548 = vld [vmem:[%s212 + $0x8] sm:$0xff]
      %v549 = vadd.f32 %v545, %v547
      %v550 = vadd.f32 %v546, %v548
      %551 = vst [vmem:[%s217] sm:$0xff] %v549
      %552 = vst [vmem:[%s217 + $0x8] sm:$0xff] %v550
      %p553 = scmp.lt.s32.totalorder %s15, 1
      %s554 = scalar_select %p553, %s15, 1
      %s555 = smul.addr %s554, 2
      %s556 = smul.addr %s555, 8
      %s557 = scalar_lea.vmem %s4, %s556
      // Predicated region
      $region37: #{generator_forward.14} parent=35 // pred_check
        %p558 = pneg %p127
      $region38: #{generator_forward.14} parent=35 // pred_check_branch
        %560 = sbr.rel (%p558) target = $region40
      $region39: #{generator_forward.14} parent=35 // pred_region
        _
      $region40: #{generator_forward.14} parent=35 // pred_fallthru
        _
    $region36: #{generator_forward.14} parent=5 // pred_fallthru
      _
    %p561 = scmp.le.s32.totalorder 2, %s10
    // Predicated region
    $region41: #{generator_forward.14} parent=5 // pred_check
      %p562 = pneg %p561
    $region42: #{generator_forward.14} parent=5 // pred_check_branch
      %564 = sbr.rel (%p562) target = $region44
    $region43: #{generator_forward.14} parent=5 // pred_region
      %s565 = ssub.s32 %s10, 2
      // Predicated region
      $region45: #{generator_forward.14} parent=43 // pred_check
        %p566 = pneg %p133
      $region46: #{generator_forward.14} parent=43 // pred_check_branch
        %568 = sbr.rel (%p566) target = $region48
      $region47: #{generator_forward.14} parent=43 // pred_region
        %p569 = scmp.lt.s32.totalorder %s16, 1
        %s570 = scalar_select %p569, %s16, 1
        %s571 = smul.addr %s570, 2
        %s572 = smul.addr %s571, 8
        %s573 = scalar_lea.vmem %s4, %s572
      $region48: #{generator_forward.14} parent=43 // pred_fallthru
        _
    $region44: #{generator_forward.14} parent=5 // pred_fallthru
      _
  $region6: #{generator_forward.14} parent=0 // loop_footer
    %s14 = sadd.s32 1, %s10
  $region7: #{generator_forward.14} parent=0 // loop_footer_branch
    %9 = sbr.rel target = $region3
  $region8: #{generator_forward.14} parent=0 // loop_exit
    _

// kernel: generator_forward.17
$region0: #{generator_forward.17}
  #allocation0 [shape = 'u32[]', space=smem, size = 0x4, offset = 0x4, fixed_abs, tag = 'smem constant byte address 0x4 - core index']
  #allocation1 [shape = 'u32[144,128]{1,0:T(1,128)}', space=vmem, size = 0x12000, scoped, tag = 'internal scratch']
  %s0 = inlined_call_operand.vmem [shape: bf16[2,64,384], index: 0, kind: input, shape index: {}]
  %s1 = inlined_call_operand.vmem [shape: bf16[384,128], index: 1, kind: input, shape index: {}]
  %s2 = inlined_call_operand.vmem [shape: f32[1,128], index: 2, kind: input, shape index: {}]
  %s3 = inlined_call_operand.vmem [shape: f32[2,64,128], index: 3, kind: output, shape index: {}]
  %s4 = sld [smem:[#allocation0]]
  $region45: #{generator_forward.17} parent=0
    _
  %s6 = ssub.s32 1, %s4
  %s7 = scalar_select 0, %s6, %s4
  loop: start=0, step=1, limit=4
  $region2: #{generator_forward.17} parent=0 // loop_pre_header
    _
  $region3: #{generator_forward.17} parent=0 // loop_header
    %s9 = sphi 0, %s13
    %p10 = scmp.ge.s32.totalorder %s9, 4
    %s19 = sphi 0, %s21
    %s22 = sphi 0, %s19
    %s23 = sphi 0, %s22
    %s39 = sphi 0, %s23
    %s43 = sphi 0, %s43
    %s45 = sphi 0, %s43
    %s46 = sphi 0, %s45
    %s60 = sphi 0, %s46
    %s64 = sphi 0, %s64
    %s66 = sphi 0, %s64
    %s67 = sphi 0, %s66
    %s81 = sphi 0, %s67
    %s87 = sphi 0, %s89
    %s90 = sphi 0, %s87
    %s91 = sphi 0, %s90
    %s107 = sphi 0, %s91
  $region4: #{generator_forward.17} parent=0 // loop_header_branch
    %12 = sbr.rel (%p10) target = $region8
  $region5: #{generator_forward.17} parent=0 // loop_body
    %s14 = ssub.s32 %s9, 1
    %s15 = ssub.s32 %s9, 2
    %s16 = sadd.s32 %s9, 1
    %s17 = ssub.s32 %s9, %s16
    %p18 = scmp.eq.s32.totalorder %s17, 0
    %s20 = sadd.s32 %s19, 1
    %s21 = scalar_select %p18, %s19, %s20
    %p24 = pneg %p18
    %p25 = scmp.eq.s32.totalorder %s9, 1
    %p26 = por %p24, %p25
    %p27 = scmp.ne.s32.totalorder %s19, %s22
    %p28 = scmp.eq.s32.totalorder %s9, 0
    %p29 = por %p27, %p28
    %p30 = scmp.ne.s32.totalorder %s19, %s22
    %p31 = scmp.eq.s32.totalorder %s14, 1
    %p32 = por %p30, %p31
    %p33 = scmp.ne.s32.totalorder %s22, %s23
    %p34 = scmp.eq.s32.totalorder %s14, 0
    %p35 = por %p33, %p34
    %p36 = scmp.ne.s32.totalorder %s22, %s23
    %p37 = scmp.eq.s32.totalorder %s15, 1
    %p38 = por %p36, %p37
    %p40 = scmp.ne.s32.totalorder %s23, %s39
    %p41 = scmp.eq.s32.totalorder %s15, 0
    %p42 = por %p40, %p41
    %s44 = sadd.s32 %s43, 1
    %p47 = scmp.eq.s32.totalorder %s9, 1
    %p48 = scmp.ne.s32.totalorder %s43, %s45
    %p49 = scmp.eq.s32.totalorder %s9, 0
    %p50 = por %p48, %p49
    %p51 = scmp.ne.s32.totalorder %s43, %s45
    %p52 = scmp.eq.s32.totalorder %s14, 1
    %p53 = por %p51, %p52
    %p54 = scmp.ne.s32.totalorder %s45, %s46
    %p55 = scmp.eq.s32.totalorder %s14, 0
    %p56 = por %p54, %p55
    %p57 = scmp.ne.s32.totalorder %s45, %s46
    %p58 = scmp.eq.s32.totalorder %s15, 1
    %p59 = por %p57, %p58
    %p61 = scmp.ne.s32.totalorder %s46, %s60
    %p62 = scmp.eq.s32.totalorder %s15, 0
    %p63 = por %p61, %p62
    %s65 = sadd.s32 %s64, 1
    %p68 = scmp.eq.s32.totalorder %s9, 1
    %p69 = scmp.ne.s32.totalorder %s64, %s66
    %p70 = scmp.eq.s32.totalorder %s9, 0
    %p71 = por %p69, %p70
    %p72 = scmp.ne.s32.totalorder %s64, %s66
    %p73 = scmp.eq.s32.totalorder %s14, 1
    %p74 = por %p72, %p73
    %p75 = scmp.ne.s32.totalorder %s66, %s67
    %p76 = scmp.eq.s32.totalorder %s14, 0
    %p77 = por %p75, %p76
    %p78 = scmp.ne.s32.totalorder %s66, %s67
    %p79 = scmp.eq.s32.totalorder %s15, 1
    %p80 = por %p78, %p79
    %p82 = scmp.ne.s32.totalorder %s67, %s81
    %p83 = scmp.eq.s32.totalorder %s15, 0
    %p84 = por %p82, %p83
    %s85 = ssub.s32 %s9, %s16
    %p86 = scmp.eq.s32.totalorder %s85, 0
    %s88 = sadd.s32 %s87, 1
    %s89 = scalar_select %p86, %s87, %s88
    %p92 = pneg %p86
    %p93 = scmp.eq.s32.totalorder %s9, 1
    %p94 = por %p92, %p93
    %p95 = scmp.ne.s32.totalorder %s87, %s90
    %p96 = scmp.eq.s32.totalorder %s9, 0
    %p97 = por %p95, %p96
    %p98 = scmp.ne.s32.totalorder %s87, %s90
    %p99 = scmp.eq.s32.totalorder %s14, 1
    %p100 = por %p98, %p99
    %p101 = scmp.ne.s32.totalorder %s90, %s91
    %p102 = scmp.eq.s32.totalorder %s14, 0
    %p103 = por %p101, %p102
    %p104 = scmp.ne.s32.totalorder %s90, %s91
    %p105 = scmp.eq.s32.totalorder %s15, 1
    %p106 = por %p104, %p105
    %p108 = scmp.ne.s32.totalorder %s91, %s107
    %p109 = scmp.eq.s32.totalorder %s15, 0
    %p110 = por %p108, %p109
    %p111 = scmp.le.s32.totalorder 1, %s9
    %p112 = scmp.lt.s32.totalorder %s9, 3
    %p113 = pnand %p111, %p112
    %p114 = pneg %p113
    // Predicated region
    $region9: #{generator_forward.17} parent=5 // pred_check
      _
    $region10: #{generator_forward.17} parent=5 // pred_check_branch
      %116 = sbr.rel (%p113) target = $region12
    $region11: #{generator_forward.17} parent=5 // pred_region
      %s117 = ssub.s32 %s9, 1
      // Predicated region
      $region13: #{generator_forward.17} parent=11 // pred_check
        %p118 = pneg %p56
      $region14: #{generator_forward.17} parent=11 // pred_check_branch
        %120 = sbr.rel (%p118) target = $region16
      $region15: #{generator_forward.17} parent=11 // pred_region
        _
      $region16: #{generator_forward.17} parent=11 // pred_fallthru
        _
      // Predicated region
      $region17: #{generator_forward.17} parent=11 // pred_check
        %p121 = pneg %p77
      $region18: #{generator_forward.17} parent=11 // pred_check_branch
        %123 = sbr.rel (%p121) target = $region20
      $region19: #{generator_forward.17} parent=11 // pred_region
        _
      $region20: #{generator_forward.17} parent=11 // pred_fallthru
        _
    $region12: #{generator_forward.17} parent=5 // pred_fallthru
      _
    %p124 = scmp.lt.s32.totalorder %s9, 2
    // Predicated region
    $region21: #{generator_forward.17} parent=5 // pred_check
      %p125 = pneg %p124
    $region22: #{generator_forward.17} parent=5 // pred_check_branch
      %127 = sbr.rel (%p125) target = $region24
    $region23: #{generator_forward.17} parent=5 // pred_region
      // Predicated region
      $region25: #{generator_forward.17} parent=23 // pred_check
        %p128 = pneg %p29
      $region26: #{generator_forward.17} parent=23 // pred_check_branch
        %130 = sbr.rel (%p128) target = $region28
      $region27: #{generator_forward.17} parent=23 // pred_region
        %p131 = scmp.lt.s32.totalorder %s9, 1
        %s132 = scalar_select %p131, %s9, 1
        %s133 = smul.addr %s132, 24
        %s134 = smul.addr %s133, 4
        %s135 = scalar_lea.vmem %s0, %s134
      $region28: #{generator_forward.17} parent=23 // pred_fallthru
        _
    $region24: #{generator_forward.17} parent=5 // pred_fallthru
      _
    %p136 = scmp.le.s32.totalorder 1, %s9
    %p137 = scmp.lt.s32.totalorder %s9, 3
    %p138 = pnand %p136, %p137
    %p139 = pneg %p138
    // Predicated region
    $region29: #{generator_forward.17} parent=5 // pred_check
      _
    $region30: #{generator_forward.17} parent=5 // pred_check_branch
      %141 = sbr.rel (%p138) target = $region32
    $region31: #{generator_forward.17} parent=5 // pred_region
      %s142 = ssub.s32 %s9, 1
      %p143 = scmp.lt.s32.totalorder %s14, 1
      %s144 = scalar_select %p143, %s14, 1
      %s145 = smul.addr %s144, 24
      %s146 = smul.addr %s145, 4
      %s147 = scalar_lea.vmem %s0, %s146
      %p148 = pneg %p35
      %p149 = pneg %p32
      %p150 = pneg %p56
      %p151 = pneg %p53
      %p152 = pneg %p77
      %p153 = pneg %p74
      %p154 = pneg %p103
      %p155 = pneg %p100
      %p156 = scmp.lt.s32.totalorder %s14, 1
      %s157 = scalar_select %p156, %s14, 1
      %s158 = smul.addr %s157, 8
      %s159 = smul.addr %s158, 8
      %s160 = scalar_lea.vmem %s3, %s159
      %p161 = scmp.lt.s32.totalorder %s14, 1
      %s162 = scalar_select %p161, %s14, 1
      %s163 = smul.addr %s162, 24
      %s164 = smul.addr %s163, 4
      %s165 = scalar_lea.vmem %s0, %s164
      %p166 = scmp.lt.s32.totalorder %s14, 1
      %s167 = scalar_select %p166, %s14, 1
      %s168 = smul.addr %s167, 8
      %s169 = smul.addr %s168, 8
      %s170 = scalar_lea.vmem %s3, %s169
      %v172 = vld [vmem:[%s165] sm:$0xff]
      %v173 = vld [vmem:[%s165 + $0x8] sm:$0xf]
      %v174 = vld [vmem:[%s165 + $0xc] sm:$0xff]
      %v175 = vld [vmem:[%s165 + $0x14] sm:$0xf]
      %v176 = vld [vmem:[%s165 + $0x18] sm:$0xff]
      %v177 = vld [vmem:[%s165 + $0x20] sm:$0xf]
      %v178 = vld [vmem:[%s165 + $0x24] sm:$0xff]
      %v179 = vld [vmem:[%s165 + $0x2c] sm:$0xf]
      %v180 = vld [vmem:[%s165 + $0x30] sm:$0xff]
      %v181 = vld [vmem:[%s165 + $0x38] sm:$0xf]
      %v182 = vld [vmem:[%s165 + $0x3c] sm:$0xff]
      %v183 = vld [vmem:[%s165 + $0x44] sm:$0xf]
      %v184 = vld [vmem:[%s165 + $0x48] sm:$0xff]
      %v185 = vld [vmem:[%s165 + $0x50] sm:$0xf]
      %v186 = vld [vmem:[%s165 + $0x54] sm:$0xff]
      %v187 = vld [vmem:[%s165 + $0x5c] sm:$0xf]
      %v188 = vld [vmem:[%s1] sm:$0xf]
      %v189 = vld [vmem:[%s1 + $0x4] sm:$0xf]
      %v190 = vld [vmem:[%s1 + $0x8] sm:$0xf]
      %v191 = vld [vmem:[%s1 + $0xc] sm:$0xf]
      %v192 = vld [vmem:[%s1 + $0x10] sm:$0xf]
      %v193 = vld [vmem:[%s1 + $0x14] sm:$0xf]
      %v194 = vld [vmem:[%s1 + $0x18] sm:$0xf]
      %v195 = vld [vmem:[%s1 + $0x1c] sm:$0xf]
      %v196 = vld [vmem:[%s1 + $0x20] sm:$0xf]
      %v197 = vld [vmem:[%s1 + $0x24] sm:$0xf]
      %v198 = vld [vmem:[%s1 + $0x28] sm:$0xf]
      %v199 = vld [vmem:[%s1 + $0x2c] sm:$0xf]
      %v200 = vld [vmem:[%s1 + $0x30] sm:$0xf]
      %v201 = vld [vmem:[%s1 + $0x34] sm:$0xf]
      %v202 = vld [vmem:[%s1 + $0x38] sm:$0xf]
      %v203 = vld [vmem:[%s1 + $0x3c] sm:$0xf]
      %v204 = vld [vmem:[%s1 + $0x40] sm:$0xf]
      %v205 = vld [vmem:[%s1 + $0x44] sm:$0xf]
      %v206 = vld [vmem:[%s1 + $0x48] sm:$0xf]
      %v207 = vld [vmem:[%s1 + $0x4c] sm:$0xf]
      %v208 = vld [vmem:[%s1 + $0x50] sm:$0xf]
      %v209 = vld [vmem:[%s1 + $0x54] sm:$0xf]
      %v210 = vld [vmem:[%s1 + $0x58] sm:$0xf]
      %v211 = vld [vmem:[%s1 + $0x5c] sm:$0xf]
      %v212 = vld [vmem:[%s1 + $0x60] sm:$0xf]
      %v213 = vld [vmem:[%s1 + $0x64] sm:$0xf]
      %v214 = vld [vmem:[%s1 + $0x68] sm:$0xf]
      %v215 = vld [vmem:[%s1 + $0x6c] sm:$0xf]
      %v216 = vld [vmem:[%s1 + $0x70] sm:$0xf]
      %v217 = vld [vmem:[%s1 + $0x74] sm:$0xf]
      %v218 = vld [vmem:[%s1 + $0x78] sm:$0xf]
      %v219 = vld [vmem:[%s1 + $0x7c] sm:$0xf]
      %v220 = vld [vmem:[%s1 + $0x80] sm:$0xf]
      %v221 = vld [vmem:[%s1 + $0x84] sm:$0xf]
      %v222 = vld [vmem:[%s1 + $0x88] sm:$0xf]
      %v223 = vld [vmem:[%s1 + $0x8c] sm:$0xf]
      %v224 = vld [vmem:[%s1 + $0x90] sm:$0xf]
      %v225 = vld [vmem:[%s1 + $0x94] sm:$0xf]
      %v226 = vld [vmem:[%s1 + $0x98] sm:$0xf]
      %v227 = vld [vmem:[%s1 + $0x9c] sm:$0xf]
      %v228 = vld [vmem:[%s1 + $0xa0] sm:$0xf]
      %v229 = vld [vmem:[%s1 + $0xa4] sm:$0xf]
      %v230 = vld [vmem:[%s1 + $0xa8] sm:$0xf]
      %v231 = vld [vmem:[%s1 + $0xac] sm:$0xf]
      %v232 = vld [vmem:[%s1 + $0xb0] sm:$0xf]
      %v233 = vld [vmem:[%s1 + $0xb4] sm:$0xf]
      %v234 = vld [vmem:[%s1 + $0xb8] sm:$0xf]
      %v235 = vld [vmem:[%s1 + $0xbc] sm:$0xf]
      %v236 = vld [vmem:[%s2] sm:$0x1]
      %v238 = vlaneseq
      %v239 = vshrl.u32 %v238, 7
      %v240 = vsub.s32 0, %v239
      %v241 = vrot.slane %v236, %v240
      %v259 = vunpack.c.l.b16 %v172
      %v260 = vunpack.c.h.b16 %v172
      %v261 = vunpack.c.l.b16 %v173
      %v262 = vunpack.c.l.b16 %v174
      %v263 = vunpack.c.h.b16 %v174
      %v264 = vunpack.c.l.b16 %v175
      %v265 = vunpack.c.l.b16 %v176
      %v266 = vunpack.c.h.b16 %v176
      %v267 = vunpack.c.l.b16 %v177
      %v268 = vunpack.c.l.b16 %v178
      %v269 = vunpack.c.h.b16 %v178
      %v270 = vunpack.c.l.b16 %v179
      %v271 = vunpack.c.l.b16 %v180
      %v272 = vunpack.c.h.b16 %v180
      %v273 = vunpack.c.l.b16 %v181
      %v274 = vunpack.c.l.b16 %v182
      %v275 = vunpack.c.h.b16 %v182
      %v276 = vunpack.c.l.b16 %v183
      %v277 = vunpack.c.l.b16 %v184
      %v278 = vunpack.c.h.b16 %v184
      %v279 = vunpack.c.l.b16 %v185
      %v280 = vunpack.c.l.b16 %v186
      %v281 = vunpack.c.h.b16 %v186
      %v282 = vunpack.c.l.b16 %v187
      %v283 = vpack.c.b16 %v262, %v259
      %v284 = vpack.c.b16 %v263, %v260
      %v285 = vpack.c.b16 %v264, %v261
      %v286 = vpack.c.b16 %v268, %v265
      %v287 = vpack.c.b16 %v269, %v266
      %v288 = vpack.c.b16 %v270, %v267
      %v289 = vpack.c.b16 %v274, %v271
      %v290 = vpack.c.b16 %v275, %v272
      %v291 = vpack.c.b16 %v276, %v273
      %v292 = vpack.c.b16 %v280, %v277
      %v293 = vpack.c.b16 %v281, %v278
      %v294 = vpack.c.b16 %v282, %v279
      %v355 = vunpack.c.l.b16 %v188
      %v356 = vunpack.c.l.b16 %v189
      %v357 = vunpack.c.l.b16 %v190
      %v358 = vunpack.c.l.b16 %v191
      %v359 = vunpack.c.l.b16 %v192
      %v360 = vunpack.c.l.b16 %v193
      %v361 = vunpack.c.l.b16 %v194
      %v362 = vunpack.c.l.b16 %v195
      %v363 = vunpack.c.l.b16 %v196
      %v364 = vunpack.c.l.b16 %v197
      %v365 = vunpack.c.l.b16 %v198
      %v366 = vunpack.c.l.b16 %v199
      %v367 = vunpack.c.l.b16 %v200
      %v368 = vunpack.c.l.b16 %v201
      %v369 = vunpack.c.l.b16 %v202
      %v370 = vunpack.c.l.b16 %v203
      %v371 = vunpack.c.l.b16 %v204
      %v372 = vunpack.c.l.b16 %v205
      %v373 = vunpack.c.l.b16 %v206
      %v374 = vunpack.c.l.b16 %v207
      %v375 = vunpack.c.l.b16 %v208
      %v376 = vunpack.c.l.b16 %v209
      %v377 = vunpack.c.l.b16 %v210
      %v378 = vunpack.c.l.b16 %v211
      %v379 = vunpack.c.l.b16 %v212
      %v380 = vunpack.c.l.b16 %v213
      %v381 = vunpack.c.l.b16 %v214
      %v382 = vunpack.c.l.b16 %v215
      %v383 = vunpack.c.l.b16 %v216
      %v384 = vunpack.c.l.b16 %v217
      %v385 = vunpack.c.l.b16 %v218
      %v386 = vunpack.c.l.b16 %v219
      %v387 = vunpack.c.l.b16 %v220
      %v388 = vunpack.c.l.b16 %v221
      %v389 = vunpack.c.l.b16 %v222
      %v390 = vunpack.c.l.b16 %v223
      %v391 = vunpack.c.l.b16 %v224
      %v392 = vunpack.c.l.b16 %v225
      %v393 = vunpack.c.l.b16 %v226
      %v394 = vunpack.c.l.b16 %v227
      %v395 = vunpack.c.l.b16 %v228
      %v396 = vunpack.c.l.b16 %v229
      %v397 = vunpack.c.l.b16 %v230
      %v398 = vunpack.c.l.b16 %v231
      %v399 = vunpack.c.l.b16 %v232
      %v400 = vunpack.c.l.b16 %v233
      %v401 = vunpack.c.l.b16 %v234
      %v402 = vunpack.c.l.b16 %v235
      %v403 = vpack.c.b16 %v356, %v355
      %v404 = vpack.c.b16 %v358, %v357
      %v405 = vpack.c.b16 %v360, %v359
      %v406 = vpack.c.b16 %v362, %v361
      %v407 = vpack.c.b16 %v364, %v363
      %v408 = vpack.c.b16 %v366, %v365
      %v409 = vpack.c.b16 %v368, %v367
      %v410 = vpack.c.b16 %v370, %v369
      %v411 = vpack.c.b16 %v372, %v371
      %v412 = vpack.c.b16 %v374, %v373
      %v413 = vpack.c.b16 %v376, %v375
      %v414 = vpack.c.b16 %v378, %v377
      %v415 = vpack.c.b16 %v380, %v379
      %v416 = vpack.c.b16 %v382, %v381
      %v417 = vpack.c.b16 %v384, %v383
      %v418 = vpack.c.b16 %v386, %v385
      %v419 = vpack.c.b16 %v388, %v387
      %v420 = vpack.c.b16 %v390, %v389
      %v421 = vpack.c.b16 %v392, %v391
      %v422 = vpack.c.b16 %v394, %v393
      %v423 = vpack.c.b16 %v396, %v395
      %v424 = vpack.c.b16 %v398, %v397
      %v425 = vpack.c.b16 %v400, %v399
      %v426 = vpack.c.b16 %v402, %v401
      %451 = vmatprep.subr.bf16.mxu0 0
      %452 = vmatpush1.bf16.msra.mxu0 %v403
      %453 = vmatprep.subr.bf16.mxu0 0
      %454 = vmatpush1.bf16.msra.mxu0 %v404
      %455 = vmatprep.subr.bf16.mxu0 0
      %456 = vmatpush1.bf16.msra.mxu0 %v405
      %457 = vmatprep.subr.bf16.mxu0 0
      %458 = vmatpush1.bf16.msra.mxu0 %v406
      %459 = vmatprep.subr.bf16.mxu0 0
      %460 = vmatpush1.bf16.msra.mxu0 %v407
      %461 = vmatprep.subr.bf16.mxu0 0
      %462 = vmatpush1.bf16.msra.mxu0 %v408
      %463 = vmatprep.subr.bf16.mxu0 0
      %464 = vmatpush1.bf16.msra.mxu0 %v409
      %465 = vmatprep.subr.bf16.mxu0 0
      %466 = vmatpush1.bf16.msra.mxu0 %v410
      %467 = vmatprep.subr.bf16.mxu0 0
      %468 = vmatpush1.bf16.msra.mxu0 %v411
      %469 = vmatprep.subr.bf16.mxu0 0
      %470 = vmatpush1.bf16.msra.mxu0 %v412
      %471 = vmatprep.subr.bf16.mxu0 0
      %472 = vmatpush1.bf16.msra.mxu0 %v413
      %473 = vmatprep.subr.bf16.mxu0 0
      %474 = vmatpush1.bf16.msra.mxu0 %v414
      %475 = vmatprep.subr.bf16.mxu0 0
      %476 = vmatpush1.bf16.msra.mxu0 %v415
      %477 = vmatprep.subr.bf16.mxu0 0
      %478 = vmatpush1.bf16.msra.mxu0 %v416
      %479 = vmatprep.subr.bf16.mxu0 0
      %480 = vmatpush1.bf16.msra.mxu0 %v417
      %481 = vmatprep.subr.bf16.mxu0 0
      %482 = vmatpush1.bf16.msra.mxu0 %v418
      %483 = vmatprep.mubr.bf16.mxu0 %v284
      %484 = vmatmul.mubr.bf16.gmra.mrb[0].mxu0 %v283
      %v485 = vpop.f32.mrb[0].mxu0
      %v486 = vadd.f32 %v241, %v485
      %v487 = vpop.f32.mrb[0].mxu0
      %v488 = vpop.f32.mrb[0].mxu0
      %v489 = vadd.f32 %v241, %v488
      %v490 = vpop.f32.mrb[0].mxu0
      %491 = vmatprep.mubr.bf16.mxu0 %v287
      %492 = vmatmul.mubr.bf16.gmra.mrb[0].mxu0 %v286
      %v493 = vpop.f32.mrb[0].mxu0
      %v494 = vadd.f32 %v241, %v493
      %v495 = vpop.f32.mrb[0].mxu0
      %v496 = vpop.f32.mrb[0].mxu0
      %v497 = vadd.f32 %v241, %v496
      %v498 = vpop.f32.mrb[0].mxu0
      %499 = vmatprep.mubr.bf16.mxu0 %v290
      %500 = vmatmul.mubr.bf16.gmra.mrb[0].mxu0 %v289
      %v501 = vpop.f32.mrb[0].mxu0
      %v502 = vadd.f32 %v241, %v501
      %v503 = vpop.f32.mrb[0].mxu0
      %v504 = vpop.f32.mrb[0].mxu0
      %v505 = vadd.f32 %v241, %v504
      %v506 = vpop.f32.mrb[0].mxu0
      %507 = vmatprep.mubr.bf16.mxu0 %v293
      %508 = vmatmul.mubr.bf16.gmra.mrb[0].mxu0 %v292
      %v509 = vpop.f32.mrb[0].mxu0
      %v510 = vadd.f32 %v241, %v509
      %v511 = vpop.f32.mrb[0].mxu0
      %v512 = vpop.f32.mrb[0].mxu0
      %v513 = vadd.f32 %v241, %v512
      %v514 = vpop.f32.mrb[0].mxu0
      %515 = vdwg.mxu0
      %516 = vmatprep.subr.bf16.mxu0 0
      %517 = vmatpush1.bf16.msra.mxu0 %v419
      %518 = vmatprep.subr.bf16.mxu0 0
      %519 = vmatpush1.bf16.msra.mxu0 %v420
      %520 = vmatprep.subr.bf16.mxu0 0
      %521 = vmatpush1.bf16.msra.mxu0 %v421
      %522 = vmatprep.subr.bf16.mxu0 0
      %523 = vmatpush1.bf16.msra.mxu0 %v422
      %524 = vmatprep.subr.bf16.mxu0 0
      %525 = vmatpush1.bf16.msra.mxu0 %v423
      %526 = vmatprep.subr.bf16.mxu0 0
      %527 = vmatpush1.bf16.msra.mxu0 %v424
      %528 = vmatprep.subr.bf16.mxu0 0
      %529 = vmatpush1.bf16.msra.mxu0 %v425
      %530 = vmatprep.subr.bf16.mxu0 0
      %531 = vmatpush1.bf16.msra.mxu0 %v426
      %532 = vmatprep.subr.bf16.mxu0 0
      %533 = vmatpush1.bf16.msra.mxu0 0
      %534 = vmatprep.subr.bf16.mxu0 0
      %535 = vmatpush1.bf16.msra.mxu0 0
      %536 = vmatprep.subr.bf16.mxu0 0
      %537 = vmatpush1.bf16.msra.mxu0 0
      %538 = vmatprep.subr.bf16.mxu0 0
      %539 = vmatpush1.bf16.msra.mxu0 0
      %540 = vmatprep.subr.bf16.mxu0 0
      %541 = vmatpush1.bf16.msra.mxu0 0
      %542 = vmatprep.subr.bf16.mxu0 0
      %543 = vmatpush1.bf16.msra.mxu0 0
      %544 = vmatprep.subr.bf16.mxu0 0
      %545 = vmatpush1.bf16.msra.mxu0 0
      %546 = vmatprep.subr.bf16.mxu0 0
      %547 = vmatpush1.bf16.msra.mxu0 0
      %548 = vmatprep.mubr.bf16.mxu0 0
      %549 = vmatmul.mubr.bf16.gmra.mrb[0].mxu0 %v285
      %v550 = vpop.f32.mrb[0].mxu0
      %v551 = vadd.f32 %v486, %v550
      %v552 = vpop.f32.mrb[0].mxu0
      %v553 = vpop.f32.mrb[0].mxu0
      %v554 = vadd.f32 %v489, %v553
      %v555 = vpop.f32.mrb[0].mxu0
      %556 = vmatprep.mubr.bf16.mxu0 0
      %557 = vmatmul.mubr.bf16.gmra.mrb[0].mxu0 %v288
      %v558 = vpop.f32.mrb[0].mxu0
      %v559 = vadd.f32 %v494, %v558
      %v560 = vpop.f32.mrb[0].mxu0
      %v561 = vpop.f32.mrb[0].mxu0
      %v562 = vadd.f32 %v497, %v561
      %v563 = vpop.f32.mrb[0].mxu0
      %564 = vmatprep.mubr.bf16.mxu0 0
      %565 = vmatmul.mubr.bf16.gmra.mrb[0].mxu0 %v291
      %v566 = vpop.f32.mrb[0].mxu0
      %v567 = vadd.f32 %v502, %v566
      %v568 = vpop.f32.mrb[0].mxu0
      %v569 = vpop.f32.mrb[0].mxu0
      %v570 = vadd.f32 %v505, %v569
      %v571 = vpop.f32.mrb[0].mxu0
      %572 = vmatprep.mubr.bf16.mxu0 0
      %573 = vmatmul.mubr.bf16.gmra.mrb[0].mxu0 %v294
      %v574 = vpop.f32.mrb[0].mxu0
      %v575 = vadd.f32 %v510, %v574
      %v576 = vpop.f32.mrb[0].mxu0
      %v577 = vpop.f32.mrb[0].mxu0
      %v578 = vadd.f32 %v513, %v577
      %v579 = vpop.f32.mrb[0].mxu0
      %580 = vdwg.mxu0
      %v581 = vadd.f32 %v551, %v554
      %v582 = vadd.f32 %v581, %v559
      %v583 = vadd.f32 %v582, %v562
      %v584 = vadd.f32 %v583, %v567
      %v585 = vadd.f32 %v584, %v570
      %v586 = vadd.f32 %v585, %v575
      %v587 = vadd.f32 %v586, %v578
      %v588 = vrot.slane %v587, 4
      %v589 = vadd.f32 %v587, %v588
      %v590 = vrot.slane %v589, 2
      %v591 = vadd.f32 %v589, %v590
      %v592 = vrot.slane %v591, 1
      %v593 = vadd.f32 %v591, %v592
      %v594 = vmul.f32 %v593, 0.015625
      %v595 = vmul.f32 %v551, %v551
      %v596 = vmul.f32 %v554, %v554
      %v597 = vmul.f32 %v559, %v559
      %v598 = vmul.f32 %v562, %v562
      %v599 = vmul.f32 %v567, %v567
      %v600 = vmul.f32 %v570, %v570
      %v601 = vmul.f32 %v575, %v575
      %v602 = vmul.f32 %v578, %v578
      %v603 = vadd.f32 %v595, %v596
      %v604 = vadd.f32 %v603, %v597
      %v605 = vadd.f32 %v604, %v598
      %v606 = vadd.f32 %v605, %v599
      %v607 = vadd.f32 %v606, %v600
      %v608 = vadd.f32 %v607, %v601
      %v609 = vadd.f32 %v608, %v602
      %v610 = vrot.slane %v609, 4
      %v611 = vadd.f32 %v609, %v610
      %v612 = vrot.slane %v611, 2
      %v613 = vadd.f32 %v611, %v612
      %v614 = vrot.slane %v613, 1
      %v615 = vadd.f32 %v613, %v614
      %v616 = vmul.f32 %v615, 0.015625
      %v617 = vmul.f32 %v594, %v594
      %v618 = vsub.f32 %v616, %v617
      %v619 = vmax.f32 %v618, 0.0
      %v620 = vsub.f32 %v551, %v594
      %v621 = vsub.f32 %v554, %v594
      %v622 = vsub.f32 %v559, %v594
      %v623 = vsub.f32 %v562, %v594
      %v624 = vsub.f32 %v567, %v594
      %v625 = vsub.f32 %v570, %v594
      %v626 = vsub.f32 %v575, %v594
      %v627 = vsub.f32 %v578, %v594
      %v628 = vadd.f32 %v619, 1e-05
      %v629 = vrsqrt.pop %v628
      %v630 = vmul.f32 %v620, %v629
      %v631 = vmul.f32 %v621, %v629
      %v632 = vmul.f32 %v622, %v629
      %v633 = vmul.f32 %v623, %v629
      %v634 = vmul.f32 %v624, %v629
      %v635 = vmul.f32 %v625, %v629
      %v636 = vmul.f32 %v626, %v629
      %v637 = vmul.f32 %v627, %v629
      %v638 = vmax.f32 %v630, 0.0
      %v639 = vmax.f32 %v631, 0.0
      %v640 = vmax.f32 %v632, 0.0
      %v641 = vmax.f32 %v633, 0.0
      %v642 = vmax.f32 %v634, 0.0
      %v643 = vmax.f32 %v635, 0.0
      %v644 = vmax.f32 %v636, 0.0
      %v645 = vmax.f32 %v637, 0.0
      %646 = vst [vmem:[%s170] sm:$0xff] %v638
      %647 = vst [vmem:[%s170 + $0x8] sm:$0xff] %v639
      %648 = vst [vmem:[%s170 + $0x10] sm:$0xff] %v640
      %649 = vst [vmem:[%s170 + $0x18] sm:$0xff] %v641
      %650 = vst [vmem:[%s170 + $0x20] sm:$0xff] %v642
      %651 = vst [vmem:[%s170 + $0x28] sm:$0xff] %v643
      %652 = vst [vmem:[%s170 + $0x30] sm:$0xff] %v644
      %653 = vst [vmem:[%s170 + $0x38] sm:$0xff] %v645
      %p654 = scmp.lt.s32.totalorder %s14, 1
      %s655 = scalar_select %p654, %s14, 1
      %s656 = smul.addr %s655, 8
      %s657 = smul.addr %s656, 8
      %s658 = scalar_lea.vmem %s3, %s657
      // Predicated region
      $region33: #{generator_forward.17} parent=31 // pred_check
        %p659 = pneg %p100
      $region34: #{generator_forward.17} parent=31 // pred_check_branch
        %661 = sbr.rel (%p659) target = $region36
      $region35: #{generator_forward.17} parent=31 // pred_region
        _
      $region36: #{generator_forward.17} parent=31 // pred_fallthru
        _
    $region32: #{generator_forward.17} parent=5 // pred_fallthru
      _
    %p662 = scmp.le.s32.totalorder 2, %s9
    // Predicated region
    $region37: #{generator_forward.17} parent=5 // pred_check
      %p663 = pneg %p662
    $region38: #{generator_forward.17} parent=5 // pred_check_branch
      %665 = sbr.rel (%p663) target = $region40
    $region39: #{generator_forward.17} parent=5 // pred_region
      %s666 = ssub.s32 %s9, 2
      // Predicated region
      $region41: #{generator_forward.17} parent=39 // pred_check
        %p667 = pneg %p106
      $region42: #{generator_forward.17} parent=39 // pred_check_branch
        %669 = sbr.rel (%p667) target = $region44
      $region43: #{generator_forward.17} parent=39 // pred_region
        %p670 = scmp.lt.s32.totalorder %s15, 1
        %s671 = scalar_select %p670, %s15, 1
        %s672 = smul.addr %s671, 8
        %s673 = smul.addr %s672, 8
        %s674 = scalar_lea.vmem %s3, %s673
      $region44: #{generator_forward.17} parent=39 // pred_fallthru
        _
    $region40: #{generator_forward.17} parent=5 // pred_fallthru
      _
  $region6: #{generator_forward.17} parent=0 // loop_footer
    %s13 = sadd.s32 1, %s9
  $region7: #{generator_forward.17} parent=0 // loop_footer_branch
    %8 = sbr.rel target = $region3
  $region8: #{generator_forward.17} parent=0 // loop_exit
    _

// kernel: generator_forward.19
$region0: #{generator_forward.19}
  #allocation0 [shape = 'u32[]', space=smem, size = 0x4, offset = 0x4, fixed_abs, tag = 'smem constant byte address 0x4 - core index']
  #allocation1 [shape = 'u32[144,128]{1,0:T(1,128)}', space=vmem, size = 0x12000, scoped, tag = 'internal scratch']
  %s0 = inlined_call_operand.vmem [shape: bf16[2,256,512], index: 0, kind: input, shape index: {}]
  %s1 = inlined_call_operand.vmem [shape: bf16[512,128], index: 1, kind: input, shape index: {}]
  %s2 = inlined_call_operand.vmem [shape: f32[1,128], index: 2, kind: input, shape index: {}]
  %s3 = inlined_call_operand.vmem [shape: f32[2,256,128], index: 3, kind: output, shape index: {}]
  %s4 = sld [smem:[#allocation0]]
  $region45: #{generator_forward.19} parent=0
    _
  %s6 = ssub.s32 1, %s4
  %s7 = scalar_select 0, %s6, %s4
  loop: start=0, step=1, limit=4
  $region2: #{generator_forward.19} parent=0 // loop_pre_header
    _
  $region3: #{generator_forward.19} parent=0 // loop_header
    %s9 = sphi 0, %s13
    %p10 = scmp.ge.s32.totalorder %s9, 4
    %s19 = sphi 0, %s21
    %s22 = sphi 0, %s19
    %s23 = sphi 0, %s22
    %s39 = sphi 0, %s23
    %s43 = sphi 0, %s43
    %s45 = sphi 0, %s43
    %s46 = sphi 0, %s45
    %s60 = sphi 0, %s46
    %s64 = sphi 0, %s64
    %s66 = sphi 0, %s64
    %s67 = sphi 0, %s66
    %s81 = sphi 0, %s67
    %s87 = sphi 0, %s89
    %s90 = sphi 0, %s87
    %s91 = sphi 0, %s90
    %s107 = sphi 0, %s91
  $region4: #{generator_forward.19} parent=0 // loop_header_branch
    %12 = sbr.rel (%p10) target = $region8
  $region5: #{generator_forward.19} parent=0 // loop_body
    %s14 = ssub.s32 %s9, 1
    %s15 = ssub.s32 %s9, 2
    %s16 = sadd.s32 %s9, 1
    %s17 = ssub.s32 %s9, %s16
    %p18 = scmp.eq.s32.totalorder %s17, 0
    %s20 = sadd.s32 %s19, 1
    %s21 = scalar_select %p18, %s19, %s20
    %p24 = pneg %p18
    %p25 = scmp.eq.s32.totalorder %s9, 1
    %p26 = por %p24, %p25
    %p27 = scmp.ne.s32.totalorder %s19, %s22
    %p28 = scmp.eq.s32.totalorder %s9, 0
    %p29 = por %p27, %p28
    %p30 = scmp.ne.s32.totalorder %s19, %s22
    %p31 = scmp.eq.s32.totalorder %s14, 1
    %p32 = por %p30, %p31
    %p33 = scmp.ne.s32.totalorder %s22, %s23
    %p34 = scmp.eq.s32.totalorder %s14, 0
    %p35 = por %p33, %p34
    %p36 = scmp.ne.s32.totalorder %s22, %s23
    %p37 = scmp.eq.s32.totalorder %s15, 1
    %p38 = por %p36, %p37
    %p40 = scmp.ne.s32.totalorder %s23, %s39
    %p41 = scmp.eq.s32.totalorder %s15, 0
    %p42 = por %p40, %p41
    %s44 = sadd.s32 %s43, 1
    %p47 = scmp.eq.s32.totalorder %s9, 1
    %p48 = scmp.ne.s32.totalorder %s43, %s45
    %p49 = scmp.eq.s32.totalorder %s9, 0
    %p50 = por %p48, %p49
    %p51 = scmp.ne.s32.totalorder %s43, %s45
    %p52 = scmp.eq.s32.totalorder %s14, 1
    %p53 = por %p51, %p52
    %p54 = scmp.ne.s32.totalorder %s45, %s46
    %p55 = scmp.eq.s32.totalorder %s14, 0
    %p56 = por %p54, %p55
    %p57 = scmp.ne.s32.totalorder %s45, %s46
    %p58 = scmp.eq.s32.totalorder %s15, 1
    %p59 = por %p57, %p58
    %p61 = scmp.ne.s32.totalorder %s46, %s60
    %p62 = scmp.eq.s32.totalorder %s15, 0
    %p63 = por %p61, %p62
    %s65 = sadd.s32 %s64, 1
    %p68 = scmp.eq.s32.totalorder %s9, 1
    %p69 = scmp.ne.s32.totalorder %s64, %s66
    %p70 = scmp.eq.s32.totalorder %s9, 0
    %p71 = por %p69, %p70
    %p72 = scmp.ne.s32.totalorder %s64, %s66
    %p73 = scmp.eq.s32.totalorder %s14, 1
    %p74 = por %p72, %p73
    %p75 = scmp.ne.s32.totalorder %s66, %s67
    %p76 = scmp.eq.s32.totalorder %s14, 0
    %p77 = por %p75, %p76
    %p78 = scmp.ne.s32.totalorder %s66, %s67
    %p79 = scmp.eq.s32.totalorder %s15, 1
    %p80 = por %p78, %p79
    %p82 = scmp.ne.s32.totalorder %s67, %s81
    %p83 = scmp.eq.s32.totalorder %s15, 0
    %p84 = por %p82, %p83
    %s85 = ssub.s32 %s9, %s16
    %p86 = scmp.eq.s32.totalorder %s85, 0
    %s88 = sadd.s32 %s87, 1
    %s89 = scalar_select %p86, %s87, %s88
    %p92 = pneg %p86
    %p93 = scmp.eq.s32.totalorder %s9, 1
    %p94 = por %p92, %p93
    %p95 = scmp.ne.s32.totalorder %s87, %s90
    %p96 = scmp.eq.s32.totalorder %s9, 0
    %p97 = por %p95, %p96
    %p98 = scmp.ne.s32.totalorder %s87, %s90
    %p99 = scmp.eq.s32.totalorder %s14, 1
    %p100 = por %p98, %p99
    %p101 = scmp.ne.s32.totalorder %s90, %s91
    %p102 = scmp.eq.s32.totalorder %s14, 0
    %p103 = por %p101, %p102
    %p104 = scmp.ne.s32.totalorder %s90, %s91
    %p105 = scmp.eq.s32.totalorder %s15, 1
    %p106 = por %p104, %p105
    %p108 = scmp.ne.s32.totalorder %s91, %s107
    %p109 = scmp.eq.s32.totalorder %s15, 0
    %p110 = por %p108, %p109
    %p111 = scmp.le.s32.totalorder 1, %s9
    %p112 = scmp.lt.s32.totalorder %s9, 3
    %p113 = pnand %p111, %p112
    %p114 = pneg %p113
    // Predicated region
    $region9: #{generator_forward.19} parent=5 // pred_check
      _
    $region10: #{generator_forward.19} parent=5 // pred_check_branch
      %116 = sbr.rel (%p113) target = $region12
    $region11: #{generator_forward.19} parent=5 // pred_region
      %s117 = ssub.s32 %s9, 1
      // Predicated region
      $region13: #{generator_forward.19} parent=11 // pred_check
        %p118 = pneg %p56
      $region14: #{generator_forward.19} parent=11 // pred_check_branch
        %120 = sbr.rel (%p118) target = $region16
      $region15: #{generator_forward.19} parent=11 // pred_region
        _
      $region16: #{generator_forward.19} parent=11 // pred_fallthru
        _
      // Predicated region
      $region17: #{generator_forward.19} parent=11 // pred_check
        %p121 = pneg %p77
      $region18: #{generator_forward.19} parent=11 // pred_check_branch
        %123 = sbr.rel (%p121) target = $region20
      $region19: #{generator_forward.19} parent=11 // pred_region
        _
      $region20: #{generator_forward.19} parent=11 // pred_fallthru
        _
    $region12: #{generator_forward.19} parent=5 // pred_fallthru
      _
    %p124 = scmp.lt.s32.totalorder %s9, 2
    // Predicated region
    $region21: #{generator_forward.19} parent=5 // pred_check
      %p125 = pneg %p124
    $region22: #{generator_forward.19} parent=5 // pred_check_branch
      %127 = sbr.rel (%p125) target = $region24
    $region23: #{generator_forward.19} parent=5 // pred_region
      // Predicated region
      $region25: #{generator_forward.19} parent=23 // pred_check
        %p128 = pneg %p29
      $region26: #{generator_forward.19} parent=23 // pred_check_branch
        %130 = sbr.rel (%p128) target = $region28
      $region27: #{generator_forward.19} parent=23 // pred_region
        %p131 = scmp.lt.s32.totalorder %s9, 1
        %s132 = scalar_select %p131, %s9, 1
        %s133 = smul.addr %s132, 128
        %s134 = smul.addr %s133, 4
        %s135 = scalar_lea.vmem %s0, %s134
      $region28: #{generator_forward.19} parent=23 // pred_fallthru
        _
    $region24: #{generator_forward.19} parent=5 // pred_fallthru
      _
    %p136 = scmp.le.s32.totalorder 1, %s9
    %p137 = scmp.lt.s32.totalorder %s9, 3
    %p138 = pnand %p136, %p137
    %p139 = pneg %p138
    // Predicated region
    $region29: #{generator_forward.19} parent=5 // pred_check
      _
    $region30: #{generator_forward.19} parent=5 // pred_check_branch
      %141 = sbr.rel (%p138) target = $region32
    $region31: #{generator_forward.19} parent=5 // pred_region
      %s142 = ssub.s32 %s9, 1
      %p143 = scmp.lt.s32.totalorder %s14, 1
      %s144 = scalar_select %p143, %s14, 1
      %s145 = smul.addr %s144, 128
      %s146 = smul.addr %s145, 4
      %s147 = scalar_lea.vmem %s0, %s146
      %p148 = pneg %p35
      %p149 = pneg %p32
      %p150 = pneg %p56
      %p151 = pneg %p53
      %p152 = pneg %p77
      %p153 = pneg %p74
      %p154 = pneg %p103
      %p155 = pneg %p100
      %p156 = scmp.lt.s32.totalorder %s14, 1
      %s157 = scalar_select %p156, %s14, 1
      %s158 = smul.addr %s157, 32
      %s159 = smul.addr %s158, 8
      %s160 = scalar_lea.vmem %s3, %s159
      %p161 = scmp.lt.s32.totalorder %s14, 1
      %s162 = scalar_select %p161, %s14, 1
      %s163 = smul.addr %s162, 128
      %s164 = smul.addr %s163, 4
      %s165 = scalar_lea.vmem %s0, %s164
      %p166 = scmp.lt.s32.totalorder %s14, 1
      %s167 = scalar_select %p166, %s14, 1
      %s168 = smul.addr %s167, 32
      %s169 = smul.addr %s168, 8
      %s170 = scalar_lea.vmem %s3, %s169
      %v172 = vld [vmem:[%s165] sm:$0xff]
      %v173 = vld [vmem:[%s165 + $0x8] sm:$0xff]
      %v174 = vld [vmem:[%s165 + $0x10] sm:$0xff]
      %v175 = vld [vmem:[%s165 + $0x18] sm:$0xff]
      %v176 = vld [vmem:[%s165 + $0x20] sm:$0xff]
      %v177 = vld [vmem:[%s165 + $0x28] sm:$0xff]
      %v178 = vld [vmem:[%s165 + $0x30] sm:$0xff]
      %v179 = vld [vmem:[%s165 + $0x38] sm:$0xff]
      %v180 = vld [vmem:[%s165 + $0x40] sm:$0xff]
      %v181 = vld [vmem:[%s165 + $0x48] sm:$0xff]
      %v182 = vld [vmem:[%s165 + $0x50] sm:$0xff]
      %v183 = vld [vmem:[%s165 + $0x58] sm:$0xff]
      %v184 = vld [vmem:[%s165 + $0x60] sm:$0xff]
      %v185 = vld [vmem:[%s165 + $0x68] sm:$0xff]
      %v186 = vld [vmem:[%s165 + $0x70] sm:$0xff]
      %v187 = vld [vmem:[%s165 + $0x78] sm:$0xff]
      %v188 = vld [vmem:[%s165 + $0x80] sm:$0xff]
      %v189 = vld [vmem:[%s165 + $0x88] sm:$0xff]
      %v190 = vld [vmem:[%s165 + $0x90] sm:$0xff]
      %v191 = vld [vmem:[%s165 + $0x98] sm:$0xff]
      %v192 = vld [vmem:[%s165 + $0xa0] sm:$0xff]
      %v193 = vld [vmem:[%s165 + $0xa8] sm:$0xff]
      %v194 = vld [vmem:[%s165 + $0xb0] sm:$0xff]
      %v195 = vld [vmem:[%s165 + $0xb8] sm:$0xff]
      %v196 = vld [vmem:[%s165 + $0xc0] sm:$0xff]
      %v197 = vld [vmem:[%s165 + $0xc8] sm:$0xff]
      %v198 = vld [vmem:[%s165 + $0xd0] sm:$0xff]
      %v199 = vld [vmem:[%s165 + $0xd8] sm:$0xff]
      %v200 = vld [vmem:[%s165 + $0xe0] sm:$0xff]
      %v201 = vld [vmem:[%s165 + $0xe8] sm:$0xff]
      %v202 = vld [vmem:[%s165 + $0xf0] sm:$0xff]
      %v203 = vld [vmem:[%s165 + $0xf8] sm:$0xff]
      %v204 = vld [vmem:[%s165 + $0x100] sm:$0xff]
      %v205 = vld [vmem:[%s165 + $0x108] sm:$0xff]
      %v206 = vld [vmem:[%s165 + $0x110] sm:$0xff]
      %v207 = vld [vmem:[%s165 + $0x118] sm:$0xff]
      %v208 = vld [vmem:[%s165 + $0x120] sm:$0xff]
      %v209 = vld [vmem:[%s165 + $0x128] sm:$0xff]
      %v210 = vld [vmem:[%s165 + $0x130] sm:$0xff]
      %v211 = vld [vmem:[%s165 + $0x138] sm:$0xff]
      %v212 = vld [vmem:[%s165 + $0x140] sm:$0xff]
      %v213 = vld [vmem:[%s165 + $0x148] sm:$0xff]
      %v214 = vld [vmem:[%s165 + $0x150] sm:$0xff]
      %v215 = vld [vmem:[%s165 + $0x158] sm:$0xff]
      %v216 = vld [vmem:[%s165 + $0x160] sm:$0xff]
      %v217 = vld [vmem:[%s165 + $0x168] sm:$0xff]
      %v218 = vld [vmem:[%s165 + $0x170] sm:$0xff]
      %v219 = vld [vmem:[%s165 + $0x178] sm:$0xff]
      %v220 = vld [vmem:[%s165 + $0x180] sm:$0xff]
      %v221 = vld [vmem:[%s165 + $0x188] sm:$0xff]
      %v222 = vld [vmem:[%s165 + $0x190] sm:$0xff]
      %v223 = vld [vmem:[%s165 + $0x198] sm:$0xff]
      %v224 = vld [vmem:[%s165 + $0x1a0] sm:$0xff]
      %v225 = vld [vmem:[%s165 + $0x1a8] sm:$0xff]
      %v226 = vld [vmem:[%s165 + $0x1b0] sm:$0xff]
      %v227 = vld [vmem:[%s165 + $0x1b8] sm:$0xff]
      %v228 = vld [vmem:[%s165 + $0x1c0] sm:$0xff]
      %v229 = vld [vmem:[%s165 + $0x1c8] sm:$0xff]
      %v230 = vld [vmem:[%s165 + $0x1d0] sm:$0xff]
      %v231 = vld [vmem:[%s165 + $0x1d8] sm:$0xff]
      %v232 = vld [vmem:[%s165 + $0x1e0] sm:$0xff]
      %v233 = vld [vmem:[%s165 + $0x1e8] sm:$0xff]
      %v234 = vld [vmem:[%s165 + $0x1f0] sm:$0xff]
      %v235 = vld [vmem:[%s165 + $0x1f8] sm:$0xff]
      %v236 = vld [vmem:[%s1] sm:$0xf]
      %v237 = vld [vmem:[%s1 + $0x4] sm:$0xf]
      %v238 = vld [vmem:[%s1 + $0x8] sm:$0xf]
      %v239 = vld [vmem:[%s1 + $0xc] sm:$0xf]
      %v240 = vld [vmem:[%s1 + $0x10] sm:$0xf]
      %v241 = vld [vmem:[%s1 + $0x14] sm:$0xf]
      %v242 = vld [vmem:[%s1 + $0x18] sm:$0xf]
      %v243 = vld [vmem:[%s1 + $0x1c] sm:$0xf]
      %v244 = vld [vmem:[%s1 + $0x20] sm:$0xf]
      %v245 = vld [vmem:[%s1 + $0x24] sm:$0xf]
      %v246 = vld [vmem:[%s1 + $0x28] sm:$0xf]
      %v247 = vld [vmem:[%s1 + $0x2c] sm:$0xf]
      %v248 = vld [vmem:[%s1 + $0x30] sm:$0xf]
      %v249 = vld [vmem:[%s1 + $0x34] sm:$0xf]
      %v250 = vld [vmem:[%s1 + $0x38] sm:$0xf]
      %v251 = vld [vmem:[%s1 + $0x3c] sm:$0xf]
      %v252 = vld [vmem:[%s1 + $0x40] sm:$0xf]
      %v253 = vld [vmem:[%s1 + $0x44] sm:$0xf]
      %v254 = vld [vmem:[%s1 + $0x48] sm:$0xf]
      %v255 = vld [vmem:[%s1 + $0x4c] sm:$0xf]
      %v256 = vld [vmem:[%s1 + $0x50] sm:$0xf]
      %v257 = vld [vmem:[%s1 + $0x54] sm:$0xf]
      %v258 = vld [vmem:[%s1 + $0x58] sm:$0xf]
      %v259 = vld [vmem:[%s1 + $0x5c] sm:$0xf]
      %v260 = vld [vmem:[%s1 + $0x60] sm:$0xf]
      %v261 = vld [vmem:[%s1 + $0x64] sm:$0xf]
      %v262 = vld [vmem:[%s1 + $0x68] sm:$0xf]
      %v263 = vld [vmem:[%s1 + $0x6c] sm:$0xf]
      %v264 = vld [vmem:[%s1 + $0x70] sm:$0xf]
      %v265 = vld [vmem:[%s1 + $0x74] sm:$0xf]
      %v266 = vld [vmem:[%s1 + $0x78] sm:$0xf]
      %v267 = vld [vmem:[%s1 + $0x7c] sm:$0xf]
      %v268 = vld [vmem:[%s1 + $0x80] sm:$0xf]
      %v269 = vld [vmem:[%s1 + $0x84] sm:$0xf]
      %v270 = vld [vmem:[%s1 + $0x88] sm:$0xf]
      %v271 = vld [vmem:[%s1 + $0x8c] sm:$0xf]
      %v272 = vld [vmem:[%s1 + $0x90] sm:$0xf]
      %v273 = vld [vmem:[%s1 + $0x94] sm:$0xf]
      %v274 = vld [vmem:[%s1 + $0x98] sm:$0xf]
      %v275 = vld [vmem:[%s1 + $0x9c] sm:$0xf]
      %v276 = vld [vmem:[%s1 + $0xa0] sm:$0xf]
      %v277 = vld [vmem:[%s1 + $0xa4] sm:$0xf]
      %v278 = vld [vmem:[%s1 + $0xa8] sm:$0xf]
      %v279 = vld [vmem:[%s1 + $0xac] sm:$0xf]
      %v280 = vld [vmem:[%s1 + $0xb0] sm:$0xf]
      %v281 = vld [vmem:[%s1 + $0xb4] sm:$0xf]
      %v282 = vld [vmem:[%s1 + $0xb8] sm:$0xf]
      %v283 = vld [vmem:[%s1 + $0xbc] sm:$0xf]
      %v284 = vld [vmem:[%s1 + $0xc0] sm:$0xf]
      %v285 = vld [vmem:[%s1 + $0xc4] sm:$0xf]
      %v286 = vld [vmem:[%s1 + $0xc8] sm:$0xf]
      %v287 = vld [vmem:[%s1 + $0xcc] sm:$0xf]
      %v288 = vld [vmem:[%s1 + $0xd0] sm:$0xf]
      %v289 = vld [vmem:[%s1 + $0xd4] sm:$0xf]
      %v290 = vld [vmem:[%s1 + $0xd8] sm:$0xf]
      %v291 = vld [vmem:[%s1 + $0xdc] sm:$0xf]
      %v292 = vld [vmem:[%s1 + $0xe0] sm:$0xf]
      %v293 = vld [vmem:[%s1 + $0xe4] sm:$0xf]
      %v294 = vld [vmem:[%s1 + $0xe8] sm:$0xf]
      %v295 = vld [vmem:[%s1 + $0xec] sm:$0xf]
      %v296 = vld [vmem:[%s1 + $0xf0] sm:$0xf]
      %v297 = vld [vmem:[%s1 + $0xf4] sm:$0xf]
      %v298 = vld [vmem:[%s1 + $0xf8] sm:$0xf]
      %v299 = vld [vmem:[%s1 + $0xfc] sm:$0xf]
      %v300 = vld [vmem:[%s2] sm:$0x1]
      %v302 = vlaneseq
      %v303 = vshrl.u32 %v302, 7
      %v304 = vsub.s32 0, %v303
      %v305 = vrot.slane %v300, %v304
      %v371 = vunpack.c.l.b16 %v172
      %v372 = vunpack.c.h.b16 %v172
      %v373 = vunpack.c.l.b16 %v173
      %v374 = vunpack.c.h.b16 %v173
      %v375 = vunpack.c.l.b16 %v174
      %v376 = vunpack.c.h.b16 %v174
      %v377 = vunpack.c.l.b16 %v175
      %v378 = vunpack.c.h.b16 %v175
      %v379 = vunpack.c.l.b16 %v176
      %v380 = vunpack.c.h.b16 %v176
      %v381 = vunpack.c.l.b16 %v177
      %v382 = vunpack.c.h.b16 %v177
      %v383 = vunpack.c.l.b16 %v178
      %v384 = vunpack.c.h.b16 %v178
      %v385 = vunpack.c.l.b16 %v179
      %v386 = vunpack.c.h.b16 %v179
      %v387 = vunpack.c.l.b16 %v180
      %v388 = vunpack.c.h.b16 %v180
      %v389 = vunpack.c.l.b16 %v181
      %v390 = vunpack.c.h.b16 %v181
      %v391 = vunpack.c.l.b16 %v182
      %v392 = vunpack.c.h.b16 %v182
      %v393 = vunpack.c.l.b16 %v183
      %v394 = vunpack.c.h.b16 %v183
      %v395 = vunpack.c.l.b16 %v184
      %v396 = vunpack.c.h.b16 %v184
      %v397 = vunpack.c.l.b16 %v185
      %v398 = vunpack.c.h.b16 %v185
      %v399 = vunpack.c.l.b16 %v186
      %v400 = vunpack.c.h.b16 %v186
      %v401 = vunpack.c.l.b16 %v187
      %v402 = vunpack.c.h.b16 %v187
      %v403 = vunpack.c.l.b16 %v188
      %v404 = vunpack.c.h.b16 %v188
      %v405 = vunpack.c.l.b16 %v189
      %v406 = vunpack.c.h.b16 %v189
      %v407 = vunpack.c.l.b16 %v190
      %v408 = vunpack.c.h.b16 %v190
      %v409 = vunpack.c.l.b16 %v191
      %v410 = vunpack.c.h.b16 %v191
      %v411 = vunpack.c.l.b16 %v192
      %v412 = vunpack.c.h.b16 %v192
      %v413 = vunpack.c.l.b16 %v193
      %v414 = vunpack.c.h.b16 %v193
      %v415 = vunpack.c.l.b16 %v194
      %v416 = vunpack.c.h.b16 %v194
      %v417 = vunpack.c.l.b16 %v195
      %v418 = vunpack.c.h.b16 %v195
      %v419 = vunpack.c.l.b16 %v196
      %v420 = vunpack.c.h.b16 %v196
      %v421 = vunpack.c.l.b16 %v197
      %v422 = vunpack.c.h.b16 %v197
      %v423 = vunpack.c.l.b16 %v198
      %v424 = vunpack.c.h.b16 %v198
      %v425 = vunpack.c.l.b16 %v199
      %v426 = vunpack.c.h.b16 %v199
      %v427 = vunpack.c.l.b16 %v200
      %v428 = vunpack.c.h.b16 %v200
      %v429 = vunpack.c.l.b16 %v201
      %v430 = vunpack.c.h.b16 %v201
      %v431 = vunpack.c.l.b16 %v202
      %v432 = vunpack.c.h.b16 %v202
      %v433 = vunpack.c.l.b16 %v203
      %v434 = vunpack.c.h.b16 %v203
      %v435 = vunpack.c.l.b16 %v204
      %v436 = vunpack.c.h.b16 %v204
      %v437 = vunpack.c.l.b16 %v205
      %v438 = vunpack.c.h.b16 %v205
      %v439 = vunpack.c.l.b16 %v206
      %v440 = vunpack.c.h.b16 %v206
      %v441 = vunpack.c.l.b16 %v207
      %v442 = vunpack.c.h.b16 %v207
      %v443 = vunpack.c.l.b16 %v208
      %v444 = vunpack.c.h.b16 %v208
      %v445 = vunpack.c.l.b16 %v209
      %v446 = vunpack.c.h.b16 %v209
      %v447 = vunpack.c.l.b16 %v210
      %v448 = vunpack.c.h.b16 %v210
      %v449 = vunpack.c.l.b16 %v211
      %v450 = vunpack.c.h.b16 %v211
      %v451 = vunpack.c.l.b16 %v212
      %v452 = vunpack.c.h.b16 %v212
      %v453 = vunpack.c.l.b16 %v213
      %v454 = vunpack.c.h.b16 %v213
      %v455 = vunpack.c.l.b16 %v214
      %v456 = vunpack.c.h.b16 %v214
      %v457 = vunpack.c.l.b16 %v215
      %v458 = vunpack.c.h.b16 %v215
      %v459 = vunpack.c.l.b16 %v216
      %v460 = vunpack.c.h.b16 %v216
      %v461 = vunpack.c.l.b16 %v217
      %v462 = vunpack.c.h.b16 %v217
      %v463 = vunpack.c.l.b16 %v218
      %v464 = vunpack.c.h.b16 %v218
      %v465 = vunpack.c.l.b16 %v219
      %v466 = vunpack.c.h.b16 %v219
      %v467 = vunpack.c.l.b16 %v220
      %v468 = vunpack.c.h.b16 %v220
      %v469 = vunpack.c.l.b16 %v221
      %v470 = vunpack.c.h.b16 %v221
      %v471 = vunpack.c.l.b16 %v222
      %v472 = vunpack.c.h.b16 %v222
      %v473 = vunpack.c.l.b16 %v223
      %v474 = vunpack.c.h.b16 %v223
      %v475 = vunpack.c.l.b16 %v224
      %v476 = vunpack.c.h.b16 %v224
      %v477 = vunpack.c.l.b16 %v225
      %v478 = vunpack.c.h.b16 %v225
      %v479 = vunpack.c.l.b16 %v226
      %v480 = vunpack.c.h.b16 %v226
      %v481 = vunpack.c.l.b16 %v227
      %v482 = vunpack.c.h.b16 %v227
      %v483 = vunpack.c.l.b16 %v228
      %v484 = vunpack.c.h.b16 %v228
      %v485 = vunpack.c.l.b16 %v229
      %v486 = vunpack.c.h.b16 %v229
      %v487 = vunpack.c.l.b16 %v230
      %v488 = vunpack.c.h.b16 %v230
      %v489 = vunpack.c.l.b16 %v231
      %v490 = vunpack.c.h.b16 %v231
      %v491 = vunpack.c.l.b16 %v232
      %v492 = vunpack.c.h.b16 %v232
      %v493 = vunpack.c.l.b16 %v233
      %v494 = vunpack.c.h.b16 %v233
      %v495 = vunpack.c.l.b16 %v234
      %v496 = vunpack.c.h.b16 %v234
      %v497 = vunpack.c.l.b16 %v235
      %v498 = vunpack.c.h.b16 %v235
      %v499 = vpack.c.b16 %v375, %v371
      %v500 = vpack.c.b16 %v376, %v372
      %v501 = vpack.c.b16 %v377, %v373
      %v502 = vpack.c.b16 %v378, %v374
      %v503 = vpack.c.b16 %v383, %v379
      %v504 = vpack.c.b16 %v384, %v380
      %v505 = vpack.c.b16 %v385, %v381
      %v506 = vpack.c.b16 %v386, %v382
      %v507 = vpack.c.b16 %v391, %v387
      %v508 = vpack.c.b16 %v392, %v388
      %v509 = vpack.c.b16 %v393, %v389
      %v510 = vpack.c.b16 %v394, %v390
      %v511 = vpack.c.b16 %v399, %v395
      %v512 = vpack.c.b16 %v400, %v396
      %v513 = vpack.c.b16 %v401, %v397
      %v514 = vpack.c.b16 %v402, %v398
      %v515 = vpack.c.b16 %v407, %v403
      %v516 = vpack.c.b16 %v408, %v404
      %v517 = vpack.c.b16 %v409, %v405
      %v518 = vpack.c.b16 %v410, %v406
      %v519 = vpack.c.b16 %v415, %v411
      %v520 = vpack.c.b16 %v416, %v412
      %v521 = vpack.c.b16 %v417, %v413
      %v522 = vpack.c.b16 %v418, %v414
      %v523 = vpack.c.b16 %v423, %v419
      %v524 = vpack.c.b16 %v424, %v420
      %v525 = vpack.c.b16 %v425, %v421
      %v526 = vpack.c.b16 %v426, %v422
      %v527 = vpack.c.b16 %v431, %v427
      %v528 = vpack.c.b16 %v432, %v428
      %v529 = vpack.c.b16 %v433, %v429
      %v530 = vpack.c.b16 %v434, %v430
      %v531 = vpack.c.b16 %v439, %v435
      %v532 = vpack.c.b16 %v440, %v436
      %v533 = vpack.c.b16 %v441, %v437
      %v534 = vpack.c.b16 %v442, %v438
      %v535 = vpack.c.b16 %v447, %v443
      %v536 = vpack.c.b16 %v448, %v444
      %v537 = vpack.c.b16 %v449, %v445
      %v538 = vpack.c.b16 %v450, %v446
      %v539 = vpack.c.b16 %v455, %v451
      %v540 = vpack.c.b16 %v456, %v452
      %v541 = vpack.c.b16 %v457, %v453
      %v542 = vpack.c.b16 %v458, %v454
      %v543 = vpack.c.b16 %v463, %v459
      %v544 = vpack.c.b16 %v464, %v460
      %v545 = vpack.c.b16 %v465, %v461
      %v546 = vpack.c.b16 %v466, %v462
      %v547 = vpack.c.b16 %v471, %v467
      %v548 = vpack.c.b16 %v472, %v468
      %v549 = vpack.c.b16 %v473, %v469
      %v550 = vpack.c.b16 %v474, %v470
      %v551 = vpack.c.b16 %v479, %v475
      %v552 = vpack.c.b16 %v480, %v476
      %v553 = vpack.c.b16 %v481, %v477
      %v554 = vpack.c.b16 %v482, %v478
      %v555 = vpack.c.b16 %v487, %v483
      %v556 = vpack.c.b16 %v488, %v484
      %v557 = vpack.c.b16 %v489, %v485
      %v558 = vpack.c.b16 %v490, %v486
      %v559 = vpack.c.b16 %v495, %v491
      %v560 = vpack.c.b16 %v496, %v492
      %v561 = vpack.c.b16 %v497, %v493
      %v562 = vpack.c.b16 %v498, %v494
      %v691 = vunpack.c.l.b16 %v236
      %v692 = vunpack.c.l.b16 %v237
      %v693 = vunpack.c.l.b16 %v238
      %v694 = vunpack.c.l.b16 %v239
      %v695 = vunpack.c.l.b16 %v240
      %v696 = vunpack.c.l.b16 %v241
      %v697 = vunpack.c.l.b16 %v242
      %v698 = vunpack.c.l.b16 %v243
      %v699 = vunpack.c.l.b16 %v244
      %v700 = vunpack.c.l.b16 %v245
      %v701 = vunpack.c.l.b16 %v246
      %v702 = vunpack.c.l.b16 %v247
      %v703 = vunpack.c.l.b16 %v248
      %v704 = vunpack.c.l.b16 %v249
      %v705 = vunpack.c.l.b16 %v250
      %v706 = vunpack.c.l.b16 %v251
      %v707 = vunpack.c.l.b16 %v252
      %v708 = vunpack.c.l.b16 %v253
      %v709 = vunpack.c.l.b16 %v254
      %v710 = vunpack.c.l.b16 %v255
      %v711 = vunpack.c.l.b16 %v256
      %v712 = vunpack.c.l.b16 %v257
      %v713 = vunpack.c.l.b16 %v258
      %v714 = vunpack.c.l.b16 %v259
      %v715 = vunpack.c.l.b16 %v260
      %v716 = vunpack.c.l.b16 %v261
      %v717 = vunpack.c.l.b16 %v262
      %v718 = vunpack.c.l.b16 %v263
      %v719 = vunpack.c.l.b16 %v264
      %v720 = vunpack.c.l.b16 %v265
      %v721 = vunpack.c.l.b16 %v266
      %v722 = vunpack.c.l.b16 %v267
      %v723 = vunpack.c.l.b16 %v268
      %v724 = vunpack.c.l.b16 %v269
      %v725 = vunpack.c.l.b16 %v270
      %v726 = vunpack.c.l.b16 %v271
      %v727 = vunpack.c.l.b16 %v272
      %v728 = vunpack.c.l.b16 %v273
      %v729 = vunpack.c.l.b16 %v274
      %v730 = vunpack.c.l.b16 %v275
      %v731 = vunpack.c.l.b16 %v276
      %v732 = vunpack.c.l.b16 %v277
      %v733 = vunpack.c.l.b16 %v278
      %v734 = vunpack.c.l.b16 %v279
      %v735 = vunpack.c.l.b16 %v280
      %v736 = vunpack.c.l.b16 %v281
      %v737 = vunpack.c.l.b16 %v282
      %v738 = vunpack.c.l.b16 %v283
      %v739 = vunpack.c.l.b16 %v284
      %v740 = vunpack.c.l.b16 %v285
      %v741 = vunpack.c.l.b16 %v286
      %v742 = vunpack.c.l.b16 %v287
      %v743 = vunpack.c.l.b16 %v288
      %v744 = vunpack.c.l.b16 %v289
      %v745 = vunpack.c.l.b16 %v290
      %v746 = vunpack.c.l.b16 %v291
      %v747 = vunpack.c.l.b16 %v292
      %v748 = vunpack.c.l.b16 %v293
      %v749 = vunpack.c.l.b16 %v294
      %v750 = vunpack.c.l.b16 %v295
      %v751 = vunpack.c.l.b16 %v296
      %v752 = vunpack.c.l.b16 %v297
      %v753 = vunpack.c.l.b16 %v298
      %v754 = vunpack.c.l.b16 %v299
      %v755 = vpack.c.b16 %v692, %v691
      %v756 = vpack.c.b16 %v694, %v693
      %v757 = vpack.c.b16 %v696, %v695
      %v758 = vpack.c.b16 %v698, %v697
      %v759 = vpack.c.b16 %v700, %v699
      %v760 = vpack.c.b16 %v702, %v701
      %v761 = vpack.c.b16 %v704, %v703
      %v762 = vpack.c.b16 %v706, %v705
      %v763 = vpack.c.b16 %v708, %v707
      %v764 = vpack.c.b16 %v710, %v709
      %v765 = vpack.c.b16 %v712, %v711
      %v766 = vpack.c.b16 %v714, %v713
      %v767 = vpack.c.b16 %v716, %v715
      %v768 = vpack.c.b16 %v718, %v717
      %v769 = vpack.c.b16 %v720, %v719
      %v770 = vpack.c.b16 %v722, %v721
      %v771 = vpack.c.b16 %v724, %v723
      %v772 = vpack.c.b16 %v726, %v725
      %v773 = vpack.c.b16 %v728, %v727
      %v774 = vpack.c.b16 %v730, %v729
      %v775 = vpack.c.b16 %v732, %v731
      %v776 = vpack.c.b16 %v734, %v733
      %v777 = vpack.c.b16 %v736, %v735
      %v778 = vpack.c.b16 %v738, %v737
      %v779 = vpack.c.b16 %v740, %v739
      %v780 = vpack.c.b16 %v742, %v741
      %v781 = vpack.c.b16 %v744, %v743
      %v782 = vpack.c.b16 %v746, %v745
      %v783 = vpack.c.b16 %v748, %v747
      %v784 = vpack.c.b16 %v750, %v749
      %v785 = vpack.c.b16 %v752, %v751
      %v786 = vpack.c.b16 %v754, %v753
      %819 = vmatprep.subr.bf16.mxu0 0
      %820 = vmatpush1.bf16.msra.mxu0 %v755
      %821 = vmatprep.subr.bf16.mxu0 0
      %822 = vmatpush1.bf16.msra.mxu0 %v756
      %823 = vmatprep.subr.bf16.mxu0 0
      %824 = vmatpush1.bf16.msra.mxu0 %v757
      %825 = vmatprep.subr.bf16.mxu0 0
      %826 = vmatpush1.bf16.msra.mxu0 %v758
      %827 = vmatprep.subr.bf16.mxu0 0
      %828 = vmatpush1.bf16.msra.mxu0 %v759
      %829 = vmatprep.subr.bf16.mxu0 0
      %830 = vmatpush1.bf16.msra.mxu0 %v760
      %831 = vmatprep.subr.bf16.mxu0 0
      %832 = vmatpush1.bf16.msra.mxu0 %v761
      %833 = vmatprep.subr.bf16.mxu0 0
      %834 = vmatpush1.bf16.msra.mxu0 %v762
      %835 = vmatprep.subr.bf16.mxu0 0
      %836 = vmatpush1.bf16.msra.mxu0 %v763
      %837 = vmatprep.subr.bf16.mxu0 0
      %838 = vmatpush1.bf16.msra.mxu0 %v764
      %839 = vmatprep.subr.bf16.mxu0 0
      %840 = vmatpush1.bf16.msra.mxu0 %v765
      %841 = vmatprep.subr.bf16.mxu0 0
      %842 = vmatpush1.bf16.msra.mxu0 %v766
      %843 = vmatprep.subr.bf16.mxu0 0
      %844 = vmatpush1.bf16.msra.mxu0 %v767
      %845 = vmatprep.subr.bf16.mxu0 0
      %846 = vmatpush1.bf16.msra.mxu0 %v768
      %847 = vmatprep.subr.bf16.mxu0 0
      %848 = vmatpush1.bf16.msra.mxu0 %v769
      %849 = vmatprep.subr.bf16.mxu0 0
      %850 = vmatpush1.bf16.msra.mxu0 %v770
      %851 = vmatprep.mubr.bf16.mxu0 %v500
      %852 = vmatmul.mubr.bf16.gmra.mrb[0].mxu0 %v499
      %v853 = vpop.f32.mrb[0].mxu0
      %v854 = vadd.f32 %v305, %v853
      %v855 = vpop.f32.mrb[0].mxu0
      %v856 = vpop.f32.mrb[0].mxu0
      %v857 = vadd.f32 %v305, %v856
      %v858 = vpop.f32.mrb[0].mxu0
      %859 = vmatprep.mubr.bf16.mxu0 %v504
      %860 = vmatmul.mubr.bf16.gmra.mrb[0].mxu0 %v503
      %v861 = vpop.f32.mrb[0].mxu0
      %v862 = vadd.f32 %v305, %v861
      %v863 = vpop.f32.mrb[0].mxu0
      %v864 = vpop.f32.mrb[0].mxu0
      %v865 = vadd.f32 %v305, %v864
      %v866 = vpop.f32.mrb[0].mxu0
      %867 = vmatprep.mubr.bf16.mxu0 %v508
      %868 = vmatmul.mubr.bf16.gmra.mrb[0].mxu0 %v507
      %v869 = vpop.f32.mrb[0].mxu0
      %v870 = vadd.f32 %v305, %v869
      %v871 = vpop.f32.mrb[0].mxu0
      %v872 = vpop.f32.mrb[0].mxu0
      %v873 = vadd.f32 %v305, %v872
      %v874 = vpop.f32.mrb[0].mxu0
      %875 = vmatprep.mubr.bf16.mxu0 %v512
      %876 = vmatmul.mubr.bf16.gmra.mrb[0].mxu0 %v511
      %v877 = vpop.f32.mrb[0].mxu0
      %v878 = vadd.f32 %v305, %v877
      %v879 = vpop.f32.mrb[0].mxu0
      %v880 = vpop.f32.mrb[0].mxu0
      %v881 = vadd.f32 %v305, %v880
      %v882 = vpop.f32.mrb[0].mxu0
      %883 = vmatprep.mubr.bf16.mxu0 %v516
      %884 = vmatmul.mubr.bf16.gmra.mrb[0].mxu0 %v515
      %v885 = vpop.f32.mrb[0].mxu0
      %v886 = vadd.f32 %v305, %v885
      %v887 = vpop.f32.mrb[0].mxu0
      %v888 = vpop.f32.mrb[0].mxu0
      %v889 = vadd.f32 %v305, %v888
      %v890 = vpop.f32.mrb[0].mxu0
      %891 = vmatprep.mubr.bf16.mxu0 %v520
      %892 = vmatmul.mubr.bf16.gmra.mrb[0].mxu0 %v519
      %v893 = vpop.f32.mrb[0].mxu0
      %v894 = vadd.f32 %v305, %v893
      %v895 = vpop.f32.mrb[0].mxu0
      %v896 = vpop.f32.mrb[0].mxu0
      %v897 = vadd.f32 %v305, %v896
      %v898 = vpop.f32.mrb[0].mxu0
      %899 = vmatprep.mubr.bf16.mxu0 %v524
      %900 = vmatmul.mubr.bf16.gmra.mrb[0].mxu0 %v523
      %v901 = vpop.f32.mrb[0].mxu0
      %v902 = vadd.f32 %v305, %v901
      %v903 = vpop.f32.mrb[0].mxu0
      %v904 = vpop.f32.mrb[0].mxu0
      %v905 = vadd.f32 %v305, %v904
      %v906 = vpop.f32.mrb[0].mxu0
      %907 = vmatprep.mubr.bf16.mxu0 %v528
      %908 = vmatmul.mubr.bf16.gmra.mrb[0].mxu0 %v527
      %v909 = vpop.f32.mrb[0].mxu0
      %v910 = vadd.f32 %v305, %v909
      %v911 = vpop.f32.mrb[0].mxu0
      %v912 = vpop.f32.mrb[0].mxu0
      %v913 = vadd.f32 %v305, %v912
      %v914 = vpop.f32.mrb[0].mxu0
      %915 = vmatprep.mubr.bf16.mxu0 %v532
      %916 = vmatmul.mubr.bf16.gmra.mrb[0].mxu0 %v531
      %v917 = vpop.f32.mrb[0].mxu0
      %v918 = vadd.f32 %v305, %v917
      %v919 = vpop.f32.mrb[0].mxu0
      %v920 = vpop.f32.mrb[0].mxu0
      %v921 = vadd.f32 %v305, %v920
      %v922 = vpop.f32.mrb[0].mxu0
      %923 = vmatprep.mubr.bf16.mxu0 %v536
      %924 = vmatmul.mubr.bf16.gmra.mrb[0].mxu0 %v535
      %v925 = vpop.f32.mrb[0].mxu0
      %v926 = vadd.f32 %v305, %v925
      %v927 = vpop.f32.mrb[0].mxu0
      %v928 = vpop.f32.mrb[0].mxu0
      %v929 = vadd.f32 %v305, %v928
      %v930 = vpop.f32.mrb[0].mxu0
      %931 = vmatprep.mubr.bf16.mxu0 %v540
      %932 = vmatmul.mubr.bf16.gmra.mrb[0].mxu0 %v539
      %v933 = vpop.f32.mrb[0].mxu0
      %v934 = vadd.f32 %v305, %v933
      %v935 = vpop.f32.mrb[0].mxu0
      %v936 = vpop.f32.mrb[0].mxu0
      %v937 = vadd.f32 %v305, %v936
      %v938 = vpop.f32.mrb[0].mxu0
      %939 = vmatprep.mubr.bf16.mxu0 %v544
      %940 = vmatmul.mubr.bf16.gmra.mrb[0].mxu0 %v543
      %v941 = vpop.f32.mrb[0].mxu0
      %v942 = vadd.f32 %v305, %v941
      %v943 = vpop.f32.mrb[0].mxu0
      %v944 = vpop.f32.mrb[0].mxu0
      %v945 = vadd.f32 %v305, %v944
      %v946 = vpop.f32.mrb[0].mxu0
      %947 = vmatprep.mubr.bf16.mxu0 %v548
      %948 = vmatmul.mubr.bf16.gmra.mrb[0].mxu0 %v547
      %v949 = vpop.f32.mrb[0].mxu0
      %v950 = vadd.f32 %v305, %v949
      %v951 = vpop.f32.mrb[0].mxu0
      %v952 = vpop.f32.mrb[0].mxu0
      %v953 = vadd.f32 %v305, %v952
      %v954 = vpop.f32.mrb[0].mxu0
      %955 = vmatprep.mubr.bf16.mxu0 %v552
      %956 = vmatmul.mubr.bf16.gmra.mrb[0].mxu0 %v551
      %v957 = vpop.f32.mrb[0].mxu0
      %v958 = vadd.f32 %v305, %v957
      %v959 = vpop.f32.mrb[0].mxu0
      %v960 = vpop.f32.mrb[0].mxu0
      %v961 = vadd.f32 %v305, %v960
      %v962 = vpop.f32.mrb[0].mxu0
      %963 = vmatprep.mubr.bf16.mxu0 %v556
      %964 = vmatmul.mubr.bf16.gmra.mrb[0].mxu0 %v555
      %v965 = vpop.f32.mrb[0].mxu0
      %v966 = vadd.f32 %v305, %v965
      %v967 = vpop.f32.mrb[0].mxu0
      %v968 = vpop.f32.mrb[0].mxu0
      %v969 = vadd.f32 %v305, %v968
      %v970 = vpop.f32.mrb[0].mxu0
      %971 = vmatprep.mubr.bf16.mxu0 %v560
      %972 = vmatmul.mubr.bf16.gmra.mrb[0].mxu0 %v559
      %v973 = vpop.f32.mrb[0].mxu0
      %v974 = vadd.f32 %v305, %v973
      %v975 = vpop.f32.mrb[0].mxu0
      %v976 = vpop.f32.mrb[0].mxu0
      %v977 = vadd.f32 %v305, %v976
      %v978 = vpop.f32.mrb[0].mxu0
      %979 = vdwg.mxu0
      %980 = vmatprep.subr.bf16.mxu0 0
      %981 = vmatpush1.bf16.msra.mxu0 %v771
      %982 = vmatprep.subr.bf16.mxu0 0
      %983 = vmatpush1.bf16.msra.mxu0 %v772
      %984 = vmatprep.subr.bf16.mxu0 0
      %985 = vmatpush1.bf16.msra.mxu0 %v773
      %986 = vmatprep.subr.bf16.mxu0 0
      %987 = vmatpush1.bf16.msra.mxu0 %v774
      %988 = vmatprep.subr.bf16.mxu0 0
      %989 = vmatpush1.bf16.msra.mxu0 %v775
      %990 = vmatprep.subr.bf16.mxu0 0
      %991 = vmatpush1.bf16.msra.mxu0 %v776
      %992 = vmatprep.subr.bf16.mxu0 0
      %993 = vmatpush1.bf16.msra.mxu0 %v777
      %994 = vmatprep.subr.bf16.mxu0 0
      %995 = vmatpush1.bf16.msra.mxu0 %v778
      %996 = vmatprep.subr.bf16.mxu0 0
      %997 = vmatpush1.bf16.msra.mxu0 %v779
      %998 = vmatprep.subr.bf16.mxu0 0
      %999 = vmatpush1.bf16.msra.mxu0 %v780
      %1000 = vmatprep.subr.bf16.mxu0 0
      %1001 = vmatpush1.bf16.msra.mxu0 %v781
      %1002 = vmatprep.subr.bf16.mxu0 0
      %1003 = vmatpush1.bf16.msra.mxu0 %v782
      %1004 = vmatprep.subr.bf16.mxu0 0
      %1005 = vmatpush1.bf16.msra.mxu0 %v783
      %1006 = vmatprep.subr.bf16.mxu0 0
      %1007 = vmatpush1.bf16.msra.mxu0 %v784
      %1008 = vmatprep.subr.bf16.mxu0 0
      %1009 = vmatpush1.bf16.msra.mxu0 %v785
      %1010 = vmatprep.subr.bf16.mxu0 0
      %1011 = vmatpush1.bf16.msra.mxu0 %v786
      %1012 = vmatprep.mubr.bf16.mxu0 %v502
      %1013 = vmatmul.mubr.bf16.gmra.mrb[0].mxu0 %v501
      %v1014 = vpop.f32.mrb[0].mxu0
      %v1015 = vadd.f32 %v854, %v1014
      %v1016 = vpop.f32.mrb[0].mxu0
      %v1017 = vpop.f32.mrb[0].mxu0
      %v1018 = vadd.f32 %v857, %v1017
      %v1019 = vpop.f32.mrb[0].mxu0
      %1020 = vmatprep.mubr.bf16.mxu0 %v506
      %1021 = vmatmul.mubr.bf16.gmra.mrb[0].mxu0 %v505
      %v1022 = vpop.f32.mrb[0].mxu0
      %v1023 = vadd.f32 %v862, %v1022
      %v1024 = vpop.f32.mrb[0].mxu0
      %v1025 = vpop.f32.mrb[0].mxu0
      %v1026 = vadd.f32 %v865, %v1025
      %v1027 = vpop.f32.mrb[0].mxu0
      %1028 = vmatprep.mubr.bf16.mxu0 %v510
      %1029 = vmatmul.mubr.bf16.gmra.mrb[0].mxu0 %v509
      %v1030 = vpop.f32.mrb[0].mxu0
      %v1031 = vadd.f32 %v870, %v1030
      %v1032 = vpop.f32.mrb[0].mxu0
      %v1033 = vpop.f32.mrb[0].mxu0
      %v1034 = vadd.f32 %v873, %v1033
      %v1035 = vpop.f32.mrb[0].mxu0
      %1036 = vmatprep.mubr.bf16.mxu0 %v514
      %1037 = vmatmul.mubr.bf16.gmra.mrb[0].mxu0 %v513
      %v1038 = vpop.f32.mrb[0].mxu0
      %v1039 = vadd.f32 %v878, %v1038
      %v1040 = vpop.f32.mrb[0].mxu0
      %v1041 = vpop.f32.mrb[0].mxu0
      %v1042 = vadd.f32 %v881, %v1041
      %v1043 = vpop.f32.mrb[0].mxu0
      %1044 = vmatprep.mubr.bf16.mxu0 %v518
      %1045 = vmatmul.mubr.bf16.gmra.mrb[0].mxu0 %v517
      %v1046 = vpop.f32.mrb[0].mxu0
      %v1047 = vadd.f32 %v886, %v1046
      %v1048 = vpop.f32.mrb[0].mxu0
      %v1049 = vpop.f32.mrb[0].mxu0
      %v1050 = vadd.f32 %v889, %v1049
      %v1051 = vpop.f32.mrb[0].mxu0
      %1052 = vmatprep.mubr.bf16.mxu0 %v522
      %1053 = vmatmul.mubr.bf16.gmra.mrb[0].mxu0 %v521
      %v1054 = vpop.f32.mrb[0].mxu0
      %v1055 = vadd.f32 %v894, %v1054
      %v1056 = vpop.f32.mrb[0].mxu0
      %v1057 = vpop.f32.mrb[0].mxu0
      %v1058 = vadd.f32 %v897, %v1057
      %v1059 = vpop.f32.mrb[0].mxu0
      %1060 = vmatprep.mubr.bf16.mxu0 %v526
      %1061 = vmatmul.mubr.bf16.gmra.mrb[0].mxu0 %v525
      %v1062 = vpop.f32.mrb[0].mxu0
      %v1063 = vadd.f32 %v902, %v1062
      %v1064 = vpop.f32.mrb[0].mxu0
      %v1065 = vpop.f32.mrb[0].mxu0
      %v1066 = vadd.f32 %v905, %v1065
      %v1067 = vpop.f32.mrb[0].mxu0
      %1068 = vmatprep.mubr.bf16.mxu0 %v530
      %1069 = vmatmul.mubr.bf16.gmra.mrb[0].mxu0 %v529
      %v1070 = vpop.f32.mrb[0].mxu0
      %v1071 = vadd.f32 %v910, %v1070
      %v1072 = vpop.f32.mrb[0].mxu0
      %v1073 = vpop.f32.mrb[0].mxu0
      %v1074 = vadd.f32 %v913, %v1073
      %v1075 = vpop.f32.mrb[0].mxu0
      %1076 = vmatprep.mubr.bf16.mxu0 %v534
      %1077 = vmatmul.mubr.bf16.gmra.mrb[0].mxu0 %v533
      %v1078 = vpop.f32.mrb[0].mxu0
      %v1079 = vadd.f32 %v918, %v1078
      %v1080 = vpop.f32.mrb[0].mxu0
      %v1081 = vpop.f32.mrb[0].mxu0
      %v1082 = vadd.f32 %v921, %v1081
      %v1083 = vpop.f32.mrb[0].mxu0
      %1084 = vmatprep.mubr.bf16.mxu0 %v538
      %1085 = vmatmul.mubr.bf16.gmra.mrb[0].mxu0 %v537
      %v1086 = vpop.f32.mrb[0].mxu0
      %v1087 = vadd.f32 %v926, %v1086
      %v1088 = vpop.f32.mrb[0].mxu0
      %v1089 = vpop.f32.mrb[0].mxu0
      %v1090 = vadd.f32 %v929, %v1089
      %v1091 = vpop.f32.mrb[0].mxu0
      %1092 = vmatprep.mubr.bf16.mxu0 %v542
      %1093 = vmatmul.mubr.bf16.gmra.mrb[0].mxu0 %v541
      %v1094 = vpop.f32.mrb[0].mxu0
      %v1095 = vadd.f32 %v934, %v1094
      %v1096 = vpop.f32.mrb[0].mxu0
      %v1097 = vpop.f32.mrb[0].mxu0
      %v1098 = vadd.f32 %v937, %v1097
      %v1099 = vpop.f32.mrb[0].mxu0
      %1100 = vmatprep.mubr.bf16.mxu0 %v546
      %1101 = vmatmul.mubr.bf16.gmra.mrb[0].mxu0 %v545
      %v1102 = vpop.f32.mrb[0].mxu0
      %v1103 = vadd.f32 %v942, %v1102
      %v1104 = vpop.f32.mrb[0].mxu0
      %v1105 = vpop.f32.mrb[0].mxu0
      %v1106 = vadd.f32 %v945, %v1105
      %v1107 = vpop.f32.mrb[0].mxu0
      %1108 = vmatprep.mubr.bf16.mxu0 %v550
      %1109 = vmatmul.mubr.bf16.gmra.mrb[0].mxu0 %v549
      %v1110 = vpop.f32.mrb[0].mxu0
      %v1111 = vadd.f32 %v950, %v1110
      %v1112 = vpop.f32.mrb[0].mxu0
      %v1113 = vpop.f32.mrb[0].mxu0
      %v1114 = vadd.f32 %v953, %v1113
      %v1115 = vpop.f32.mrb[0].mxu0
      %1116 = vmatprep.mubr.bf16.mxu0 %v554
      %1117 = vmatmul.mubr.bf16.gmra.mrb[0].mxu0 %v553
      %v1118 = vpop.f32.mrb[0].mxu0
      %v1119 = vadd.f32 %v958, %v1118
      %v1120 = vpop.f32.mrb[0].mxu0
      %v1121 = vpop.f32.mrb[0].mxu0
      %v1122 = vadd.f32 %v961, %v1121
      %v1123 = vpop.f32.mrb[0].mxu0
      %1124 = vmatprep.mubr.bf16.mxu0 %v558
      %1125 = vmatmul.mubr.bf16.gmra.mrb[0].mxu0 %v557
      %v1126 = vpop.f32.mrb[0].mxu0
      %v1127 = vadd.f32 %v966, %v1126
      %v1128 = vpop.f32.mrb[0].mxu0
      %v1129 = vpop.f32.mrb[0].mxu0
      %v1130 = vadd.f32 %v969, %v1129
      %v1131 = vpop.f32.mrb[0].mxu0
      %1132 = vmatprep.mubr.bf16.mxu0 %v562
      %1133 = vmatmul.mubr.bf16.gmra.mrb[0].mxu0 %v561
      %v1134 = vpop.f32.mrb[0].mxu0
      %v1135 = vadd.f32 %v974, %v1134
      %v1136 = vpop.f32.mrb[0].mxu0
      %v1137 = vpop.f32.mrb[0].mxu0
      %v1138 = vadd.f32 %v977, %v1137
      %v1139 = vpop.f32.mrb[0].mxu0
      %1140 = vdwg.mxu0
      %v1141 = vtanh.pop %v1015
      %v1142 = vtanh.pop %v1018
      %v1143 = vtanh.pop %v1023
      %v1144 = vtanh.pop %v1026
      %v1145 = vtanh.pop %v1031
      %v1146 = vtanh.pop %v1034
      %v1147 = vtanh.pop %v1039
      %v1148 = vtanh.pop %v1042
      %v1149 = vtanh.pop %v1047
      %v1150 = vtanh.pop %v1050
      %v1151 = vtanh.pop %v1055
      %v1152 = vtanh.pop %v1058
      %v1153 = vtanh.pop %v1063
      %v1154 = vtanh.pop %v1066
      %v1155 = vtanh.pop %v1071
      %v1156 = vtanh.pop %v1074
      %v1157 = vtanh.pop %v1079
      %v1158 = vtanh.pop %v1082
      %v1159 = vtanh.pop %v1087
      %v1160 = vtanh.pop %v1090
      %v1161 = vtanh.pop %v1095
      %v1162 = vtanh.pop %v1098
      %v1163 = vtanh.pop %v1103
      %v1164 = vtanh.pop %v1106
      %v1165 = vtanh.pop %v1111
      %v1166 = vtanh.pop %v1114
      %v1167 = vtanh.pop %v1119
      %v1168 = vtanh.pop %v1122
      %v1169 = vtanh.pop %v1127
      %v1170 = vtanh.pop %v1130
      %v1171 = vtanh.pop %v1135
      %v1172 = vtanh.pop %v1138
      %1173 = vst [vmem:[%s170] sm:$0xff] %v1141
      %1174 = vst [vmem:[%s170 + $0x8] sm:$0xff] %v1142
      %1175 = vst [vmem:[%s170 + $0x10] sm:$0xff] %v1143
      %1176 = vst [vmem:[%s170 + $0x18] sm:$0xff] %v1144
      %1177 = vst [vmem:[%s170 + $0x20] sm:$0xff] %v1145
      %1178 = vst [vmem:[%s170 + $0x28] sm:$0xff] %v1146
      %1179 = vst [vmem:[%s170 + $0x30] sm:$0xff] %v1147
      %1180 = vst [vmem:[%s170 + $0x38] sm:$0xff] %v1148
      %1181 = vst [vmem:[%s170 + $0x40] sm:$0xff] %v1149
      %1182 = vst [vmem:[%s170 + $0x48] sm:$0xff] %v1150
      %1183 = vst [vmem:[%s170 + $0x50] sm:$0xff] %v1151
      %1184 = vst [vmem:[%s170 + $0x58] sm:$0xff] %v1152
      %1185 = vst [vmem:[%s170 + $0x60] sm:$0xff] %v1153
      %1186 = vst [vmem:[%s170 + $0x68] sm:$0xff] %v1154
      %1187 = vst [vmem:[%s170 + $0x70] sm:$0xff] %v1155
      %1188 = vst [vmem:[%s170 + $0x78] sm:$0xff] %v1156
      %1189 = vst [vmem:[%s170 + $0x80] sm:$0xff] %v1157
      %1190 = vst [vmem:[%s170 + $0x88] sm:$0xff] %v1158
      %1191 = vst [vmem:[%s170 + $0x90] sm:$0xff] %v1159
      %1192 = vst [vmem:[%s170 + $0x98] sm:$0xff] %v1160
      %1193 = vst [vmem:[%s170 + $0xa0] sm:$0xff] %v1161
      %1194 = vst [vmem:[%s170 + $0xa8] sm:$0xff] %v1162
      %1195 = vst [vmem:[%s170 + $0xb0] sm:$0xff] %v1163
      %1196 = vst [vmem:[%s170 + $0xb8] sm:$0xff] %v1164
      %1197 = vst [vmem:[%s170 + $0xc0] sm:$0xff] %v1165
      %1198 = vst [vmem:[%s170 + $0xc8] sm:$0xff] %v1166
      %1199 = vst [vmem:[%s170 + $0xd0] sm:$0xff] %v1167
      %1200 = vst [vmem:[%s170 + $0xd8] sm:$0xff] %v1168
      %1201 = vst [vmem:[%s170 + $0xe0] sm:$0xff] %v1169
      %1202 = vst [vmem:[%s170 + $0xe8] sm:$0xff] %v1170
      %1203 = vst [vmem:[%s170 + $0xf0] sm:$0xff] %v1171
      %1204 = vst [vmem:[%s170 + $0xf8] sm:$0xff] %v1172
      %p1205 = scmp.lt.s32.totalorder %s14, 1
      %s1206 = scalar_select %p1205, %s14, 1
      %s1207 = smul.addr %s1206, 32
      %s1208 = smul.addr %s1207, 8
      %s1209 = scalar_lea.vmem %s3, %s1208
      // Predicated region
      $region33: #{generator_forward.19} parent=31 // pred_check
        %p1210 = pneg %p100
      $region34: #{generator_forward.19} parent=31 // pred_check_branch
        %1212 = sbr.rel (%p1210) target = $region36
      $region35: #{generator_forward.19} parent=31 // pred_region
        _
      $region36: #{generator_forward.19} parent=31 // pred_fallthru
        _
    $region32: #{generator_forward.19} parent=5 // pred_fallthru
      _
    %p1213 = scmp.le.s32.totalorder 2, %s9
    // Predicated region
    $region37: #{generator_forward.19} parent=5 // pred_check
      %p1214 = pneg %p1213
    $region38: #{generator_forward.19} parent=5 // pred_check_branch
      %1216 = sbr.rel (%p1214) target = $region40
    $region39: #{generator_forward.19} parent=5 // pred_region
      %s1217 = ssub.s32 %s9, 2
      // Predicated region
      $region41: #{generator_forward.19} parent=39 // pred_check
        %p1218 = pneg %p106
      $region42: #{generator_forward.19} parent=39 // pred_check_branch
        %1220 = sbr.rel (%p1218) target = $region44
      $region43: #{generator_forward.19} parent=39 // pred_region
        %p1221 = scmp.lt.s32.totalorder %s15, 1
        %s1222 = scalar_select %p1221, %s15, 1
        %s1223 = smul.addr %s1222, 32
        %s1224 = smul.addr %s1223, 8
        %s1225 = scalar_lea.vmem %s3, %s1224
      $region44: #{generator_forward.19} parent=39 // pred_fallthru
        _
    $region40: #{generator_forward.19} parent=5 // pred_fallthru
      _
  $region6: #{generator_forward.19} parent=0 // loop_footer
    %s13 = sadd.s32 1, %s9
  $region7: #{generator_forward.19} parent=0 // loop_footer_branch
    %8 = sbr.rel target = $region3
  $region8: #{generator_forward.19} parent=0 // loop_exit
    _

</llo_original>
